<compile_context>
chip_gen: v5e
topology: v5e:2x2
jax: 0.10.0
libtpu: 0.0.40
codegen_flags: <defaults>
</compile_context>

<pallas_src>
import jax
import jax.numpy as jnp
from jax import lax
from jax.experimental import pallas as pl
from jax.experimental.pallas import tpu as pltpu

LANE = 128  # lane-pad every feature/channel dimension to this


def _round_up(x, m):
    return ((x + m - 1) // m) * m


def _pad2(a, rows, cols):
    out = jnp.zeros((rows, cols), a.dtype)
    return out.at[:a.shape[0], :a.shape[1]].set(a)


# ----------------------------------------------------------------------------
# Fused kernel (single grid point, whole-array VMEM blocks; everything tiny).
# ----------------------------------------------------------------------------
def _build_kernel(n_conv, n_fc, c_in_reals):
    def kernel(*refs):
        it = iter(refs)
        x_ref = next(it)
        ea_ref = next(it)
        src_ref = next(it)     # [E_pad, 1] int32, -1 for padded edges
        dst_ref = next(it)     # [1, E_pad] int32, -1 for padded edges
        bat_ref = next(it)     # [1, N_pad] int32, -1 for padded nodes
        lin0_w = next(it); lin0_b = next(it)
        layers = []
        for _ in range(n_conv):
            layers.append(dict(
                kk1_w=next(it), kk1_b=next(it),
                kk2_w=next(it), kk2_bmat=next(it),
                root_w=next(it), conv_b=next(it),
                bn_s=next(it), bn_t=next(it),
                wih=next(it), whh=next(it), bih=next(it), bhh=next(it),
            ))
        gc_rel_w = next(it); gc_rel_b = next(it); gc_root_w = next(it)
        bnl_s = next(it); bnl_t = next(it)
        fcs = []
        for _ in range(n_fc):
            fcs.append(dict(w=next(it), b=next(it), s=next(it), t=next(it)))
        fcl_w = next(it); fcl_b = next(it)
        o_ref = next(it)

        f32 = jnp.float32
        N_pad, C = x_ref.shape
        E_pad = ea_ref.shape[0]
        G_pad = o_ref.shape[0]

        def mm(a, b):
            return jnp.dot(a, b, preferred_element_type=f32)

        # Graph operators built in VMEM from index vectors (no [E,N] HBM traffic).
        # Padded edges/nodes carry index -1 -> all-zero row/column -> no effect.
        src = src_ref[...]
        gather_src = (src == lax.broadcasted_iota(
            jnp.int32, (E_pad, N_pad), 1)).astype(f32)             # [E_pad, N_pad]
        dst = dst_ref[...]
        scatter_dst = (dst == lax.broadcasted_iota(
            jnp.int32, (N_pad, E_pad), 0)).astype(f32)             # [N_pad, E_pad]
        bat = bat_ref[...]
        pool = (bat == lax.broadcasted_iota(
            jnp.int32, (G_pad, N_pad), 0)).astype(f32)             # [G_pad, N_pad]

        # out = relu(lin0(x)); h = out
        out = jnp.maximum(mm(x_ref[...], lin0_w[...]) + lin0_b[...], 0.0)
        h = out

        for li in range(n_conv):
            L = layers[li]
            c_in = c_in_reals[li]
            # edge network kk: Linear(6,c) -> ReLU -> Linear(c, c_in*c).
            # One matmul for the full [E, c_in*128] per-edge weight block; the
            # second-linear bias contribution is a single x_src @ B matmul.
            e1 = jnp.maximum(mm(ea_ref[...], L['kk1_w'][...]) + L['kk1_b'][...], 0.0)
            w_full = mm(e1, L['kk2_w'][...])                       # [E_pad, c_in*C]
            x_src = mm(gather_src, out)                            # [E_pad, C] gather
            msgs = mm(x_src, L['kk2_bmat'][...])                   # bias term
            for k in range(c_in):
                msgs = msgs + x_src[:, k:k + 1] * w_full[:, k * C:(k + 1) * C]
            agg = mm(scatter_dst, msgs)                            # [N_pad, C] scatter-add
            # NNConv root + bias + aggregated messages, ReLU, folded BatchNorm.
            m = jnp.maximum(mm(out, L['root_w'][...]) + L['conv_b'][...] + agg, 0.0)
            m = m * L['bn_s'][...] + L['bn_t'][...]
            # GRU step (seq_len == 1): combined [C, 3C] weights (r|z|n blocks),
            # lane-aligned slices of the two matmul results.
            gi = mm(m, L['wih'][...]) + L['bih'][...]              # [N_pad, 3C]
            gh = mm(h, L['whh'][...]) + L['bhh'][...]              # [N_pad, 3C]
            r = jax.nn.sigmoid(gi[:, 0:C] + gh[:, 0:C])
            z = jax.nn.sigmoid(gi[:, C:2 * C] + gh[:, C:2 * C])
            n = jnp.tanh(gi[:, 2 * C:3 * C] + r * gh[:, 2 * C:3 * C])
            out = (1.0 - z) * n + z * h
            h = out

        # GraphConv (aggr='add'): relu(lin_rel(neighbor_sum) + lin_root(x)), BN fold.
        neigh = mm(scatter_dst, mm(gather_src, out))
        xg = mm(neigh, gc_rel_w[...]) + gc_rel_b[...] + mm(out, gc_root_w[...])
        xg = jnp.maximum(xg, 0.0)
        xg = xg * bnl_s[...] + bnl_t[...]

        # global_add_pool (+ dropout = identity in eval)
        xf = mm(pool, xg)                                          # [G_pad, C]

        # FC head: [relu(fc) -> folded BN -> dropout(identity)]* -> fc_last
        for fc in fcs:
            xf = jnp.maximum(mm(xf, fc['w'][...]) + fc['b'][...], 0.0)
            xf = xf * fc['s'][...] + fc['t'][...]
        xf = mm(xf, fcl_w[...]) + fcl_b[...]
        o_ref[...] = xf.astype(o_ref.dtype)

    return kernel


# ----------------------------------------------------------------------------
# Parameter construction (deterministic, synthetic; raw for the JAX reference,
# pre-padded-to-128-lanes copies for the kernel).
# ----------------------------------------------------------------------------
def _dense(key, fan_in, fan_out, scale=0.1):
    kw, kb = jax.random.split(key)
    w = jax.random.normal(kw, (fan_in, fan_out), jnp.float32) * scale
    b = jax.random.normal(kb, (fan_out,), jnp.float32) * scale
    return w, b


def _pad_wb(w, b):
    return _pad2(w, LANE, LANE), _pad2(b.reshape(1, -1), 1, LANE)


def _bn_fold(c, eps=1e-5):
    # Fresh BatchNorm1d in eval mode: gamma=1, beta=0, running_mean=0, running_var=1.
    gamma = jnp.ones((c,), jnp.float32)
    beta = jnp.zeros((c,), jnp.float32)
    mean = jnp.zeros((c,), jnp.float32)
    var = jnp.ones((c,), jnp.float32)
    scale = gamma * lax.rsqrt(var + eps)
    shift = beta - mean * scale
    return scale, shift


def _pad_bn(scale, shift):
    c = scale.shape[0]
    s = jnp.ones((1, LANE), jnp.float32).at[0, :c].set(scale)
    t = jnp.zeros((1, LANE), jnp.float32).at[0, :c].set(shift)
    return s, t


def init_params(key, n_features, conv_dims, concat_dim, pred_dims, out_dim):
    dims = [n_features, 6, out_dim, concat_dim] + list(conv_dims) + list(pred_dims)
    assert max(dims) <= LANE, "demo assumes all channel dims fit in one 128-lane pad"
    keys = iter(jax.random.split(key, 512))

    raw, pad = {}, {}

    w, b = _dense(next(keys), n_features, conv_dims[0])
    raw['lin0_w'], raw['lin0_b'] = w, b
    pad['lin0_w'], pad['lin0_b'] = _pad_wb(w, b)

    raw_layers, pad_layers = [], []
    for i in range(len(conv_dims) - 1):
        c_in, c_out = conv_dims[i], conv_dims[i + 1]
        R, P = {}, {}
        # edge network kk: Linear(6, c_out) -> ReLU -> Linear(c_out, c_in*c_out)
        w, b = _dense(next(keys), 6, c_out)
        R['kk1_w'], R['kk1_b'] = w, b
        P['kk1_w'], P['kk1_b'] = _pad_wb(w, b)

        w2, b2 = _dense(next(keys), c_out, c_in * c_out)
        R['kk2_w'], R['kk2_b'] = w2, b2
        w2r = w2.reshape(c_out, c_in, c_out)
        w2p = jnp.zeros((LANE, c_in, LANE), jnp.float32).at[:c_out, :, :c_out].set(w2r)
        P['kk2_w'] = w2p.reshape(LANE, c_in * LANE)
        P['kk2_bmat'] = jnp.zeros((LANE, LANE), jnp.float32).at[:c_in, :c_out].set(
            b2.reshape(c_in, c_out))

        # NNConv root weight + bias
        w, b = _dense(next(keys), c_in, c_out)
        R['root_w'], R['conv_b'] = w, b
        P['root_w'], P['conv_b'] = _pad_wb(w, b)

        # BatchNorm1d(c_out) folded to affine scale/shift
        s, t = _bn_fold(c_out)
        R['bn_s'], R['bn_t'] = s, t
        P['bn_s'], P['bn_t'] = _pad_bn(s, t)

        # GRU(c_out, c_out): combined (r|z|n) weights at 128-lane offsets
        wih_p = jnp.zeros((LANE, 3 * LANE), jnp.float32)
        whh_p = jnp.zeros((LANE, 3 * LANE), jnp.float32)
        bih_p = jnp.zeros((1, 3 * LANE), jnp.float32)
        bhh_p = jnp.zeros((1, 3 * LANE), jnp.float32)
        for g_idx, g in enumerate(('r', 'z', 'n')):
            w, b = _dense(next(keys), c_out, c_out)
            R['wih_' + g], R['bih_' + g] = w, b
            wih_p = wih_p.at[:c_out, g_idx * LANE:g_idx * LANE + c_out].set(w)
            bih_p = bih_p.at[0, g_idx * LANE:g_idx * LANE + c_out].set(b)
            w, b = _dense(next(keys), c_out, c_out)
            R['whh_' + g], R['bhh_' + g] = w, b
            whh_p = whh_p.at[:c_out, g_idx * LANE:g_idx * LANE + c_out].set(w)
            bhh_p = bhh_p.at[0, g_idx * LANE:g_idx * LANE + c_out].set(b)
        P['wih'], P['whh'], P['bih'], P['bhh'] = wih_p, whh_p, bih_p, bhh_p

        raw_layers.append(R)
        pad_layers.append(P)
    raw['conv_layers'] = raw_layers
    pad['conv_layers'] = pad_layers

    # GraphConv(conv_dims[-1], conv_dims[-1]): lin_rel (bias) + lin_root (no bias)
    c = conv_dims[-1]
    w, b = _dense(next(keys), c, c)
    raw['gc_rel_w'], raw['gc_rel_b'] = w, b
    pad['gc_rel_w'], pad['gc_rel_b'] = _pad_wb(w, b)
    w, _ = _dense(next(keys), c, c)
    raw['gc_root_w'] = w
    pad['gc_root_w'] = _pad2(w, LANE, LANE)
    s, t = _bn_fold(concat_dim)
    raw['bnl_s'], raw['bnl_t'] = s, t
    pad['bnl_s'], pad['bnl_t'] = _pad_bn(s, t)

    raw_fcs, pad_fcs = [], []
    for i in range(len(pred_dims) - 1):
        R, P = {}, {}
        w, b = _dense(next(keys), pred_dims[i], pred_dims[i + 1])
        R['w'], R['b'] = w, b
        P['w'], P['b'] = _pad_wb(w, b)
        s, t = _bn_fold(pred_dims[i + 1])
        R['s'], R['t'] = s, t
        P['s'], P['t'] = _pad_bn(s, t)
        raw_fcs.append(R)
        pad_fcs.append(P)
    raw['fc_layers'] = raw_fcs
    pad['fc_layers'] = pad_fcs

    w, b = _dense(next(keys), pred_dims[-1], out_dim)
    raw['fc_last_w'], raw['fc_last_b'] = w, b
    pad['fc_last_w'], pad['fc_last_b'] = _pad_wb(w, b)

    cfg = dict(n_conv=len(conv_dims) - 1, n_fc=len(pred_dims) - 1,
               c_in_reals=tuple(conv_dims[:-1]), out_dim=out_dim)
    return dict(raw=raw, pad=pad, cfg=cfg)


# ----------------------------------------------------------------------------
# Forward pass: pad inputs, launch the single fused kernel, slice the result.
# ----------------------------------------------------------------------------
def gcn_model_reg_forward(params, x, edge_index, edge_attr, batch, num_graphs):
    cfg = params['cfg']
    pad = params['pad']
    n_conv, n_fc = cfg['n_conv'], cfg['n_fc']

    N = x.shape[0]
    E = edge_index.shape[1]
    N_pad = _round_up(max(N, 8), 8)
    E_pad = _round_up(max(E, 8), 8)
    G_pad = _round_up(max(num_graphs, 8), 8)

    x_pad = _pad2(x.astype(jnp.float32), N_pad, LANE)
    ea_pad = _pad2(edge_attr.astype(jnp.float32), E_pad, LANE)

    neg_e = -jnp.ones((E_pad,), jnp.int32)
    src_col = neg_e.at[:E].set(edge_index[0].astype(jnp.int32)).reshape(E_pad, 1)
    dst_row = neg_e.at[:E].set(edge_index[1].astype(jnp.int32)).reshape(1, E_pad)
    bat_row = (-jnp.ones((N_pad,), jnp.int32)).at[:N].set(
        batch.astype(jnp.int32)).reshape(1, N_pad)

    args = [x_pad, ea_pad, src_col, dst_row, bat_row,
            pad['lin0_w'], pad['lin0_b']]
    for L in pad['conv_layers']:
        args += [L['kk1_w'], L['kk1_b'], L['kk2_w'], L['kk2_bmat'],
                 L['root_w'], L['conv_b'], L['bn_s'], L['bn_t'],
                 L['wih'], L['whh'], L['bih'], L['bhh']]
    args += [pad['gc_rel_w'], pad['gc_rel_b'], pad['gc_root_w'],
             pad['bnl_s'], pad['bnl_t']]
    for fc in pad['fc_layers']:
        args += [fc['w'], fc['b'], fc['s'], fc['t']]
    args += [pad['fc_last_w'], pad['fc_last_b']]

    kernel = _build_kernel(n_conv, n_fc, cfg['c_in_reals'])
    y_pad = pl.pallas_call(
        kernel,
        out_shape=jax.ShapeDtypeStruct((G_pad, LANE), jnp.float32),
        compiler_params=pltpu.CompilerParams(vmem_limit_bytes=32 * 1024 * 1024),
    )(*args)
    return y_pad[:num_graphs, :cfg['out_dim']]


# ----------------------------------------------------------------------------
# Pure-JAX reference of the same forward pass (for a correctness assert).
# ----------------------------------------------------------------------------
def reference_forward(params, x, edge_index, edge_attr, batch, num_graphs):
    raw = params['raw']
    cfg = params['cfg']
    src, dst = edge_index[0], edge_index[1]
    N = x.shape[0]

    def segsum(data, idx, num):
        onehot = (idx[:, None] == jnp.arange(num)[None, :]).astype(data.dtype)
        return onehot.T @ data

    out = jax.nn.relu(x @ raw['lin0_w'] + raw['lin0_b'])
    h = out
    for i, L in enumerate(raw['conv_layers']):
        c_in = cfg['c_in_reals'][i]
        c_out = L['kk1_w'].shape[1]
        e1 = jax.nn.relu(edge_attr @ L['kk1_w'] + L['kk1_b'])
        W = (e1 @ L['kk2_w'] + L['kk2_b']).reshape(-1, c_in, c_out)
        msg = jnp.einsum('ek,ekj->ej', out[src], W)
        agg = segsum(msg, dst, N)
        m = jax.nn.relu(out @ L['root_w'] + L['conv_b'] + agg)
        m = m * L['bn_s'] + L['bn_t']
        r = jax.nn.sigmoid(m @ L['wih_r'] + L['bih_r'] + h @ L['whh_r'] + L['bhh_r'])
        z = jax.nn.sigmoid(m @ L['wih_z'] + L['bih_z'] + h @ L['whh_z'] + L['bhh_z'])
        n = jnp.tanh(m @ L['wih_n'] + L['bih_n'] + r * (h @ L['whh_n'] + L['bhh_n']))
        out = (1.0 - z) * n + z * h
        h = out
    neigh = segsum(out[src], dst, N)
    xg = jax.nn.relu(neigh @ raw['gc_rel_w'] + raw['gc_rel_b'] + out @ raw['gc_root_w'])
    xg = xg * raw['bnl_s'] + raw['bnl_t']
    xf = segsum(xg, batch, num_graphs)
    for fc in raw['fc_layers']:
        xf = jax.nn.relu(xf @ fc['w'] + fc['b'])
        xf = xf * fc['s'] + fc['t']
    return xf @ raw['fc_last_w'] + raw['fc_last_b']


# ----------------------------------------------------------------------------
# Demo
# ----------------------------------------------------------------------------
if __name__ == "__main__":
    # Small, self-consistent config (conv_dims all equal so the NNConv edge net
    # and GRU hidden sizes match, as the PyTorch module requires;
    # concat_dim == conv_dims[-1] == pred_dims[0]).
    n_features = 8
    conv_dims = [16, 16, 16]
    concat_dim = 16
    pred_dims = [16, 32]
    out_dim = 1

    N_nodes, N_edges, num_graphs = 12, 24, 2

    key = jax.random.PRNGKey(0)
    k_par, k_x, k_ei, k_ea = jax.random.split(key, 4)

    params = init_params(k_par, n_features, conv_dims, concat_dim, pred_dims, out_dim)

    x = jax.random.normal(k_x, (N_nodes, n_features), jnp.float32)
    edge_index = jax.random.randint(k_ei, (2, N_edges), 0, N_nodes, dtype=jnp.int32)
    edge_attr = jax.random.normal(k_ea, (N_edges, 6), jnp.float32)
    batch = jnp.array([0] * 6 + [1] * 6, dtype=jnp.int32)  # 2 graphs of 6 nodes

    y = gcn_model_reg_forward(params, x, edge_index, edge_attr, batch, num_graphs)
    y = jax.block_until_ready(y)
    y_ref = reference_forward(params, x, edge_index, edge_attr, batch, num_graphs)

    assert y.shape == (num_graphs, out_dim)
    assert bool(jnp.all(jnp.isfinite(y)))
    assert bool(jnp.allclose(y, y_ref, rtol=2e-3, atol=2e-3)), (y, y_ref)
    print("KERNEL_OK")
</pallas_src>

<mosaic_0001>
module attributes {stable_mosaic.version = 11 : i64} {
  func.func @kernel(%arg0: memref<16x128xf32, #tpu.memory_space<vmem>>, %arg1: memref<24x128xf32, #tpu.memory_space<vmem>>, %arg2: memref<24x1xi32, #tpu.memory_space<vmem>>, %arg3: memref<1x24xi32, #tpu.memory_space<vmem>>, %arg4: memref<1x16xi32, #tpu.memory_space<vmem>>, %arg5: memref<128x128xf32, #tpu.memory_space<vmem>>, %arg6: memref<1x128xf32, #tpu.memory_space<vmem>>, %arg7: memref<128x128xf32, #tpu.memory_space<vmem>>, %arg8: memref<1x128xf32, #tpu.memory_space<vmem>>, %arg9: memref<128x2048xf32, #tpu.memory_space<vmem>>, %arg10: memref<128x128xf32, #tpu.memory_space<vmem>>, %arg11: memref<128x128xf32, #tpu.memory_space<vmem>>, %arg12: memref<1x128xf32, #tpu.memory_space<vmem>>, %arg13: memref<1x128xf32, #tpu.memory_space<vmem>>, %arg14: memref<1x128xf32, #tpu.memory_space<vmem>>, %arg15: memref<128x384xf32, #tpu.memory_space<vmem>>, %arg16: memref<128x384xf32, #tpu.memory_space<vmem>>, %arg17: memref<1x384xf32, #tpu.memory_space<vmem>>, %arg18: memref<1x384xf32, #tpu.memory_space<vmem>>, %arg19: memref<128x128xf32, #tpu.memory_space<vmem>>, %arg20: memref<1x128xf32, #tpu.memory_space<vmem>>, %arg21: memref<128x2048xf32, #tpu.memory_space<vmem>>, %arg22: memref<128x128xf32, #tpu.memory_space<vmem>>, %arg23: memref<128x128xf32, #tpu.memory_space<vmem>>, %arg24: memref<1x128xf32, #tpu.memory_space<vmem>>, %arg25: memref<1x128xf32, #tpu.memory_space<vmem>>, %arg26: memref<1x128xf32, #tpu.memory_space<vmem>>, %arg27: memref<128x384xf32, #tpu.memory_space<vmem>>, %arg28: memref<128x384xf32, #tpu.memory_space<vmem>>, %arg29: memref<1x384xf32, #tpu.memory_space<vmem>>, %arg30: memref<1x384xf32, #tpu.memory_space<vmem>>, %arg31: memref<128x128xf32, #tpu.memory_space<vmem>>, %arg32: memref<1x128xf32, #tpu.memory_space<vmem>>, %arg33: memref<128x128xf32, #tpu.memory_space<vmem>>, %arg34: memref<1x128xf32, #tpu.memory_space<vmem>>, %arg35: memref<1x128xf32, #tpu.memory_space<vmem>>, %arg36: memref<128x128xf32, #tpu.memory_space<vmem>>, %arg37: memref<1x128xf32, #tpu.memory_space<vmem>>, %arg38: memref<1x128xf32, #tpu.memory_space<vmem>>, %arg39: memref<1x128xf32, #tpu.memory_space<vmem>>, %arg40: memref<128x128xf32, #tpu.memory_space<vmem>>, %arg41: memref<1x128xf32, #tpu.memory_space<vmem>>, %arg42: memref<8x128xf32, #tpu.memory_space<vmem>>) attributes {dimension_semantics = [], scalar_prefetch = 0 : i64, scratch_operands = 0 : i64, tpu.core_type = #tpu.core_type<tc>} {
    %c0 = arith.constant 0 : index
    %c0_0 = arith.constant 0 : index
    %0 = vector.load %arg2[%c0, %c0_0] : memref<24x1xi32, #tpu.memory_space<vmem>>, vector<24x1xi32>
    %1 = tpu.iota {dimensions = array<i32: 1>} : vector<24x16xi32>
    %2 = vector.broadcast %0 : vector<24x1xi32> to vector<24x16xi32>
    %3 = arith.cmpi eq, %2, %1 : vector<24x16xi32>
    %4 = arith.extui %3 : vector<24x16xi1> to vector<24x16xi32>
    %5 = arith.sitofp %4 : vector<24x16xi32> to vector<24x16xf32>
    %c0_1 = arith.constant 0 : index
    %c0_2 = arith.constant 0 : index
    %6 = vector.load %arg3[%c0_1, %c0_2] : memref<1x24xi32, #tpu.memory_space<vmem>>, vector<1x24xi32>
    %7 = tpu.iota {dimensions = array<i32: 0>} : vector<16x24xi32>
    %8 = vector.broadcast %6 : vector<1x24xi32> to vector<16x24xi32>
    %9 = arith.cmpi eq, %8, %7 : vector<16x24xi32>
    %10 = arith.extui %9 : vector<16x24xi1> to vector<16x24xi32>
    %11 = arith.sitofp %10 : vector<16x24xi32> to vector<16x24xf32>
    %c0_3 = arith.constant 0 : index
    %c0_4 = arith.constant 0 : index
    %12 = vector.load %arg4[%c0_3, %c0_4] : memref<1x16xi32, #tpu.memory_space<vmem>>, vector<1x16xi32>
    %13 = tpu.iota {dimensions = array<i32: 0>} : vector<8x16xi32>
    %14 = vector.broadcast %12 : vector<1x16xi32> to vector<8x16xi32>
    %15 = arith.cmpi eq, %14, %13 : vector<8x16xi32>
    %16 = arith.extui %15 : vector<8x16xi1> to vector<8x16xi32>
    %17 = arith.sitofp %16 : vector<8x16xi32> to vector<8x16xf32>
    %c0_5 = arith.constant 0 : index
    %c0_6 = arith.constant 0 : index
    %18 = vector.load %arg0[%c0_5, %c0_6] : memref<16x128xf32, #tpu.memory_space<vmem>>, vector<16x128xf32>
    %c0_7 = arith.constant 0 : index
    %c0_8 = arith.constant 0 : index
    %19 = vector.load %arg5[%c0_7, %c0_8] : memref<128x128xf32, #tpu.memory_space<vmem>>, vector<128x128xf32>
    %cst = arith.constant dense<0.000000e+00> : vector<16x128xf32>
    %20 = tpu.matmul %18, %19, %cst {dimension_numbers = #tpu.dot_dimension_numbers<[1], [0], [0], [1], [0, 0, 1, 1], [], []>} : vector<16x128xf32>, vector<128x128xf32>, vector<16x128xf32> -> vector<16x128xf32>
    %c0_9 = arith.constant 0 : index
    %c0_10 = arith.constant 0 : index
    %21 = vector.load %arg6[%c0_9, %c0_10] : memref<1x128xf32, #tpu.memory_space<vmem>>, vector<1x128xf32>
    %22 = vector.broadcast %21 : vector<1x128xf32> to vector<16x128xf32>
    %23 = arith.addf %20, %22 : vector<16x128xf32>
    %cst_11 = arith.constant 0.000000e+00 : f32
    %24 = vector.broadcast %cst_11 : f32 to vector<16x128xf32>
    %25 = arith.maximumf %23, %24 : vector<16x128xf32>
    %c0_12 = arith.constant 0 : index
    %c0_13 = arith.constant 0 : index
    %26 = vector.load %arg1[%c0_12, %c0_13] : memref<24x128xf32, #tpu.memory_space<vmem>>, vector<24x128xf32>
    %c0_14 = arith.constant 0 : index
    %c0_15 = arith.constant 0 : index
    %27 = vector.load %arg7[%c0_14, %c0_15] : memref<128x128xf32, #tpu.memory_space<vmem>>, vector<128x128xf32>
    %cst_16 = arith.constant dense<0.000000e+00> : vector<24x128xf32>
    %28 = tpu.matmul %26, %27, %cst_16 {dimension_numbers = #tpu.dot_dimension_numbers<[1], [0], [0], [1], [0, 0, 1, 1], [], []>} : vector<24x128xf32>, vector<128x128xf32>, vector<24x128xf32> -> vector<24x128xf32>
    %c0_17 = arith.constant 0 : index
    %c0_18 = arith.constant 0 : index
    %29 = vector.load %arg8[%c0_17, %c0_18] : memref<1x128xf32, #tpu.memory_space<vmem>>, vector<1x128xf32>
    %30 = vector.broadcast %29 : vector<1x128xf32> to vector<24x128xf32>
    %31 = arith.addf %28, %30 : vector<24x128xf32>
    %cst_19 = arith.constant 0.000000e+00 : f32
    %32 = vector.broadcast %cst_19 : f32 to vector<24x128xf32>
    %33 = arith.maximumf %31, %32 : vector<24x128xf32>
    %c0_20 = arith.constant 0 : index
    %c0_21 = arith.constant 0 : index
    %34 = vector.load %arg9[%c0_20, %c0_21] : memref<128x2048xf32, #tpu.memory_space<vmem>>, vector<128x2048xf32>
    %cst_22 = arith.constant dense<0.000000e+00> : vector<24x2048xf32>
    %35 = tpu.matmul %33, %34, %cst_22 {dimension_numbers = #tpu.dot_dimension_numbers<[1], [0], [0], [1], [0, 0, 1, 1], [], []>} : vector<24x128xf32>, vector<128x2048xf32>, vector<24x2048xf32> -> vector<24x2048xf32>
    %cst_23 = arith.constant dense<0.000000e+00> : vector<24x128xf32>
    %36 = tpu.matmul %5, %25, %cst_23 {dimension_numbers = #tpu.dot_dimension_numbers<[1], [0], [0], [1], [0, 0, 1, 1], [], []>} : vector<24x16xf32>, vector<16x128xf32>, vector<24x128xf32> -> vector<24x128xf32>
    %c0_24 = arith.constant 0 : index
    %c0_25 = arith.constant 0 : index
    %37 = vector.load %arg10[%c0_24, %c0_25] : memref<128x128xf32, #tpu.memory_space<vmem>>, vector<128x128xf32>
    %cst_26 = arith.constant dense<0.000000e+00> : vector<24x128xf32>
    %38 = tpu.matmul %36, %37, %cst_26 {dimension_numbers = #tpu.dot_dimension_numbers<[1], [0], [0], [1], [0, 0, 1, 1], [], []>} : vector<24x128xf32>, vector<128x128xf32>, vector<24x128xf32> -> vector<24x128xf32>
    %39 = vector.extract_strided_slice %36 {offsets = [0, 0], sizes = [24, 1], strides = [1, 1]} : vector<24x128xf32> to vector<24x1xf32>
    %40 = vector.extract_strided_slice %35 {offsets = [0, 0], sizes = [24, 128], strides = [1, 1]} : vector<24x2048xf32> to vector<24x128xf32>
    %41 = vector.broadcast %39 : vector<24x1xf32> to vector<24x128xf32>
    %42 = arith.mulf %41, %40 : vector<24x128xf32>
    %43 = arith.addf %38, %42 : vector<24x128xf32>
    %44 = vector.extract_strided_slice %36 {offsets = [0, 1], sizes = [24, 1], strides = [1, 1]} : vector<24x128xf32> to vector<24x1xf32>
    %45 = vector.extract_strided_slice %35 {offsets = [0, 128], sizes = [24, 128], strides = [1, 1]} : vector<24x2048xf32> to vector<24x128xf32>
    %46 = vector.broadcast %44 : vector<24x1xf32> to vector<24x128xf32>
    %47 = arith.mulf %46, %45 : vector<24x128xf32>
    %48 = arith.addf %43, %47 : vector<24x128xf32>
    %49 = vector.extract_strided_slice %36 {offsets = [0, 2], sizes = [24, 1], strides = [1, 1]} : vector<24x128xf32> to vector<24x1xf32>
    %50 = vector.extract_strided_slice %35 {offsets = [0, 256], sizes = [24, 128], strides = [1, 1]} : vector<24x2048xf32> to vector<24x128xf32>
    %51 = vector.broadcast %49 : vector<24x1xf32> to vector<24x128xf32>
    %52 = arith.mulf %51, %50 : vector<24x128xf32>
    %53 = arith.addf %48, %52 : vector<24x128xf32>
    %54 = vector.extract_strided_slice %36 {offsets = [0, 3], sizes = [24, 1], strides = [1, 1]} : vector<24x128xf32> to vector<24x1xf32>
    %55 = vector.extract_strided_slice %35 {offsets = [0, 384], sizes = [24, 128], strides = [1, 1]} : vector<24x2048xf32> to vector<24x128xf32>
    %56 = vector.broadcast %54 : vector<24x1xf32> to vector<24x128xf32>
    %57 = arith.mulf %56, %55 : vector<24x128xf32>
    %58 = arith.addf %53, %57 : vector<24x128xf32>
    %59 = vector.extract_strided_slice %36 {offsets = [0, 4], sizes = [24, 1], strides = [1, 1]} : vector<24x128xf32> to vector<24x1xf32>
    %60 = vector.extract_strided_slice %35 {offsets = [0, 512], sizes = [24, 128], strides = [1, 1]} : vector<24x2048xf32> to vector<24x128xf32>
    %61 = vector.broadcast %59 : vector<24x1xf32> to vector<24x128xf32>
    %62 = arith.mulf %61, %60 : vector<24x128xf32>
    %63 = arith.addf %58, %62 : vector<24x128xf32>
    %64 = vector.extract_strided_slice %36 {offsets = [0, 5], sizes = [24, 1], strides = [1, 1]} : vector<24x128xf32> to vector<24x1xf32>
    %65 = vector.extract_strided_slice %35 {offsets = [0, 640], sizes = [24, 128], strides = [1, 1]} : vector<24x2048xf32> to vector<24x128xf32>
    %66 = vector.broadcast %64 : vector<24x1xf32> to vector<24x128xf32>
    %67 = arith.mulf %66, %65 : vector<24x128xf32>
    %68 = arith.addf %63, %67 : vector<24x128xf32>
    %69 = vector.extract_strided_slice %36 {offsets = [0, 6], sizes = [24, 1], strides = [1, 1]} : vector<24x128xf32> to vector<24x1xf32>
    %70 = vector.extract_strided_slice %35 {offsets = [0, 768], sizes = [24, 128], strides = [1, 1]} : vector<24x2048xf32> to vector<24x128xf32>
    %71 = vector.broadcast %69 : vector<24x1xf32> to vector<24x128xf32>
    %72 = arith.mulf %71, %70 : vector<24x128xf32>
    %73 = arith.addf %68, %72 : vector<24x128xf32>
    %74 = vector.extract_strided_slice %36 {offsets = [0, 7], sizes = [24, 1], strides = [1, 1]} : vector<24x128xf32> to vector<24x1xf32>
    %75 = vector.extract_strided_slice %35 {offsets = [0, 896], sizes = [24, 128], strides = [1, 1]} : vector<24x2048xf32> to vector<24x128xf32>
    %76 = vector.broadcast %74 : vector<24x1xf32> to vector<24x128xf32>
    %77 = arith.mulf %76, %75 : vector<24x128xf32>
    %78 = arith.addf %73, %77 : vector<24x128xf32>
    %79 = vector.extract_strided_slice %36 {offsets = [0, 8], sizes = [24, 1], strides = [1, 1]} : vector<24x128xf32> to vector<24x1xf32>
    %80 = vector.extract_strided_slice %35 {offsets = [0, 1024], sizes = [24, 128], strides = [1, 1]} : vector<24x2048xf32> to vector<24x128xf32>
    %81 = vector.broadcast %79 : vector<24x1xf32> to vector<24x128xf32>
    %82 = arith.mulf %81, %80 : vector<24x128xf32>
    %83 = arith.addf %78, %82 : vector<24x128xf32>
    %84 = vector.extract_strided_slice %36 {offsets = [0, 9], sizes = [24, 1], strides = [1, 1]} : vector<24x128xf32> to vector<24x1xf32>
    %85 = vector.extract_strided_slice %35 {offsets = [0, 1152], sizes = [24, 128], strides = [1, 1]} : vector<24x2048xf32> to vector<24x128xf32>
    %86 = vector.broadcast %84 : vector<24x1xf32> to vector<24x128xf32>
    %87 = arith.mulf %86, %85 : vector<24x128xf32>
    %88 = arith.addf %83, %87 : vector<24x128xf32>
    %89 = vector.extract_strided_slice %36 {offsets = [0, 10], sizes = [24, 1], strides = [1, 1]} : vector<24x128xf32> to vector<24x1xf32>
    %90 = vector.extract_strided_slice %35 {offsets = [0, 1280], sizes = [24, 128], strides = [1, 1]} : vector<24x2048xf32> to vector<24x128xf32>
    %91 = vector.broadcast %89 : vector<24x1xf32> to vector<24x128xf32>
    %92 = arith.mulf %91, %90 : vector<24x128xf32>
    %93 = arith.addf %88, %92 : vector<24x128xf32>
    %94 = vector.extract_strided_slice %36 {offsets = [0, 11], sizes = [24, 1], strides = [1, 1]} : vector<24x128xf32> to vector<24x1xf32>
    %95 = vector.extract_strided_slice %35 {offsets = [0, 1408], sizes = [24, 128], strides = [1, 1]} : vector<24x2048xf32> to vector<24x128xf32>
    %96 = vector.broadcast %94 : vector<24x1xf32> to vector<24x128xf32>
    %97 = arith.mulf %96, %95 : vector<24x128xf32>
    %98 = arith.addf %93, %97 : vector<24x128xf32>
    %99 = vector.extract_strided_slice %36 {offsets = [0, 12], sizes = [24, 1], strides = [1, 1]} : vector<24x128xf32> to vector<24x1xf32>
    %100 = vector.extract_strided_slice %35 {offsets = [0, 1536], sizes = [24, 128], strides = [1, 1]} : vector<24x2048xf32> to vector<24x128xf32>
    %101 = vector.broadcast %99 : vector<24x1xf32> to vector<24x128xf32>
    %102 = arith.mulf %101, %100 : vector<24x128xf32>
    %103 = arith.addf %98, %102 : vector<24x128xf32>
    %104 = vector.extract_strided_slice %36 {offsets = [0, 13], sizes = [24, 1], strides = [1, 1]} : vector<24x128xf32> to vector<24x1xf32>
    %105 = vector.extract_strided_slice %35 {offsets = [0, 1664], sizes = [24, 128], strides = [1, 1]} : vector<24x2048xf32> to vector<24x128xf32>
    %106 = vector.broadcast %104 : vector<24x1xf32> to vector<24x128xf32>
    %107 = arith.mulf %106, %105 : vector<24x128xf32>
    %108 = arith.addf %103, %107 : vector<24x128xf32>
    %109 = vector.extract_strided_slice %36 {offsets = [0, 14], sizes = [24, 1], strides = [1, 1]} : vector<24x128xf32> to vector<24x1xf32>
    %110 = vector.extract_strided_slice %35 {offsets = [0, 1792], sizes = [24, 128], strides = [1, 1]} : vector<24x2048xf32> to vector<24x128xf32>
    %111 = vector.broadcast %109 : vector<24x1xf32> to vector<24x128xf32>
    %112 = arith.mulf %111, %110 : vector<24x128xf32>
    %113 = arith.addf %108, %112 : vector<24x128xf32>
    %114 = vector.extract_strided_slice %36 {offsets = [0, 15], sizes = [24, 1], strides = [1, 1]} : vector<24x128xf32> to vector<24x1xf32>
    %115 = vector.extract_strided_slice %35 {offsets = [0, 1920], sizes = [24, 128], strides = [1, 1]} : vector<24x2048xf32> to vector<24x128xf32>
    %116 = vector.broadcast %114 : vector<24x1xf32> to vector<24x128xf32>
    %117 = arith.mulf %116, %115 : vector<24x128xf32>
    %118 = arith.addf %113, %117 : vector<24x128xf32>
    %cst_27 = arith.constant dense<0.000000e+00> : vector<16x128xf32>
    %119 = tpu.matmul %11, %118, %cst_27 {dimension_numbers = #tpu.dot_dimension_numbers<[1], [0], [0], [1], [0, 0, 1, 1], [], []>} : vector<16x24xf32>, vector<24x128xf32>, vector<16x128xf32> -> vector<16x128xf32>
    %c0_28 = arith.constant 0 : index
    %c0_29 = arith.constant 0 : index
    %120 = vector.load %arg11[%c0_28, %c0_29] : memref<128x128xf32, #tpu.memory_space<vmem>>, vector<128x128xf32>
    %cst_30 = arith.constant dense<0.000000e+00> : vector<16x128xf32>
    %121 = tpu.matmul %25, %120, %cst_30 {dimension_numbers = #tpu.dot_dimension_numbers<[1], [0], [0], [1], [0, 0, 1, 1], [], []>} : vector<16x128xf32>, vector<128x128xf32>, vector<16x128xf32> -> vector<16x128xf32>
    %c0_31 = arith.constant 0 : index
    %c0_32 = arith.constant 0 : index
    %122 = vector.load %arg12[%c0_31, %c0_32] : memref<1x128xf32, #tpu.memory_space<vmem>>, vector<1x128xf32>
    %123 = vector.broadcast %122 : vector<1x128xf32> to vector<16x128xf32>
    %124 = arith.addf %121, %123 : vector<16x128xf32>
    %125 = arith.addf %124, %119 : vector<16x128xf32>
    %cst_33 = arith.constant 0.000000e+00 : f32
    %126 = vector.broadcast %cst_33 : f32 to vector<16x128xf32>
    %127 = arith.maximumf %125, %126 : vector<16x128xf32>
    %c0_34 = arith.constant 0 : index
    %c0_35 = arith.constant 0 : index
    %128 = vector.load %arg13[%c0_34, %c0_35] : memref<1x128xf32, #tpu.memory_space<vmem>>, vector<1x128xf32>
    %129 = vector.broadcast %128 : vector<1x128xf32> to vector<16x128xf32>
    %130 = arith.mulf %127, %129 : vector<16x128xf32>
    %c0_36 = arith.constant 0 : index
    %c0_37 = arith.constant 0 : index
    %131 = vector.load %arg14[%c0_36, %c0_37] : memref<1x128xf32, #tpu.memory_space<vmem>>, vector<1x128xf32>
    %132 = vector.broadcast %131 : vector<1x128xf32> to vector<16x128xf32>
    %133 = arith.addf %130, %132 : vector<16x128xf32>
    %c0_38 = arith.constant 0 : index
    %c0_39 = arith.constant 0 : index
    %134 = vector.load %arg15[%c0_38, %c0_39] : memref<128x384xf32, #tpu.memory_space<vmem>>, vector<128x384xf32>
    %cst_40 = arith.constant dense<0.000000e+00> : vector<16x384xf32>
    %135 = tpu.matmul %133, %134, %cst_40 {dimension_numbers = #tpu.dot_dimension_numbers<[1], [0], [0], [1], [0, 0, 1, 1], [], []>} : vector<16x128xf32>, vector<128x384xf32>, vector<16x384xf32> -> vector<16x384xf32>
    %c0_41 = arith.constant 0 : index
    %c0_42 = arith.constant 0 : index
    %136 = vector.load %arg17[%c0_41, %c0_42] : memref<1x384xf32, #tpu.memory_space<vmem>>, vector<1x384xf32>
    %137 = vector.broadcast %136 : vector<1x384xf32> to vector<16x384xf32>
    %138 = arith.addf %135, %137 : vector<16x384xf32>
    %c0_43 = arith.constant 0 : index
    %c0_44 = arith.constant 0 : index
    %139 = vector.load %arg16[%c0_43, %c0_44] : memref<128x384xf32, #tpu.memory_space<vmem>>, vector<128x384xf32>
    %cst_45 = arith.constant dense<0.000000e+00> : vector<16x384xf32>
    %140 = tpu.matmul %25, %139, %cst_45 {dimension_numbers = #tpu.dot_dimension_numbers<[1], [0], [0], [1], [0, 0, 1, 1], [], []>} : vector<16x128xf32>, vector<128x384xf32>, vector<16x384xf32> -> vector<16x384xf32>
    %c0_46 = arith.constant 0 : index
    %c0_47 = arith.constant 0 : index
    %141 = vector.load %arg18[%c0_46, %c0_47] : memref<1x384xf32, #tpu.memory_space<vmem>>, vector<1x384xf32>
    %142 = vector.broadcast %141 : vector<1x384xf32> to vector<16x384xf32>
    %143 = arith.addf %140, %142 : vector<16x384xf32>
    %144 = vector.extract_strided_slice %138 {offsets = [0, 0], sizes = [16, 128], strides = [1, 1]} : vector<16x384xf32> to vector<16x128xf32>
    %145 = vector.extract_strided_slice %143 {offsets = [0, 0], sizes = [16, 128], strides = [1, 1]} : vector<16x384xf32> to vector<16x128xf32>
    %146 = arith.addf %144, %145 : vector<16x128xf32>
    %147 = arith.negf %146 : vector<16x128xf32>
    %148 = math.exp %147 : vector<16x128xf32>
    %cst_48 = arith.constant 1.000000e+00 : f32
    %149 = vector.broadcast %cst_48 : f32 to vector<16x128xf32>
    %150 = arith.addf %149, %148 : vector<16x128xf32>
    %151 = arith.divf %149, %150 : vector<16x128xf32>
    %152 = vector.extract_strided_slice %138 {offsets = [0, 128], sizes = [16, 128], strides = [1, 1]} : vector<16x384xf32> to vector<16x128xf32>
    %153 = vector.extract_strided_slice %143 {offsets = [0, 128], sizes = [16, 128], strides = [1, 1]} : vector<16x384xf32> to vector<16x128xf32>
    %154 = arith.addf %152, %153 : vector<16x128xf32>
    %155 = arith.negf %154 : vector<16x128xf32>
    %156 = math.exp %155 : vector<16x128xf32>
    %cst_49 = arith.constant 1.000000e+00 : f32
    %157 = vector.broadcast %cst_49 : f32 to vector<16x128xf32>
    %158 = arith.addf %157, %156 : vector<16x128xf32>
    %159 = arith.divf %157, %158 : vector<16x128xf32>
    %160 = vector.extract_strided_slice %138 {offsets = [0, 256], sizes = [16, 128], strides = [1, 1]} : vector<16x384xf32> to vector<16x128xf32>
    %161 = vector.extract_strided_slice %143 {offsets = [0, 256], sizes = [16, 128], strides = [1, 1]} : vector<16x384xf32> to vector<16x128xf32>
    %162 = arith.mulf %151, %161 : vector<16x128xf32>
    %163 = arith.addf %160, %162 : vector<16x128xf32>
    %164 = math.tanh %163 : vector<16x128xf32>
    %cst_50 = arith.constant 1.000000e+00 : f32
    %165 = vector.broadcast %cst_50 : f32 to vector<16x128xf32>
    %166 = arith.subf %165, %159 : vector<16x128xf32>
    %167 = arith.mulf %166, %164 : vector<16x128xf32>
    %168 = arith.mulf %159, %25 : vector<16x128xf32>
    %169 = arith.addf %167, %168 : vector<16x128xf32>
    %c0_51 = arith.constant 0 : index
    %c0_52 = arith.constant 0 : index
    %170 = vector.load %arg1[%c0_51, %c0_52] : memref<24x128xf32, #tpu.memory_space<vmem>>, vector<24x128xf32>
    %c0_53 = arith.constant 0 : index
    %c0_54 = arith.constant 0 : index
    %171 = vector.load %arg19[%c0_53, %c0_54] : memref<128x128xf32, #tpu.memory_space<vmem>>, vector<128x128xf32>
    %cst_55 = arith.constant dense<0.000000e+00> : vector<24x128xf32>
    %172 = tpu.matmul %170, %171, %cst_55 {dimension_numbers = #tpu.dot_dimension_numbers<[1], [0], [0], [1], [0, 0, 1, 1], [], []>} : vector<24x128xf32>, vector<128x128xf32>, vector<24x128xf32> -> vector<24x128xf32>
    %c0_56 = arith.constant 0 : index
    %c0_57 = arith.constant 0 : index
    %173 = vector.load %arg20[%c0_56, %c0_57] : memref<1x128xf32, #tpu.memory_space<vmem>>, vector<1x128xf32>
    %174 = vector.broadcast %173 : vector<1x128xf32> to vector<24x128xf32>
    %175 = arith.addf %172, %174 : vector<24x128xf32>
    %cst_58 = arith.constant 0.000000e+00 : f32
    %176 = vector.broadcast %cst_58 : f32 to vector<24x128xf32>
    %177 = arith.maximumf %175, %176 : vector<24x128xf32>
    %c0_59 = arith.constant 0 : index
    %c0_60 = arith.constant 0 : index
    %178 = vector.load %arg21[%c0_59, %c0_60] : memref<128x2048xf32, #tpu.memory_space<vmem>>, vector<128x2048xf32>
    %cst_61 = arith.constant dense<0.000000e+00> : vector<24x2048xf32>
    %179 = tpu.matmul %177, %178, %cst_61 {dimension_numbers = #tpu.dot_dimension_numbers<[1], [0], [0], [1], [0, 0, 1, 1], [], []>} : vector<24x128xf32>, vector<128x2048xf32>, vector<24x2048xf32> -> vector<24x2048xf32>
    %cst_62 = arith.constant dense<0.000000e+00> : vector<24x128xf32>
    %180 = tpu.matmul %5, %169, %cst_62 {dimension_numbers = #tpu.dot_dimension_numbers<[1], [0], [0], [1], [0, 0, 1, 1], [], []>} : vector<24x16xf32>, vector<16x128xf32>, vector<24x128xf32> -> vector<24x128xf32>
    %c0_63 = arith.constant 0 : index
    %c0_64 = arith.constant 0 : index
    %181 = vector.load %arg22[%c0_63, %c0_64] : memref<128x128xf32, #tpu.memory_space<vmem>>, vector<128x128xf32>
    %cst_65 = arith.constant dense<0.000000e+00> : vector<24x128xf32>
    %182 = tpu.matmul %180, %181, %cst_65 {dimension_numbers = #tpu.dot_dimension_numbers<[1], [0], [0], [1], [0, 0, 1, 1], [], []>} : vector<24x128xf32>, vector<128x128xf32>, vector<24x128xf32> -> vector<24x128xf32>
    %183 = vector.extract_strided_slice %180 {offsets = [0, 0], sizes = [24, 1], strides = [1, 1]} : vector<24x128xf32> to vector<24x1xf32>
    %184 = vector.extract_strided_slice %179 {offsets = [0, 0], sizes = [24, 128], strides = [1, 1]} : vector<24x2048xf32> to vector<24x128xf32>
    %185 = vector.broadcast %183 : vector<24x1xf32> to vector<24x128xf32>
    %186 = arith.mulf %185, %184 : vector<24x128xf32>
    %187 = arith.addf %182, %186 : vector<24x128xf32>
    %188 = vector.extract_strided_slice %180 {offsets = [0, 1], sizes = [24, 1], strides = [1, 1]} : vector<24x128xf32> to vector<24x1xf32>
    %189 = vector.extract_strided_slice %179 {offsets = [0, 128], sizes = [24, 128], strides = [1, 1]} : vector<24x2048xf32> to vector<24x128xf32>
    %190 = vector.broadcast %188 : vector<24x1xf32> to vector<24x128xf32>
    %191 = arith.mulf %190, %189 : vector<24x128xf32>
    %192 = arith.addf %187, %191 : vector<24x128xf32>
    %193 = vector.extract_strided_slice %180 {offsets = [0, 2], sizes = [24, 1], strides = [1, 1]} : vector<24x128xf32> to vector<24x1xf32>
    %194 = vector.extract_strided_slice %179 {offsets = [0, 256], sizes = [24, 128], strides = [1, 1]} : vector<24x2048xf32> to vector<24x128xf32>
    %195 = vector.broadcast %193 : vector<24x1xf32> to vector<24x128xf32>
    %196 = arith.mulf %195, %194 : vector<24x128xf32>
    %197 = arith.addf %192, %196 : vector<24x128xf32>
    %198 = vector.extract_strided_slice %180 {offsets = [0, 3], sizes = [24, 1], strides = [1, 1]} : vector<24x128xf32> to vector<24x1xf32>
    %199 = vector.extract_strided_slice %179 {offsets = [0, 384], sizes = [24, 128], strides = [1, 1]} : vector<24x2048xf32> to vector<24x128xf32>
    %200 = vector.broadcast %198 : vector<24x1xf32> to vector<24x128xf32>
    %201 = arith.mulf %200, %199 : vector<24x128xf32>
    %202 = arith.addf %197, %201 : vector<24x128xf32>
    %203 = vector.extract_strided_slice %180 {offsets = [0, 4], sizes = [24, 1], strides = [1, 1]} : vector<24x128xf32> to vector<24x1xf32>
    %204 = vector.extract_strided_slice %179 {offsets = [0, 512], sizes = [24, 128], strides = [1, 1]} : vector<24x2048xf32> to vector<24x128xf32>
    %205 = vector.broadcast %203 : vector<24x1xf32> to vector<24x128xf32>
    %206 = arith.mulf %205, %204 : vector<24x128xf32>
    %207 = arith.addf %202, %206 : vector<24x128xf32>
    %208 = vector.extract_strided_slice %180 {offsets = [0, 5], sizes = [24, 1], strides = [1, 1]} : vector<24x128xf32> to vector<24x1xf32>
    %209 = vector.extract_strided_slice %179 {offsets = [0, 640], sizes = [24, 128], strides = [1, 1]} : vector<24x2048xf32> to vector<24x128xf32>
    %210 = vector.broadcast %208 : vector<24x1xf32> to vector<24x128xf32>
    %211 = arith.mulf %210, %209 : vector<24x128xf32>
    %212 = arith.addf %207, %211 : vector<24x128xf32>
    %213 = vector.extract_strided_slice %180 {offsets = [0, 6], sizes = [24, 1], strides = [1, 1]} : vector<24x128xf32> to vector<24x1xf32>
    %214 = vector.extract_strided_slice %179 {offsets = [0, 768], sizes = [24, 128], strides = [1, 1]} : vector<24x2048xf32> to vector<24x128xf32>
    %215 = vector.broadcast %213 : vector<24x1xf32> to vector<24x128xf32>
    %216 = arith.mulf %215, %214 : vector<24x128xf32>
    %217 = arith.addf %212, %216 : vector<24x128xf32>
    %218 = vector.extract_strided_slice %180 {offsets = [0, 7], sizes = [24, 1], strides = [1, 1]} : vector<24x128xf32> to vector<24x1xf32>
    %219 = vector.extract_strided_slice %179 {offsets = [0, 896], sizes = [24, 128], strides = [1, 1]} : vector<24x2048xf32> to vector<24x128xf32>
    %220 = vector.broadcast %218 : vector<24x1xf32> to vector<24x128xf32>
    %221 = arith.mulf %220, %219 : vector<24x128xf32>
    %222 = arith.addf %217, %221 : vector<24x128xf32>
    %223 = vector.extract_strided_slice %180 {offsets = [0, 8], sizes = [24, 1], strides = [1, 1]} : vector<24x128xf32> to vector<24x1xf32>
    %224 = vector.extract_strided_slice %179 {offsets = [0, 1024], sizes = [24, 128], strides = [1, 1]} : vector<24x2048xf32> to vector<24x128xf32>
    %225 = vector.broadcast %223 : vector<24x1xf32> to vector<24x128xf32>
    %226 = arith.mulf %225, %224 : vector<24x128xf32>
    %227 = arith.addf %222, %226 : vector<24x128xf32>
    %228 = vector.extract_strided_slice %180 {offsets = [0, 9], sizes = [24, 1], strides = [1, 1]} : vector<24x128xf32> to vector<24x1xf32>
    %229 = vector.extract_strided_slice %179 {offsets = [0, 1152], sizes = [24, 128], strides = [1, 1]} : vector<24x2048xf32> to vector<24x128xf32>
    %230 = vector.broadcast %228 : vector<24x1xf32> to vector<24x128xf32>
    %231 = arith.mulf %230, %229 : vector<24x128xf32>
    %232 = arith.addf %227, %231 : vector<24x128xf32>
    %233 = vector.extract_strided_slice %180 {offsets = [0, 10], sizes = [24, 1], strides = [1, 1]} : vector<24x128xf32> to vector<24x1xf32>
    %234 = vector.extract_strided_slice %179 {offsets = [0, 1280], sizes = [24, 128], strides = [1, 1]} : vector<24x2048xf32> to vector<24x128xf32>
    %235 = vector.broadcast %233 : vector<24x1xf32> to vector<24x128xf32>
    %236 = arith.mulf %235, %234 : vector<24x128xf32>
    %237 = arith.addf %232, %236 : vector<24x128xf32>
    %238 = vector.extract_strided_slice %180 {offsets = [0, 11], sizes = [24, 1], strides = [1, 1]} : vector<24x128xf32> to vector<24x1xf32>
    %239 = vector.extract_strided_slice %179 {offsets = [0, 1408], sizes = [24, 128], strides = [1, 1]} : vector<24x2048xf32> to vector<24x128xf32>
    %240 = vector.broadcast %238 : vector<24x1xf32> to vector<24x128xf32>
    %241 = arith.mulf %240, %239 : vector<24x128xf32>
    %242 = arith.addf %237, %241 : vector<24x128xf32>
    %243 = vector.extract_strided_slice %180 {offsets = [0, 12], sizes = [24, 1], strides = [1, 1]} : vector<24x128xf32> to vector<24x1xf32>
    %244 = vector.extract_strided_slice %179 {offsets = [0, 1536], sizes = [24, 128], strides = [1, 1]} : vector<24x2048xf32> to vector<24x128xf32>
    %245 = vector.broadcast %243 : vector<24x1xf32> to vector<24x128xf32>
    %246 = arith.mulf %245, %244 : vector<24x128xf32>
    %247 = arith.addf %242, %246 : vector<24x128xf32>
    %248 = vector.extract_strided_slice %180 {offsets = [0, 13], sizes = [24, 1], strides = [1, 1]} : vector<24x128xf32> to vector<24x1xf32>
    %249 = vector.extract_strided_slice %179 {offsets = [0, 1664], sizes = [24, 128], strides = [1, 1]} : vector<24x2048xf32> to vector<24x128xf32>
    %250 = vector.broadcast %248 : vector<24x1xf32> to vector<24x128xf32>
    %251 = arith.mulf %250, %249 : vector<24x128xf32>
    %252 = arith.addf %247, %251 : vector<24x128xf32>
    %253 = vector.extract_strided_slice %180 {offsets = [0, 14], sizes = [24, 1], strides = [1, 1]} : vector<24x128xf32> to vector<24x1xf32>
    %254 = vector.extract_strided_slice %179 {offsets = [0, 1792], sizes = [24, 128], strides = [1, 1]} : vector<24x2048xf32> to vector<24x128xf32>
    %255 = vector.broadcast %253 : vector<24x1xf32> to vector<24x128xf32>
    %256 = arith.mulf %255, %254 : vector<24x128xf32>
    %257 = arith.addf %252, %256 : vector<24x128xf32>
    %258 = vector.extract_strided_slice %180 {offsets = [0, 15], sizes = [24, 1], strides = [1, 1]} : vector<24x128xf32> to vector<24x1xf32>
    %259 = vector.extract_strided_slice %179 {offsets = [0, 1920], sizes = [24, 128], strides = [1, 1]} : vector<24x2048xf32> to vector<24x128xf32>
    %260 = vector.broadcast %258 : vector<24x1xf32> to vector<24x128xf32>
    %261 = arith.mulf %260, %259 : vector<24x128xf32>
    %262 = arith.addf %257, %261 : vector<24x128xf32>
    %cst_66 = arith.constant dense<0.000000e+00> : vector<16x128xf32>
    %263 = tpu.matmul %11, %262, %cst_66 {dimension_numbers = #tpu.dot_dimension_numbers<[1], [0], [0], [1], [0, 0, 1, 1], [], []>} : vector<16x24xf32>, vector<24x128xf32>, vector<16x128xf32> -> vector<16x128xf32>
    %c0_67 = arith.constant 0 : index
    %c0_68 = arith.constant 0 : index
    %264 = vector.load %arg23[%c0_67, %c0_68] : memref<128x128xf32, #tpu.memory_space<vmem>>, vector<128x128xf32>
    %cst_69 = arith.constant dense<0.000000e+00> : vector<16x128xf32>
    %265 = tpu.matmul %169, %264, %cst_69 {dimension_numbers = #tpu.dot_dimension_numbers<[1], [0], [0], [1], [0, 0, 1, 1], [], []>} : vector<16x128xf32>, vector<128x128xf32>, vector<16x128xf32> -> vector<16x128xf32>
    %c0_70 = arith.constant 0 : index
    %c0_71 = arith.constant 0 : index
    %266 = vector.load %arg24[%c0_70, %c0_71] : memref<1x128xf32, #tpu.memory_space<vmem>>, vector<1x128xf32>
    %267 = vector.broadcast %266 : vector<1x128xf32> to vector<16x128xf32>
    %268 = arith.addf %265, %267 : vector<16x128xf32>
    %269 = arith.addf %268, %263 : vector<16x128xf32>
    %cst_72 = arith.constant 0.000000e+00 : f32
    %270 = vector.broadcast %cst_72 : f32 to vector<16x128xf32>
    %271 = arith.maximumf %269, %270 : vector<16x128xf32>
    %c0_73 = arith.constant 0 : index
    %c0_74 = arith.constant 0 : index
    %272 = vector.load %arg25[%c0_73, %c0_74] : memref<1x128xf32, #tpu.memory_space<vmem>>, vector<1x128xf32>
    %273 = vector.broadcast %272 : vector<1x128xf32> to vector<16x128xf32>
    %274 = arith.mulf %271, %273 : vector<16x128xf32>
    %c0_75 = arith.constant 0 : index
    %c0_76 = arith.constant 0 : index
    %275 = vector.load %arg26[%c0_75, %c0_76] : memref<1x128xf32, #tpu.memory_space<vmem>>, vector<1x128xf32>
    %276 = vector.broadcast %275 : vector<1x128xf32> to vector<16x128xf32>
    %277 = arith.addf %274, %276 : vector<16x128xf32>
    %c0_77 = arith.constant 0 : index
    %c0_78 = arith.constant 0 : index
    %278 = vector.load %arg27[%c0_77, %c0_78] : memref<128x384xf32, #tpu.memory_space<vmem>>, vector<128x384xf32>
    %cst_79 = arith.constant dense<0.000000e+00> : vector<16x384xf32>
    %279 = tpu.matmul %277, %278, %cst_79 {dimension_numbers = #tpu.dot_dimension_numbers<[1], [0], [0], [1], [0, 0, 1, 1], [], []>} : vector<16x128xf32>, vector<128x384xf32>, vector<16x384xf32> -> vector<16x384xf32>
    %c0_80 = arith.constant 0 : index
    %c0_81 = arith.constant 0 : index
    %280 = vector.load %arg29[%c0_80, %c0_81] : memref<1x384xf32, #tpu.memory_space<vmem>>, vector<1x384xf32>
    %281 = vector.broadcast %280 : vector<1x384xf32> to vector<16x384xf32>
    %282 = arith.addf %279, %281 : vector<16x384xf32>
    %c0_82 = arith.constant 0 : index
    %c0_83 = arith.constant 0 : index
    %283 = vector.load %arg28[%c0_82, %c0_83] : memref<128x384xf32, #tpu.memory_space<vmem>>, vector<128x384xf32>
    %cst_84 = arith.constant dense<0.000000e+00> : vector<16x384xf32>
    %284 = tpu.matmul %169, %283, %cst_84 {dimension_numbers = #tpu.dot_dimension_numbers<[1], [0], [0], [1], [0, 0, 1, 1], [], []>} : vector<16x128xf32>, vector<128x384xf32>, vector<16x384xf32> -> vector<16x384xf32>
    %c0_85 = arith.constant 0 : index
    %c0_86 = arith.constant 0 : index
    %285 = vector.load %arg30[%c0_85, %c0_86] : memref<1x384xf32, #tpu.memory_space<vmem>>, vector<1x384xf32>
    %286 = vector.broadcast %285 : vector<1x384xf32> to vector<16x384xf32>
    %287 = arith.addf %284, %286 : vector<16x384xf32>
    %288 = vector.extract_strided_slice %282 {offsets = [0, 0], sizes = [16, 128], strides = [1, 1]} : vector<16x384xf32> to vector<16x128xf32>
    %289 = vector.extract_strided_slice %287 {offsets = [0, 0], sizes = [16, 128], strides = [1, 1]} : vector<16x384xf32> to vector<16x128xf32>
    %290 = arith.addf %288, %289 : vector<16x128xf32>
    %291 = arith.negf %290 : vector<16x128xf32>
    %292 = math.exp %291 : vector<16x128xf32>
    %cst_87 = arith.constant 1.000000e+00 : f32
    %293 = vector.broadcast %cst_87 : f32 to vector<16x128xf32>
    %294 = arith.addf %293, %292 : vector<16x128xf32>
    %295 = arith.divf %293, %294 : vector<16x128xf32>
    %296 = vector.extract_strided_slice %282 {offsets = [0, 128], sizes = [16, 128], strides = [1, 1]} : vector<16x384xf32> to vector<16x128xf32>
    %297 = vector.extract_strided_slice %287 {offsets = [0, 128], sizes = [16, 128], strides = [1, 1]} : vector<16x384xf32> to vector<16x128xf32>
    %298 = arith.addf %296, %297 : vector<16x128xf32>
    %299 = arith.negf %298 : vector<16x128xf32>
    %300 = math.exp %299 : vector<16x128xf32>
    %cst_88 = arith.constant 1.000000e+00 : f32
    %301 = vector.broadcast %cst_88 : f32 to vector<16x128xf32>
    %302 = arith.addf %301, %300 : vector<16x128xf32>
    %303 = arith.divf %301, %302 : vector<16x128xf32>
    %304 = vector.extract_strided_slice %282 {offsets = [0, 256], sizes = [16, 128], strides = [1, 1]} : vector<16x384xf32> to vector<16x128xf32>
    %305 = vector.extract_strided_slice %287 {offsets = [0, 256], sizes = [16, 128], strides = [1, 1]} : vector<16x384xf32> to vector<16x128xf32>
    %306 = arith.mulf %295, %305 : vector<16x128xf32>
    %307 = arith.addf %304, %306 : vector<16x128xf32>
    %308 = math.tanh %307 : vector<16x128xf32>
    %cst_89 = arith.constant 1.000000e+00 : f32
    %309 = vector.broadcast %cst_89 : f32 to vector<16x128xf32>
    %310 = arith.subf %309, %303 : vector<16x128xf32>
    %311 = arith.mulf %310, %308 : vector<16x128xf32>
    %312 = arith.mulf %303, %169 : vector<16x128xf32>
    %313 = arith.addf %311, %312 : vector<16x128xf32>
    %cst_90 = arith.constant dense<0.000000e+00> : vector<24x128xf32>
    %314 = tpu.matmul %5, %313, %cst_90 {dimension_numbers = #tpu.dot_dimension_numbers<[1], [0], [0], [1], [0, 0, 1, 1], [], []>} : vector<24x16xf32>, vector<16x128xf32>, vector<24x128xf32> -> vector<24x128xf32>
    %cst_91 = arith.constant dense<0.000000e+00> : vector<16x128xf32>
    %315 = tpu.matmul %11, %314, %cst_91 {dimension_numbers = #tpu.dot_dimension_numbers<[1], [0], [0], [1], [0, 0, 1, 1], [], []>} : vector<16x24xf32>, vector<24x128xf32>, vector<16x128xf32> -> vector<16x128xf32>
    %c0_92 = arith.constant 0 : index
    %c0_93 = arith.constant 0 : index
    %316 = vector.load %arg31[%c0_92, %c0_93] : memref<128x128xf32, #tpu.memory_space<vmem>>, vector<128x128xf32>
    %cst_94 = arith.constant dense<0.000000e+00> : vector<16x128xf32>
    %317 = tpu.matmul %315, %316, %cst_94 {dimension_numbers = #tpu.dot_dimension_numbers<[1], [0], [0], [1], [0, 0, 1, 1], [], []>} : vector<16x128xf32>, vector<128x128xf32>, vector<16x128xf32> -> vector<16x128xf32>
    %c0_95 = arith.constant 0 : index
    %c0_96 = arith.constant 0 : index
    %318 = vector.load %arg32[%c0_95, %c0_96] : memref<1x128xf32, #tpu.memory_space<vmem>>, vector<1x128xf32>
    %319 = vector.broadcast %318 : vector<1x128xf32> to vector<16x128xf32>
    %320 = arith.addf %317, %319 : vector<16x128xf32>
    %c0_97 = arith.constant 0 : index
    %c0_98 = arith.constant 0 : index
    %321 = vector.load %arg33[%c0_97, %c0_98] : memref<128x128xf32, #tpu.memory_space<vmem>>, vector<128x128xf32>
    %cst_99 = arith.constant dense<0.000000e+00> : vector<16x128xf32>
    %322 = tpu.matmul %313, %321, %cst_99 {dimension_numbers = #tpu.dot_dimension_numbers<[1], [0], [0], [1], [0, 0, 1, 1], [], []>} : vector<16x128xf32>, vector<128x128xf32>, vector<16x128xf32> -> vector<16x128xf32>
    %323 = arith.addf %320, %322 : vector<16x128xf32>
    %cst_100 = arith.constant 0.000000e+00 : f32
    %324 = vector.broadcast %cst_100 : f32 to vector<16x128xf32>
    %325 = arith.maximumf %323, %324 : vector<16x128xf32>
    %c0_101 = arith.constant 0 : index
    %c0_102 = arith.constant 0 : index
    %326 = vector.load %arg34[%c0_101, %c0_102] : memref<1x128xf32, #tpu.memory_space<vmem>>, vector<1x128xf32>
    %327 = vector.broadcast %326 : vector<1x128xf32> to vector<16x128xf32>
    %328 = arith.mulf %325, %327 : vector<16x128xf32>
    %c0_103 = arith.constant 0 : index
    %c0_104 = arith.constant 0 : index
    %329 = vector.load %arg35[%c0_103, %c0_104] : memref<1x128xf32, #tpu.memory_space<vmem>>, vector<1x128xf32>
    %330 = vector.broadcast %329 : vector<1x128xf32> to vector<16x128xf32>
    %331 = arith.addf %328, %330 : vector<16x128xf32>
    %cst_105 = arith.constant dense<0.000000e+00> : vector<8x128xf32>
    %332 = tpu.matmul %17, %331, %cst_105 {dimension_numbers = #tpu.dot_dimension_numbers<[1], [0], [0], [1], [0, 0, 1, 1], [], []>} : vector<8x16xf32>, vector<16x128xf32>, vector<8x128xf32> -> vector<8x128xf32>
    %c0_106 = arith.constant 0 : index
    %c0_107 = arith.constant 0 : index
    %333 = vector.load %arg36[%c0_106, %c0_107] : memref<128x128xf32, #tpu.memory_space<vmem>>, vector<128x128xf32>
    %cst_108 = arith.constant dense<0.000000e+00> : vector<8x128xf32>
    %334 = tpu.matmul %332, %333, %cst_108 {dimension_numbers = #tpu.dot_dimension_numbers<[1], [0], [0], [1], [0, 0, 1, 1], [], []>} : vector<8x128xf32>, vector<128x128xf32>, vector<8x128xf32> -> vector<8x128xf32>
    %c0_109 = arith.constant 0 : index
    %c0_110 = arith.constant 0 : index
    %335 = vector.load %arg37[%c0_109, %c0_110] : memref<1x128xf32, #tpu.memory_space<vmem>>, vector<1x128xf32>
    %336 = vector.broadcast %335 : vector<1x128xf32> to vector<8x128xf32>
    %337 = arith.addf %334, %336 : vector<8x128xf32>
    %cst_111 = arith.constant 0.000000e+00 : f32
    %338 = vector.broadcast %cst_111 : f32 to vector<8x128xf32>
    %339 = arith.maximumf %337, %338 : vector<8x128xf32>
    %c0_112 = arith.constant 0 : index
    %c0_113 = arith.constant 0 : index
    %340 = vector.load %arg38[%c0_112, %c0_113] : memref<1x128xf32, #tpu.memory_space<vmem>>, vector<1x128xf32>
    %341 = vector.broadcast %340 : vector<1x128xf32> to vector<8x128xf32>
    %342 = arith.mulf %339, %341 : vector<8x128xf32>
    %c0_114 = arith.constant 0 : index
    %c0_115 = arith.constant 0 : index
    %343 = vector.load %arg39[%c0_114, %c0_115] : memref<1x128xf32, #tpu.memory_space<vmem>>, vector<1x128xf32>
    %344 = vector.broadcast %343 : vector<1x128xf32> to vector<8x128xf32>
    %345 = arith.addf %342, %344 : vector<8x128xf32>
    %c0_116 = arith.constant 0 : index
    %c0_117 = arith.constant 0 : index
    %346 = vector.load %arg40[%c0_116, %c0_117] : memref<128x128xf32, #tpu.memory_space<vmem>>, vector<128x128xf32>
    %cst_118 = arith.constant dense<0.000000e+00> : vector<8x128xf32>
    %347 = tpu.matmul %345, %346, %cst_118 {dimension_numbers = #tpu.dot_dimension_numbers<[1], [0], [0], [1], [0, 0, 1, 1], [], []>} : vector<8x128xf32>, vector<128x128xf32>, vector<8x128xf32> -> vector<8x128xf32>
    %c0_119 = arith.constant 0 : index
    %c0_120 = arith.constant 0 : index
    %348 = vector.load %arg41[%c0_119, %c0_120] : memref<1x128xf32, #tpu.memory_space<vmem>>, vector<1x128xf32>
    %349 = vector.broadcast %348 : vector<1x128xf32> to vector<8x128xf32>
    %350 = arith.addf %347, %349 : vector<8x128xf32>
    %c0_121 = arith.constant 0 : index
    %c0_122 = arith.constant 0 : index
    %351 = vector.load %arg42[%c0_121, %c0_122] : memref<8x128xf32, #tpu.memory_space<vmem>>, vector<8x128xf32>
    tpu.vector_store %arg42[%c0_121, %c0_122], %350 {strides = array<i32>} : memref<8x128xf32, #tpu.memory_space<vmem>>, vector<8x128xf32>,
    return
  }
}

</mosaic_0001>

<llo_original>
// kernel: tpu_custom_call.1
$region0: #{tpu_custom_call.1}
  #allocation0 [shape = 'u32[]', space=smem, size = 0x4, offset = 0x4, fixed_abs, tag = 'smem constant byte address 0x4 - core index']
  #allocation1 [shape = 'u32[72,128]{1,0:T(1,128)}', space=vmem, size = 0x9000, scoped, tag = 'internal scratch']
  %s0 = inlined_call_operand.smem [shape: u32[43], index: -1, kind: input, shape index: {}]
  %s1 = sld [smem:[%s0]]
  %s2 = scalar_lea.smem %s0, 1
  %s3 = sld [smem:[%s2]]
  %s4 = scalar_lea.smem %s0, 2
  %s5 = sld [smem:[%s4]]
  %s6 = scalar_lea.smem %s0, 3
  %s7 = sld [smem:[%s6]]
  %s8 = scalar_lea.smem %s0, 4
  %s9 = sld [smem:[%s8]]
  %s10 = scalar_lea.smem %s0, 5
  %s11 = sld [smem:[%s10]]
  %s12 = scalar_lea.smem %s0, 6
  %s13 = sld [smem:[%s12]]
  %s14 = scalar_lea.smem %s0, 7
  %s15 = sld [smem:[%s14]]
  %s16 = scalar_lea.smem %s0, 8
  %s17 = sld [smem:[%s16]]
  %s18 = scalar_lea.smem %s0, 9
  %s19 = sld [smem:[%s18]]
  %s20 = scalar_lea.smem %s0, 10
  %s21 = sld [smem:[%s20]]
  %s22 = scalar_lea.smem %s0, 11
  %s23 = sld [smem:[%s22]]
  %s24 = scalar_lea.smem %s0, 12
  %s25 = sld [smem:[%s24]]
  %s26 = scalar_lea.smem %s0, 13
  %s27 = sld [smem:[%s26]]
  %s28 = scalar_lea.smem %s0, 14
  %s29 = sld [smem:[%s28]]
  %s30 = scalar_lea.smem %s0, 15
  %s31 = sld [smem:[%s30]]
  %s32 = scalar_lea.smem %s0, 16
  %s33 = sld [smem:[%s32]]
  %s34 = scalar_lea.smem %s0, 17
  %s35 = sld [smem:[%s34]]
  %s36 = scalar_lea.smem %s0, 18
  %s37 = sld [smem:[%s36]]
  %s38 = scalar_lea.smem %s0, 19
  %s39 = sld [smem:[%s38]]
  %s40 = scalar_lea.smem %s0, 20
  %s41 = sld [smem:[%s40]]
  %s42 = scalar_lea.smem %s0, 21
  %s43 = sld [smem:[%s42]]
  %s44 = scalar_lea.smem %s0, 22
  %s45 = sld [smem:[%s44]]
  %s46 = scalar_lea.smem %s0, 23
  %s47 = sld [smem:[%s46]]
  %s48 = scalar_lea.smem %s0, 24
  %s49 = sld [smem:[%s48]]
  %s50 = scalar_lea.smem %s0, 25
  %s51 = sld [smem:[%s50]]
  %s52 = scalar_lea.smem %s0, 26
  %s53 = sld [smem:[%s52]]
  %s54 = scalar_lea.smem %s0, 27
  %s55 = sld [smem:[%s54]]
  %s56 = scalar_lea.smem %s0, 28
  %s57 = sld [smem:[%s56]]
  %s58 = scalar_lea.smem %s0, 29
  %s59 = sld [smem:[%s58]]
  %s60 = scalar_lea.smem %s0, 30
  %s61 = sld [smem:[%s60]]
  %s62 = scalar_lea.smem %s0, 31
  %s63 = sld [smem:[%s62]]
  %s64 = scalar_lea.smem %s0, 32
  %s65 = sld [smem:[%s64]]
  %s66 = scalar_lea.smem %s0, 33
  %s67 = sld [smem:[%s66]]
  %s68 = scalar_lea.smem %s0, 34
  %s69 = sld [smem:[%s68]]
  %s70 = scalar_lea.smem %s0, 35
  %s71 = sld [smem:[%s70]]
  %s72 = scalar_lea.smem %s0, 36
  %s73 = sld [smem:[%s72]]
  %s74 = scalar_lea.smem %s0, 37
  %s75 = sld [smem:[%s74]]
  %s76 = scalar_lea.smem %s0, 38
  %s77 = sld [smem:[%s76]]
  %s78 = scalar_lea.smem %s0, 39
  %s79 = sld [smem:[%s78]]
  %s80 = scalar_lea.smem %s0, 40
  %s81 = sld [smem:[%s80]]
  %s82 = scalar_lea.smem %s0, 41
  %s83 = sld [smem:[%s82]]
  %s84 = scalar_lea.smem %s0, 42
  %s85 = sld [smem:[%s84]]
  %s86 = sld [smem:[#allocation0]]
  $region274: #{tpu_custom_call.1} parent=0
    _
  %s88 = ssub.s32 1, %s86
  %s89 = scalar_select 0, %s88, %s86
  $region1: #{tpu_custom_call.1} parent=0
    #allocation2 [shape = 'u8[8192]{0}', space=vmem, size = 0x2000, scoped, tag = 'input window, operand 0, single buffered']
    #allocation3 [shape = 's32[1]{0}', space=sflag, size = 0x4, scoped, tag = 'scoped memory for tpu_custom_call.1']
    #allocation4 [shape = 's32[1]{0}', space=sflag, size = 0x4, scoped, tag = 'scoped memory for tpu_custom_call.1']
    #allocation5 [shape = 'u8[512]{0}', space=vmem, size = 0x400, scoped, tag = 'input window, operand 4, single buffered']
    #allocation6 [shape = 's32[1]{0}', space=sflag, size = 0x4, scoped, tag = 'scoped memory for tpu_custom_call.1']
    #allocation7 [shape = 'u8[65536]{0}', space=vmem, size = 0x10000, scoped, tag = 'input window, operand 5, single buffered']
    #allocation8 [shape = 'u8[512]{0}', space=vmem, size = 0x400, scoped, tag = 'input window, operand 6, single buffered']
    #allocation9 [shape = 's32[1]{0}', space=sflag, size = 0x4, scoped, tag = 'scoped memory for tpu_custom_call.1']
    #allocation10 [shape = 'u8[65536]{0}', space=vmem, size = 0x10000, scoped, tag = 'input window, operand 7, single buffered']
    #allocation11 [shape = 'u8[512]{0}', space=vmem, size = 0x400, scoped, tag = 'input window, operand 8, single buffered']
    #allocation12 [shape = 's32[1]{0}', space=sflag, size = 0x4, scoped, tag = 'scoped memory for tpu_custom_call.1']
    #allocation13 [shape = 'u8[1048576]{0}', space=vmem, size = 0x100000, scoped, tag = 'input window, operand 9, single buffered']
    #allocation14 [shape = 'u8[65536]{0}', space=vmem, size = 0x10000, scoped, tag = 'input window, operand 10, single buffered']
    #allocation15 [shape = 's32[1]{0}', space=sflag, size = 0x4, scoped, tag = 'scoped memory for tpu_custom_call.1']
    #allocation16 [shape = 'u8[65536]{0}', space=vmem, size = 0x10000, scoped, tag = 'input window, operand 11, single buffered']
    #allocation17 [shape = 'u8[512]{0}', space=vmem, size = 0x400, scoped, tag = 'input window, operand 12, single buffered']
    #allocation18 [shape = 's32[1]{0}', space=sflag, size = 0x4, scoped, tag = 'scoped memory for tpu_custom_call.1']
    #allocation19 [shape = 'u8[512]{0}', space=vmem, size = 0x400, scoped, tag = 'input window, operand 13, single buffered']
    #allocation20 [shape = 'u8[512]{0}', space=vmem, size = 0x400, scoped, tag = 'input window, operand 14, single buffered']
    #allocation21 [shape = 's32[1]{0}', space=sflag, size = 0x4, scoped, tag = 'scoped memory for tpu_custom_call.1']
    #allocation22 [shape = 'u8[196608]{0}', space=vmem, size = 0x30000, scoped, tag = 'input window, operand 15, single buffered']
    #allocation23 [shape = 'u8[196608]{0}', space=vmem, size = 0x30000, scoped, tag = 'input window, operand 16, single buffered']
    #allocation24 [shape = 's32[1]{0}', space=sflag, size = 0x4, scoped, tag = 'scoped memory for tpu_custom_call.1']
    #allocation25 [shape = 'u8[65536]{0}', space=vmem, size = 0x10000, scoped, tag = 'input window, operand 19, single buffered']
    #allocation26 [shape = 'u8[1048576]{0}', space=vmem, size = 0x100000, scoped, tag = 'input window, operand 21, single buffered']
    #allocation27 [shape = 's32[1]{0}', space=sflag, size = 0x4, scoped, tag = 'scoped memory for tpu_custom_call.1']
    #allocation28 [shape = 'u8[65536]{0}', space=vmem, size = 0x10000, scoped, tag = 'input window, operand 22, single buffered']
    #allocation29 [shape = 'u8[65536]{0}', space=vmem, size = 0x10000, scoped, tag = 'input window, operand 23, single buffered']
    #allocation30 [shape = 's32[1]{0}', space=sflag, size = 0x4, scoped, tag = 'scoped memory for tpu_custom_call.1']
    #allocation31 [shape = 'u8[196608]{0}', space=vmem, size = 0x30000, scoped, tag = 'input window, operand 27, single buffered']
    #allocation32 [shape = 'u8[196608]{0}', space=vmem, size = 0x30000, scoped, tag = 'input window, operand 28, single buffered']
    #allocation33 [shape = 's32[1]{0}', space=sflag, size = 0x4, scoped, tag = 'scoped memory for tpu_custom_call.1']
    #allocation34 [shape = 'u8[65536]{0}', space=vmem, size = 0x10000, scoped, tag = 'input window, operand 31, single buffered']
    #allocation35 [shape = 'u8[65536]{0}', space=vmem, size = 0x10000, scoped, tag = 'input window, operand 33, single buffered']
    #allocation36 [shape = 's32[1]{0}', space=sflag, size = 0x4, scoped, tag = 'scoped memory for tpu_custom_call.1']
    #allocation37 [shape = 'u8[65536]{0}', space=vmem, size = 0x10000, scoped, tag = 'input window, operand 36, single buffered']
    #allocation38 [shape = 'u8[65536]{0}', space=vmem, size = 0x10000, scoped, tag = 'input window, operand 40, single buffered']
    #allocation39 [shape = 's32[1]{0}', space=sflag, size = 0x4, scoped, tag = 'scoped memory for tpu_custom_call.1']
    #allocation40 [shape = 'u8[4096]{0}', space=vmem, size = 0x1000, scoped, tag = 'output window, operand 0, single buffered']
    %90 = vsyncpa [#allocation3], 0
    %91 = vsyncpa [#allocation6], 0
    %92 = vsyncpa [#allocation9], 0
    %93 = vsyncpa [#allocation12], 0
    %94 = vsyncpa [#allocation15], 0
    %95 = vsyncpa [#allocation18], 0
    %96 = vsyncpa [#allocation21], 0
    %97 = vsyncpa [#allocation24], 0
    %98 = vsyncpa [#allocation27], 0
    %99 = vsyncpa [#allocation30], 0
    %100 = vsyncpa [#allocation33], 0
    %101 = vsyncpa [#allocation36], 0
    %102 = vsyncpa [#allocation39], 0
    %103 = vsyncpa [#allocation4], 0
    // Predicated region
    $region2: #{tpu_custom_call.1} parent=1 // pred_check
      _
    $region3: #{tpu_custom_call.1} parent=1 // pred_check_branch
      %105 = sbr.rel (0) target = $region5
    $region4: #{tpu_custom_call.1} parent=1 // pred_region
      %107 = vsyncadd [#allocation3], 0
      %s108 = sshll.u32 %s1, 4
      %s109 = int_to_ptr.hbm [resolvable:$true] %s108
      %s110 = sshll.u32 [#allocation2], 4
      %s111 = int_to_ptr.vmem [resolvable:$true] %s110
      %116 = dma.hbm_to_vmem [thread:$0]  %s109, 256, %s111, [#allocation3], 128, 128, 8
    $region5: #{tpu_custom_call.1} parent=1 // pred_fallthru
      _
    // Predicated region
    $region6: #{tpu_custom_call.1} parent=1 // pred_check
      _
    $region7: #{tpu_custom_call.1} parent=1 // pred_check_branch
      %118 = sbr.rel (0) target = $region9
    $region8: #{tpu_custom_call.1} parent=1 // pred_region
      _
    $region9: #{tpu_custom_call.1} parent=1 // pred_fallthru
      _
    // Predicated region
    $region10: #{tpu_custom_call.1} parent=1 // pred_check
      _
    $region11: #{tpu_custom_call.1} parent=1 // pred_check_branch
      %120 = sbr.rel (0) target = $region13
    $region12: #{tpu_custom_call.1} parent=1 // pred_region
      _
    $region13: #{tpu_custom_call.1} parent=1 // pred_fallthru
      _
    // Predicated region
    $region14: #{tpu_custom_call.1} parent=1 // pred_check
      _
    $region15: #{tpu_custom_call.1} parent=1 // pred_check_branch
      %122 = sbr.rel (0) target = $region17
    $region16: #{tpu_custom_call.1} parent=1 // pred_region
      _
    $region17: #{tpu_custom_call.1} parent=1 // pred_fallthru
      _
    // Predicated region
    $region18: #{tpu_custom_call.1} parent=1 // pred_check
      _
    $region19: #{tpu_custom_call.1} parent=1 // pred_check_branch
      %124 = sbr.rel (0) target = $region21
    $region20: #{tpu_custom_call.1} parent=1 // pred_region
      %126 = vsyncadd [#allocation6], 0
      %s128 = sshll.u32 %s9, 4
      %s129 = int_to_ptr.hbm [resolvable:$true] %s128
      %s130 = sshll.u32 [#allocation5], 4
      %s131 = int_to_ptr.vmem [resolvable:$true] %s130
      %133 = dma.hbm_to_vmem [thread:$0]  %s129, 16, %s131, [#allocation6]
    $region21: #{tpu_custom_call.1} parent=1 // pred_fallthru
      _
    // Predicated region
    $region22: #{tpu_custom_call.1} parent=1 // pred_check
      _
    $region23: #{tpu_custom_call.1} parent=1 // pred_check_branch
      %135 = sbr.rel (0) target = $region25
    $region24: #{tpu_custom_call.1} parent=1 // pred_region
      %137 = vsyncadd [#allocation6], 0
      %s138 = sshll.u32 %s11, 4
      %s139 = int_to_ptr.hbm [resolvable:$true] %s138
      %s140 = sshll.u32 [#allocation7], 4
      %s141 = int_to_ptr.vmem [resolvable:$true] %s140
      %146 = dma.hbm_to_vmem [thread:$0]  %s139, 2048, %s141, [#allocation6], 128, 128, 8
    $region25: #{tpu_custom_call.1} parent=1 // pred_fallthru
      _
    // Predicated region
    $region26: #{tpu_custom_call.1} parent=1 // pred_check
      _
    $region27: #{tpu_custom_call.1} parent=1 // pred_check_branch
      %148 = sbr.rel (0) target = $region29
    $region28: #{tpu_custom_call.1} parent=1 // pred_region
      %150 = vsyncadd [#allocation9], 0
      %s152 = sshll.u32 %s13, 4
      %s153 = int_to_ptr.hbm [resolvable:$true] %s152
      %s154 = sshll.u32 [#allocation8], 4
      %s155 = int_to_ptr.vmem [resolvable:$true] %s154
      %157 = dma.hbm_to_vmem [thread:$0]  %s153, 16, %s155, [#allocation9]
    $region29: #{tpu_custom_call.1} parent=1 // pred_fallthru
      _
    // Predicated region
    $region30: #{tpu_custom_call.1} parent=1 // pred_check
      _
    $region31: #{tpu_custom_call.1} parent=1 // pred_check_branch
      %159 = sbr.rel (0) target = $region33
    $region32: #{tpu_custom_call.1} parent=1 // pred_region
      %161 = vsyncadd [#allocation9], 0
      %s162 = sshll.u32 %s15, 4
      %s163 = int_to_ptr.hbm [resolvable:$true] %s162
      %s164 = sshll.u32 [#allocation10], 4
      %s165 = int_to_ptr.vmem [resolvable:$true] %s164
      %170 = dma.hbm_to_vmem [thread:$0]  %s163, 2048, %s165, [#allocation9], 128, 128, 8
    $region33: #{tpu_custom_call.1} parent=1 // pred_fallthru
      _
    // Predicated region
    $region34: #{tpu_custom_call.1} parent=1 // pred_check
      _
    $region35: #{tpu_custom_call.1} parent=1 // pred_check_branch
      %172 = sbr.rel (0) target = $region37
    $region36: #{tpu_custom_call.1} parent=1 // pred_region
      %174 = vsyncadd [#allocation12], 0
      %s176 = sshll.u32 %s17, 4
      %s177 = int_to_ptr.hbm [resolvable:$true] %s176
      %s178 = sshll.u32 [#allocation11], 4
      %s179 = int_to_ptr.vmem [resolvable:$true] %s178
      %181 = dma.hbm_to_vmem [thread:$0]  %s177, 16, %s179, [#allocation12]
    $region37: #{tpu_custom_call.1} parent=1 // pred_fallthru
      _
    // Predicated region
    $region38: #{tpu_custom_call.1} parent=1 // pred_check
      _
    $region39: #{tpu_custom_call.1} parent=1 // pred_check_branch
      %183 = sbr.rel (0) target = $region41
    $region40: #{tpu_custom_call.1} parent=1 // pred_region
      %185 = vsyncadd [#allocation12], 0
      %s186 = sshll.u32 %s19, 4
      %s187 = int_to_ptr.hbm [resolvable:$true] %s186
      %s188 = sshll.u32 [#allocation13], 4
      %s189 = int_to_ptr.vmem [resolvable:$true] %s188
      %194 = dma.hbm_to_vmem [thread:$0]  %s187, 32768, %s189, [#allocation12], 2048, 2048, 128
    $region41: #{tpu_custom_call.1} parent=1 // pred_fallthru
      _
    // Predicated region
    $region42: #{tpu_custom_call.1} parent=1 // pred_check
      _
    $region43: #{tpu_custom_call.1} parent=1 // pred_check_branch
      %196 = sbr.rel (0) target = $region45
    $region44: #{tpu_custom_call.1} parent=1 // pred_region
      %198 = vsyncadd [#allocation15], 0
      %s199 = sshll.u32 %s21, 4
      %s200 = int_to_ptr.hbm [resolvable:$true] %s199
      %s201 = sshll.u32 [#allocation14], 4
      %s202 = int_to_ptr.vmem [resolvable:$true] %s201
      %207 = dma.hbm_to_vmem [thread:$0]  %s200, 2048, %s202, [#allocation15], 128, 128, 8
    $region45: #{tpu_custom_call.1} parent=1 // pred_fallthru
      _
    // Predicated region
    $region46: #{tpu_custom_call.1} parent=1 // pred_check
      _
    $region47: #{tpu_custom_call.1} parent=1 // pred_check_branch
      %209 = sbr.rel (0) target = $region49
    $region48: #{tpu_custom_call.1} parent=1 // pred_region
      %211 = vsyncadd [#allocation15], 0
      %s212 = sshll.u32 %s23, 4
      %s213 = int_to_ptr.hbm [resolvable:$true] %s212
      %s214 = sshll.u32 [#allocation16], 4
      %s215 = int_to_ptr.vmem [resolvable:$true] %s214
      %220 = dma.hbm_to_vmem [thread:$0]  %s213, 2048, %s215, [#allocation15], 128, 128, 8
    $region49: #{tpu_custom_call.1} parent=1 // pred_fallthru
      _
    // Predicated region
    $region50: #{tpu_custom_call.1} parent=1 // pred_check
      _
    $region51: #{tpu_custom_call.1} parent=1 // pred_check_branch
      %222 = sbr.rel (0) target = $region53
    $region52: #{tpu_custom_call.1} parent=1 // pred_region
      %224 = vsyncadd [#allocation18], 0
      %s226 = sshll.u32 %s25, 4
      %s227 = int_to_ptr.hbm [resolvable:$true] %s226
      %s228 = sshll.u32 [#allocation17], 4
      %s229 = int_to_ptr.vmem [resolvable:$true] %s228
      %231 = dma.hbm_to_vmem [thread:$0]  %s227, 16, %s229, [#allocation18]
    $region53: #{tpu_custom_call.1} parent=1 // pred_fallthru
      _
    // Predicated region
    $region54: #{tpu_custom_call.1} parent=1 // pred_check
      _
    $region55: #{tpu_custom_call.1} parent=1 // pred_check_branch
      %233 = sbr.rel (0) target = $region57
    $region56: #{tpu_custom_call.1} parent=1 // pred_region
      %235 = vsyncadd [#allocation18], 0
      %s237 = sshll.u32 %s27, 4
      %s238 = int_to_ptr.hbm [resolvable:$true] %s237
      %s239 = sshll.u32 [#allocation19], 4
      %s240 = int_to_ptr.vmem [resolvable:$true] %s239
      %242 = dma.hbm_to_vmem [thread:$0]  %s238, 16, %s240, [#allocation18]
    $region57: #{tpu_custom_call.1} parent=1 // pred_fallthru
      _
    // Predicated region
    $region58: #{tpu_custom_call.1} parent=1 // pred_check
      _
    $region59: #{tpu_custom_call.1} parent=1 // pred_check_branch
      %244 = sbr.rel (0) target = $region61
    $region60: #{tpu_custom_call.1} parent=1 // pred_region
      %246 = vsyncadd [#allocation21], 0
      %s248 = sshll.u32 %s29, 4
      %s249 = int_to_ptr.hbm [resolvable:$true] %s248
      %s250 = sshll.u32 [#allocation20], 4
      %s251 = int_to_ptr.vmem [resolvable:$true] %s250
      %253 = dma.hbm_to_vmem [thread:$0]  %s249, 16, %s251, [#allocation21]
    $region61: #{tpu_custom_call.1} parent=1 // pred_fallthru
      _
    // Predicated region
    $region62: #{tpu_custom_call.1} parent=1 // pred_check
      _
    $region63: #{tpu_custom_call.1} parent=1 // pred_check_branch
      %255 = sbr.rel (0) target = $region65
    $region64: #{tpu_custom_call.1} parent=1 // pred_region
      %257 = vsyncadd [#allocation21], 0
      %s258 = sshll.u32 %s31, 4
      %s259 = int_to_ptr.hbm [resolvable:$true] %s258
      %s260 = sshll.u32 [#allocation22], 4
      %s261 = int_to_ptr.vmem [resolvable:$true] %s260
      %266 = dma.hbm_to_vmem [thread:$0]  %s259, 6144, %s261, [#allocation21], 384, 384, 24
    $region65: #{tpu_custom_call.1} parent=1 // pred_fallthru
      _
    // Predicated region
    $region66: #{tpu_custom_call.1} parent=1 // pred_check
      _
    $region67: #{tpu_custom_call.1} parent=1 // pred_check_branch
      %268 = sbr.rel (0) target = $region69
    $region68: #{tpu_custom_call.1} parent=1 // pred_region
      %270 = vsyncadd [#allocation24], 0
      %s271 = sshll.u32 %s33, 4
      %s272 = int_to_ptr.hbm [resolvable:$true] %s271
      %s273 = sshll.u32 [#allocation23], 4
      %s274 = int_to_ptr.vmem [resolvable:$true] %s273
      %279 = dma.hbm_to_vmem [thread:$0]  %s272, 6144, %s274, [#allocation24], 384, 384, 24
    $region69: #{tpu_custom_call.1} parent=1 // pred_fallthru
      _
    // Predicated region
    $region70: #{tpu_custom_call.1} parent=1 // pred_check
      _
    $region71: #{tpu_custom_call.1} parent=1 // pred_check_branch
      %281 = sbr.rel (0) target = $region73
    $region72: #{tpu_custom_call.1} parent=1 // pred_region
      _
    $region73: #{tpu_custom_call.1} parent=1 // pred_fallthru
      _
    // Predicated region
    $region74: #{tpu_custom_call.1} parent=1 // pred_check
      _
    $region75: #{tpu_custom_call.1} parent=1 // pred_check_branch
      %283 = sbr.rel (0) target = $region77
    $region76: #{tpu_custom_call.1} parent=1 // pred_region
      _
    $region77: #{tpu_custom_call.1} parent=1 // pred_fallthru
      _
    // Predicated region
    $region78: #{tpu_custom_call.1} parent=1 // pred_check
      _
    $region79: #{tpu_custom_call.1} parent=1 // pred_check_branch
      %285 = sbr.rel (0) target = $region81
    $region80: #{tpu_custom_call.1} parent=1 // pred_region
      %287 = vsyncadd [#allocation24], 0
      %s288 = sshll.u32 %s39, 4
      %s289 = int_to_ptr.hbm [resolvable:$true] %s288
      %s290 = sshll.u32 [#allocation25], 4
      %s291 = int_to_ptr.vmem [resolvable:$true] %s290
      %296 = dma.hbm_to_vmem [thread:$0]  %s289, 2048, %s291, [#allocation24], 128, 128, 8
    $region81: #{tpu_custom_call.1} parent=1 // pred_fallthru
      _
    // Predicated region
    $region82: #{tpu_custom_call.1} parent=1 // pred_check
      _
    $region83: #{tpu_custom_call.1} parent=1 // pred_check_branch
      %298 = sbr.rel (0) target = $region85
    $region84: #{tpu_custom_call.1} parent=1 // pred_region
      _
    $region85: #{tpu_custom_call.1} parent=1 // pred_fallthru
      _
    // Predicated region
    $region86: #{tpu_custom_call.1} parent=1 // pred_check
      _
    $region87: #{tpu_custom_call.1} parent=1 // pred_check_branch
      %300 = sbr.rel (0) target = $region89
    $region88: #{tpu_custom_call.1} parent=1 // pred_region
      %302 = vsyncadd [#allocation27], 0
      %s303 = sshll.u32 %s43, 4
      %s304 = int_to_ptr.hbm [resolvable:$true] %s303
      %s305 = sshll.u32 [#allocation26], 4
      %s306 = int_to_ptr.vmem [resolvable:$true] %s305
      %311 = dma.hbm_to_vmem [thread:$0]  %s304, 32768, %s306, [#allocation27], 2048, 2048, 128
    $region89: #{tpu_custom_call.1} parent=1 // pred_fallthru
      _
    // Predicated region
    $region90: #{tpu_custom_call.1} parent=1 // pred_check
      _
    $region91: #{tpu_custom_call.1} parent=1 // pred_check_branch
      %313 = sbr.rel (0) target = $region93
    $region92: #{tpu_custom_call.1} parent=1 // pred_region
      %315 = vsyncadd [#allocation27], 0
      %s316 = sshll.u32 %s45, 4
      %s317 = int_to_ptr.hbm [resolvable:$true] %s316
      %s318 = sshll.u32 [#allocation28], 4
      %s319 = int_to_ptr.vmem [resolvable:$true] %s318
      %324 = dma.hbm_to_vmem [thread:$0]  %s317, 2048, %s319, [#allocation27], 128, 128, 8
    $region93: #{tpu_custom_call.1} parent=1 // pred_fallthru
      _
    // Predicated region
    $region94: #{tpu_custom_call.1} parent=1 // pred_check
      _
    $region95: #{tpu_custom_call.1} parent=1 // pred_check_branch
      %326 = sbr.rel (0) target = $region97
    $region96: #{tpu_custom_call.1} parent=1 // pred_region
      %328 = vsyncadd [#allocation30], 0
      %s329 = sshll.u32 %s47, 4
      %s330 = int_to_ptr.hbm [resolvable:$true] %s329
      %s331 = sshll.u32 [#allocation29], 4
      %s332 = int_to_ptr.vmem [resolvable:$true] %s331
      %337 = dma.hbm_to_vmem [thread:$0]  %s330, 2048, %s332, [#allocation30], 128, 128, 8
    $region97: #{tpu_custom_call.1} parent=1 // pred_fallthru
      _
    // Predicated region
    $region98: #{tpu_custom_call.1} parent=1 // pred_check
      _
    $region99: #{tpu_custom_call.1} parent=1 // pred_check_branch
      %339 = sbr.rel (0) target = $region101
    $region100: #{tpu_custom_call.1} parent=1 // pred_region
      _
    $region101: #{tpu_custom_call.1} parent=1 // pred_fallthru
      _
    // Predicated region
    $region102: #{tpu_custom_call.1} parent=1 // pred_check
      _
    $region103: #{tpu_custom_call.1} parent=1 // pred_check_branch
      %341 = sbr.rel (0) target = $region105
    $region104: #{tpu_custom_call.1} parent=1 // pred_region
      _
    $region105: #{tpu_custom_call.1} parent=1 // pred_fallthru
      _
    // Predicated region
    $region106: #{tpu_custom_call.1} parent=1 // pred_check
      _
    $region107: #{tpu_custom_call.1} parent=1 // pred_check_branch
      %343 = sbr.rel (0) target = $region109
    $region108: #{tpu_custom_call.1} parent=1 // pred_region
      _
    $region109: #{tpu_custom_call.1} parent=1 // pred_fallthru
      _
    // Predicated region
    $region110: #{tpu_custom_call.1} parent=1 // pred_check
      _
    $region111: #{tpu_custom_call.1} parent=1 // pred_check_branch
      %345 = sbr.rel (0) target = $region113
    $region112: #{tpu_custom_call.1} parent=1 // pred_region
      %347 = vsyncadd [#allocation30], 0
      %s348 = sshll.u32 %s55, 4
      %s349 = int_to_ptr.hbm [resolvable:$true] %s348
      %s350 = sshll.u32 [#allocation31], 4
      %s351 = int_to_ptr.vmem [resolvable:$true] %s350
      %356 = dma.hbm_to_vmem [thread:$0]  %s349, 6144, %s351, [#allocation30], 384, 384, 24
    $region113: #{tpu_custom_call.1} parent=1 // pred_fallthru
      _
    // Predicated region
    $region114: #{tpu_custom_call.1} parent=1 // pred_check
      _
    $region115: #{tpu_custom_call.1} parent=1 // pred_check_branch
      %358 = sbr.rel (0) target = $region117
    $region116: #{tpu_custom_call.1} parent=1 // pred_region
      %360 = vsyncadd [#allocation33], 0
      %s361 = sshll.u32 %s57, 4
      %s362 = int_to_ptr.hbm [resolvable:$true] %s361
      %s363 = sshll.u32 [#allocation32], 4
      %s364 = int_to_ptr.vmem [resolvable:$true] %s363
      %369 = dma.hbm_to_vmem [thread:$0]  %s362, 6144, %s364, [#allocation33], 384, 384, 24
    $region117: #{tpu_custom_call.1} parent=1 // pred_fallthru
      _
    // Predicated region
    $region118: #{tpu_custom_call.1} parent=1 // pred_check
      _
    $region119: #{tpu_custom_call.1} parent=1 // pred_check_branch
      %371 = sbr.rel (0) target = $region121
    $region120: #{tpu_custom_call.1} parent=1 // pred_region
      _
    $region121: #{tpu_custom_call.1} parent=1 // pred_fallthru
      _
    // Predicated region
    $region122: #{tpu_custom_call.1} parent=1 // pred_check
      _
    $region123: #{tpu_custom_call.1} parent=1 // pred_check_branch
      %373 = sbr.rel (0) target = $region125
    $region124: #{tpu_custom_call.1} parent=1 // pred_region
      _
    $region125: #{tpu_custom_call.1} parent=1 // pred_fallthru
      _
    // Predicated region
    $region126: #{tpu_custom_call.1} parent=1 // pred_check
      _
    $region127: #{tpu_custom_call.1} parent=1 // pred_check_branch
      %375 = sbr.rel (0) target = $region129
    $region128: #{tpu_custom_call.1} parent=1 // pred_region
      %377 = vsyncadd [#allocation33], 0
      %s378 = sshll.u32 %s63, 4
      %s379 = int_to_ptr.hbm [resolvable:$true] %s378
      %s380 = sshll.u32 [#allocation34], 4
      %s381 = int_to_ptr.vmem [resolvable:$true] %s380
      %386 = dma.hbm_to_vmem [thread:$0]  %s379, 2048, %s381, [#allocation33], 128, 128, 8
    $region129: #{tpu_custom_call.1} parent=1 // pred_fallthru
      _
    // Predicated region
    $region130: #{tpu_custom_call.1} parent=1 // pred_check
      _
    $region131: #{tpu_custom_call.1} parent=1 // pred_check_branch
      %388 = sbr.rel (0) target = $region133
    $region132: #{tpu_custom_call.1} parent=1 // pred_region
      _
    $region133: #{tpu_custom_call.1} parent=1 // pred_fallthru
      _
    // Predicated region
    $region134: #{tpu_custom_call.1} parent=1 // pred_check
      _
    $region135: #{tpu_custom_call.1} parent=1 // pred_check_branch
      %390 = sbr.rel (0) target = $region137
    $region136: #{tpu_custom_call.1} parent=1 // pred_region
      %392 = vsyncadd [#allocation36], 0
      %s393 = sshll.u32 %s67, 4
      %s394 = int_to_ptr.hbm [resolvable:$true] %s393
      %s395 = sshll.u32 [#allocation35], 4
      %s396 = int_to_ptr.vmem [resolvable:$true] %s395
      %401 = dma.hbm_to_vmem [thread:$0]  %s394, 2048, %s396, [#allocation36], 128, 128, 8
    $region137: #{tpu_custom_call.1} parent=1 // pred_fallthru
      _
    // Predicated region
    $region138: #{tpu_custom_call.1} parent=1 // pred_check
      _
    $region139: #{tpu_custom_call.1} parent=1 // pred_check_branch
      %403 = sbr.rel (0) target = $region141
    $region140: #{tpu_custom_call.1} parent=1 // pred_region
      _
    $region141: #{tpu_custom_call.1} parent=1 // pred_fallthru
      _
    // Predicated region
    $region142: #{tpu_custom_call.1} parent=1 // pred_check
      _
    $region143: #{tpu_custom_call.1} parent=1 // pred_check_branch
      %405 = sbr.rel (0) target = $region145
    $region144: #{tpu_custom_call.1} parent=1 // pred_region
      _
    $region145: #{tpu_custom_call.1} parent=1 // pred_fallthru
      _
    // Predicated region
    $region146: #{tpu_custom_call.1} parent=1 // pred_check
      _
    $region147: #{tpu_custom_call.1} parent=1 // pred_check_branch
      %407 = sbr.rel (0) target = $region149
    $region148: #{tpu_custom_call.1} parent=1 // pred_region
      %409 = vsyncadd [#allocation36], 0
      %s410 = sshll.u32 %s73, 4
      %s411 = int_to_ptr.hbm [resolvable:$true] %s410
      %s412 = sshll.u32 [#allocation37], 4
      %s413 = int_to_ptr.vmem [resolvable:$true] %s412
      %418 = dma.hbm_to_vmem [thread:$0]  %s411, 2048, %s413, [#allocation36], 128, 128, 8
    $region149: #{tpu_custom_call.1} parent=1 // pred_fallthru
      _
    // Predicated region
    $region150: #{tpu_custom_call.1} parent=1 // pred_check
      _
    $region151: #{tpu_custom_call.1} parent=1 // pred_check_branch
      %420 = sbr.rel (0) target = $region153
    $region152: #{tpu_custom_call.1} parent=1 // pred_region
      _
    $region153: #{tpu_custom_call.1} parent=1 // pred_fallthru
      _
    // Predicated region
    $region154: #{tpu_custom_call.1} parent=1 // pred_check
      _
    $region155: #{tpu_custom_call.1} parent=1 // pred_check_branch
      %422 = sbr.rel (0) target = $region157
    $region156: #{tpu_custom_call.1} parent=1 // pred_region
      _
    $region157: #{tpu_custom_call.1} parent=1 // pred_fallthru
      _
    // Predicated region
    $region158: #{tpu_custom_call.1} parent=1 // pred_check
      _
    $region159: #{tpu_custom_call.1} parent=1 // pred_check_branch
      %424 = sbr.rel (0) target = $region161
    $region160: #{tpu_custom_call.1} parent=1 // pred_region
      _
    $region161: #{tpu_custom_call.1} parent=1 // pred_fallthru
      _
    // Predicated region
    $region162: #{tpu_custom_call.1} parent=1 // pred_check
      _
    $region163: #{tpu_custom_call.1} parent=1 // pred_check_branch
      %426 = sbr.rel (0) target = $region165
    $region164: #{tpu_custom_call.1} parent=1 // pred_region
      %428 = vsyncadd [#allocation39], 0
      %s429 = sshll.u32 %s81, 4
      %s430 = int_to_ptr.hbm [resolvable:$true] %s429
      %s431 = sshll.u32 [#allocation38], 4
      %s432 = int_to_ptr.vmem [resolvable:$true] %s431
      %437 = dma.hbm_to_vmem [thread:$0]  %s430, 2048, %s432, [#allocation39], 128, 128, 8
    $region165: #{tpu_custom_call.1} parent=1 // pred_fallthru
      _
    // Predicated region
    $region166: #{tpu_custom_call.1} parent=1 // pred_check
      _
    $region167: #{tpu_custom_call.1} parent=1 // pred_check_branch
      %439 = sbr.rel (0) target = $region169
    $region168: #{tpu_custom_call.1} parent=1 // pred_region
      _
    $region169: #{tpu_custom_call.1} parent=1 // pred_fallthru
      _
    // Predicated region
    $region170: #{tpu_custom_call.1} parent=1 // pred_check
      _
    $region171: #{tpu_custom_call.1} parent=1 // pred_check_branch
      %441 = sbr.rel (0) target = $region173
    $region172: #{tpu_custom_call.1} parent=1 // pred_region
      %443 = dma.done [#allocation3], 256
    $region173: #{tpu_custom_call.1} parent=1 // pred_fallthru
      _
    // Predicated region
    $region174: #{tpu_custom_call.1} parent=1 // pred_check
      _
    $region175: #{tpu_custom_call.1} parent=1 // pred_check_branch
      %445 = sbr.rel (0) target = $region177
    $region176: #{tpu_custom_call.1} parent=1 // pred_region
      %447 = dma.done [#allocation6], 16
    $region177: #{tpu_custom_call.1} parent=1 // pred_fallthru
      _
    // Predicated region
    $region178: #{tpu_custom_call.1} parent=1 // pred_check
      _
    $region179: #{tpu_custom_call.1} parent=1 // pred_check_branch
      %449 = sbr.rel (0) target = $region181
    $region180: #{tpu_custom_call.1} parent=1 // pred_region
      %451 = dma.done [#allocation6], 2048
    $region181: #{tpu_custom_call.1} parent=1 // pred_fallthru
      _
    // Predicated region
    $region182: #{tpu_custom_call.1} parent=1 // pred_check
      _
    $region183: #{tpu_custom_call.1} parent=1 // pred_check_branch
      %453 = sbr.rel (0) target = $region185
    $region184: #{tpu_custom_call.1} parent=1 // pred_region
      %455 = dma.done [#allocation9], 16
    $region185: #{tpu_custom_call.1} parent=1 // pred_fallthru
      _
    // Predicated region
    $region186: #{tpu_custom_call.1} parent=1 // pred_check
      _
    $region187: #{tpu_custom_call.1} parent=1 // pred_check_branch
      %457 = sbr.rel (0) target = $region189
    $region188: #{tpu_custom_call.1} parent=1 // pred_region
      %459 = dma.done [#allocation9], 2048
    $region189: #{tpu_custom_call.1} parent=1 // pred_fallthru
      _
    // Predicated region
    $region190: #{tpu_custom_call.1} parent=1 // pred_check
      _
    $region191: #{tpu_custom_call.1} parent=1 // pred_check_branch
      %461 = sbr.rel (0) target = $region193
    $region192: #{tpu_custom_call.1} parent=1 // pred_region
      %463 = dma.done [#allocation12], 16
    $region193: #{tpu_custom_call.1} parent=1 // pred_fallthru
      _
    // Predicated region
    $region194: #{tpu_custom_call.1} parent=1 // pred_check
      _
    $region195: #{tpu_custom_call.1} parent=1 // pred_check_branch
      %465 = sbr.rel (0) target = $region197
    $region196: #{tpu_custom_call.1} parent=1 // pred_region
      %467 = dma.done [#allocation12], 32768
    $region197: #{tpu_custom_call.1} parent=1 // pred_fallthru
      _
    // Predicated region
    $region198: #{tpu_custom_call.1} parent=1 // pred_check
      _
    $region199: #{tpu_custom_call.1} parent=1 // pred_check_branch
      %469 = sbr.rel (0) target = $region201
    $region200: #{tpu_custom_call.1} parent=1 // pred_region
      %471 = dma.done [#allocation15], 2048
    $region201: #{tpu_custom_call.1} parent=1 // pred_fallthru
      _
    // Predicated region
    $region202: #{tpu_custom_call.1} parent=1 // pred_check
      _
    $region203: #{tpu_custom_call.1} parent=1 // pred_check_branch
      %473 = sbr.rel (0) target = $region205
    $region204: #{tpu_custom_call.1} parent=1 // pred_region
      %475 = dma.done [#allocation15], 2048
    $region205: #{tpu_custom_call.1} parent=1 // pred_fallthru
      _
    // Predicated region
    $region206: #{tpu_custom_call.1} parent=1 // pred_check
      _
    $region207: #{tpu_custom_call.1} parent=1 // pred_check_branch
      %477 = sbr.rel (0) target = $region209
    $region208: #{tpu_custom_call.1} parent=1 // pred_region
      %479 = dma.done [#allocation18], 16
    $region209: #{tpu_custom_call.1} parent=1 // pred_fallthru
      _
    // Predicated region
    $region210: #{tpu_custom_call.1} parent=1 // pred_check
      _
    $region211: #{tpu_custom_call.1} parent=1 // pred_check_branch
      %481 = sbr.rel (0) target = $region213
    $region212: #{tpu_custom_call.1} parent=1 // pred_region
      %483 = dma.done [#allocation18], 16
    $region213: #{tpu_custom_call.1} parent=1 // pred_fallthru
      _
    // Predicated region
    $region214: #{tpu_custom_call.1} parent=1 // pred_check
      _
    $region215: #{tpu_custom_call.1} parent=1 // pred_check_branch
      %485 = sbr.rel (0) target = $region217
    $region216: #{tpu_custom_call.1} parent=1 // pred_region
      %487 = dma.done [#allocation21], 16
    $region217: #{tpu_custom_call.1} parent=1 // pred_fallthru
      _
    // Predicated region
    $region218: #{tpu_custom_call.1} parent=1 // pred_check
      _
    $region219: #{tpu_custom_call.1} parent=1 // pred_check_branch
      %489 = sbr.rel (0) target = $region221
    $region220: #{tpu_custom_call.1} parent=1 // pred_region
      %491 = dma.done [#allocation21], 6144
    $region221: #{tpu_custom_call.1} parent=1 // pred_fallthru
      _
    // Predicated region
    $region222: #{tpu_custom_call.1} parent=1 // pred_check
      _
    $region223: #{tpu_custom_call.1} parent=1 // pred_check_branch
      %493 = sbr.rel (0) target = $region225
    $region224: #{tpu_custom_call.1} parent=1 // pred_region
      %495 = dma.done [#allocation24], 6144
    $region225: #{tpu_custom_call.1} parent=1 // pred_fallthru
      _
    // Predicated region
    $region226: #{tpu_custom_call.1} parent=1 // pred_check
      _
    $region227: #{tpu_custom_call.1} parent=1 // pred_check_branch
      %497 = sbr.rel (0) target = $region229
    $region228: #{tpu_custom_call.1} parent=1 // pred_region
      %499 = dma.done [#allocation24], 2048
    $region229: #{tpu_custom_call.1} parent=1 // pred_fallthru
      _
    // Predicated region
    $region230: #{tpu_custom_call.1} parent=1 // pred_check
      _
    $region231: #{tpu_custom_call.1} parent=1 // pred_check_branch
      %501 = sbr.rel (0) target = $region233
    $region232: #{tpu_custom_call.1} parent=1 // pred_region
      %503 = dma.done [#allocation27], 32768
    $region233: #{tpu_custom_call.1} parent=1 // pred_fallthru
      _
    // Predicated region
    $region234: #{tpu_custom_call.1} parent=1 // pred_check
      _
    $region235: #{tpu_custom_call.1} parent=1 // pred_check_branch
      %505 = sbr.rel (0) target = $region237
    $region236: #{tpu_custom_call.1} parent=1 // pred_region
      %507 = dma.done [#allocation27], 2048
    $region237: #{tpu_custom_call.1} parent=1 // pred_fallthru
      _
    // Predicated region
    $region238: #{tpu_custom_call.1} parent=1 // pred_check
      _
    $region239: #{tpu_custom_call.1} parent=1 // pred_check_branch
      %509 = sbr.rel (0) target = $region241
    $region240: #{tpu_custom_call.1} parent=1 // pred_region
      %511 = dma.done [#allocation30], 2048
    $region241: #{tpu_custom_call.1} parent=1 // pred_fallthru
      _
    // Predicated region
    $region242: #{tpu_custom_call.1} parent=1 // pred_check
      _
    $region243: #{tpu_custom_call.1} parent=1 // pred_check_branch
      %513 = sbr.rel (0) target = $region245
    $region244: #{tpu_custom_call.1} parent=1 // pred_region
      %515 = dma.done [#allocation30], 6144
    $region245: #{tpu_custom_call.1} parent=1 // pred_fallthru
      _
    // Predicated region
    $region246: #{tpu_custom_call.1} parent=1 // pred_check
      _
    $region247: #{tpu_custom_call.1} parent=1 // pred_check_branch
      %517 = sbr.rel (0) target = $region249
    $region248: #{tpu_custom_call.1} parent=1 // pred_region
      %519 = dma.done [#allocation33], 6144
    $region249: #{tpu_custom_call.1} parent=1 // pred_fallthru
      _
    // Predicated region
    $region250: #{tpu_custom_call.1} parent=1 // pred_check
      _
    $region251: #{tpu_custom_call.1} parent=1 // pred_check_branch
      %521 = sbr.rel (0) target = $region253
    $region252: #{tpu_custom_call.1} parent=1 // pred_region
      %523 = dma.done [#allocation33], 2048
    $region253: #{tpu_custom_call.1} parent=1 // pred_fallthru
      _
    // Predicated region
    $region254: #{tpu_custom_call.1} parent=1 // pred_check
      _
    $region255: #{tpu_custom_call.1} parent=1 // pred_check_branch
      %525 = sbr.rel (0) target = $region257
    $region256: #{tpu_custom_call.1} parent=1 // pred_region
      %527 = dma.done [#allocation36], 2048
    $region257: #{tpu_custom_call.1} parent=1 // pred_fallthru
      _
    // Predicated region
    $region258: #{tpu_custom_call.1} parent=1 // pred_check
      _
    $region259: #{tpu_custom_call.1} parent=1 // pred_check_branch
      %529 = sbr.rel (0) target = $region261
    $region260: #{tpu_custom_call.1} parent=1 // pred_region
      %531 = dma.done [#allocation36], 2048
    $region261: #{tpu_custom_call.1} parent=1 // pred_fallthru
      _
    // Predicated region
    $region262: #{tpu_custom_call.1} parent=1 // pred_check
      _
    $region263: #{tpu_custom_call.1} parent=1 // pred_check_branch
      %533 = sbr.rel (0) target = $region265
    $region264: #{tpu_custom_call.1} parent=1 // pred_region
      %535 = dma.done [#allocation39], 2048
    $region265: #{tpu_custom_call.1} parent=1 // pred_fallthru
      _
    %v536 = vld [vmem:[%s5] sm:$0xff]
    %v537 = vld [vmem:[%s5 + $0x8] sm:$0xff]
    %v538 = vld [vmem:[%s5 + $0x10] sm:$0xff]
    %v539 = vlaneseq
    %v540 = vand.u32 %v539, 127
    %541 = vset.pattern.permute.xlu0 0
    %542 = vperm.xlu0 %541, %v536
    %v543 = vpop.permute.xlu0 %542
    %544 = vset.pattern.permute.xlu0 0
    %545 = vperm.xlu0 %544, %v537
    %v546 = vpop.permute.xlu0 %545
    %547 = vset.pattern.permute.xlu0 0
    %548 = vperm.xlu0 %547, %v538
    %v549 = vpop.permute.xlu0 %548
    %vm550 = vcmp.eq.s32.totalorder %v543, %v540
    %vm551 = vcmp.eq.s32.totalorder %v546, %v540
    %vm552 = vcmp.eq.s32.totalorder %v549, %v540
    %v553 = vsel %vm550, 1, 0
    %v554 = vsel %vm551, 1, 0
    %v555 = vsel %vm552, 1, 0
    %v556 = vcvt.s32.f32 %v553
    %v557 = vcvt.s32.f32 %v554
    %v558 = vcvt.s32.f32 %v555
    %v559 = vld [vmem:[%s7] sm:$0x1]
    %v560 = vlaneseq
    %v561 = vshrl.u32 %v560, 7
    %v562 = vadd.s32 %v561, 8
    %v563 = vperm.slane %v559, 0
    %vm564 = vcmp.eq.s32.totalorder %v563, %v561
    %vm565 = vcmp.eq.s32.totalorder %v563, %v562
    %v566 = vsel %vm564, 1, 0
    %v567 = vsel %vm565, 1, 0
    %v568 = vcvt.s32.f32 %v566
    %v569 = vcvt.s32.f32 %v567
    %v570 = vld [vmem:[#allocation5] sm:$0x1]
    %v571 = vperm.slane %v570, 0
    %vm572 = vcmp.eq.s32.totalorder %v571, %v561
    %v573 = vsel %vm572, 1, 0
    %v574 = vcvt.s32.f32 %v573
    %v575 = vld [vmem:[#allocation2] sm:$0xff]
    %v576 = vld [vmem:[#allocation2 + $0x8] sm:$0xff]
    %v577 = vld [vmem:[#allocation7] sm:$0xff]
    %v578 = vld [vmem:[#allocation7 + $0x8] sm:$0xff]
    %v579 = vld [vmem:[#allocation7 + $0x10] sm:$0xff]
    %v580 = vld [vmem:[#allocation7 + $0x18] sm:$0xff]
    %v581 = vld [vmem:[#allocation7 + $0x20] sm:$0xff]
    %v582 = vld [vmem:[#allocation7 + $0x28] sm:$0xff]
    %v583 = vld [vmem:[#allocation7 + $0x30] sm:$0xff]
    %v584 = vld [vmem:[#allocation7 + $0x38] sm:$0xff]
    %v585 = vld [vmem:[#allocation7 + $0x40] sm:$0xff]
    %v586 = vld [vmem:[#allocation7 + $0x48] sm:$0xff]
    %v587 = vld [vmem:[#allocation7 + $0x50] sm:$0xff]
    %v588 = vld [vmem:[#allocation7 + $0x58] sm:$0xff]
    %v589 = vld [vmem:[#allocation7 + $0x60] sm:$0xff]
    %v590 = vld [vmem:[#allocation7 + $0x68] sm:$0xff]
    %v591 = vld [vmem:[#allocation7 + $0x70] sm:$0xff]
    %v592 = vld [vmem:[#allocation7 + $0x78] sm:$0xff]
    %v593 = vld [vmem:[#allocation8] sm:$0x1]
    %v595 = vperm.slane %v593, 0
    %597 = vmatpush.msra.mxu0 %v592
    %598 = vmatpush.msra.mxu0 %v591
    %599 = vmatpush.msra.mxu0 %v590
    %600 = vmatpush.msra.mxu0 %v589
    %601 = vmatpush.msra.mxu0 %v588
    %602 = vmatpush.msra.mxu0 %v587
    %603 = vmatpush.msra.mxu0 %v586
    %604 = vmatpush.msra.mxu0 %v585
    %605 = vmatpush.msra.mxu0 %v584
    %606 = vmatpush.msra.mxu0 %v583
    %607 = vmatpush.msra.mxu0 %v582
    %608 = vmatpush.msra.mxu0 %v581
    %609 = vmatpush.msra.mxu0 %v580
    %610 = vmatpush.msra.mxu0 %v579
    %611 = vmatpush.msra.mxu0 %v578
    %612 = vmatpush.msra.mxu0 %v577
    %613 = vmatmul.f32.gmra.mxu0 %v575
    %v614 = vpop.f32.mrf.mxu0
    %v615 = vadd.f32 %v595, %v614
    %616 = vmatmul.f32.gmra.mxu0 %v576
    %v617 = vpop.f32.mrf.mxu0
    %v618 = vadd.f32 %v595, %v617
    %619 = vdwg.mxu0
    %v620 = vmax.f32 %v615, 0.0
    %v621 = vmax.f32 %v618, 0.0
    %v622 = vld [vmem:[%s3] sm:$0xff]
    %v623 = vld [vmem:[%s3 + $0x8] sm:$0xff]
    %v624 = vld [vmem:[%s3 + $0x10] sm:$0xff]
    %v625 = vld [vmem:[#allocation10] sm:$0xff]
    %v626 = vld [vmem:[#allocation10 + $0x8] sm:$0xff]
    %v627 = vld [vmem:[#allocation10 + $0x10] sm:$0xff]
    %v628 = vld [vmem:[#allocation10 + $0x18] sm:$0xff]
    %v629 = vld [vmem:[#allocation10 + $0x20] sm:$0xff]
    %v630 = vld [vmem:[#allocation10 + $0x28] sm:$0xff]
    %v631 = vld [vmem:[#allocation10 + $0x30] sm:$0xff]
    %v632 = vld [vmem:[#allocation10 + $0x38] sm:$0xff]
    %v633 = vld [vmem:[#allocation10 + $0x40] sm:$0xff]
    %v634 = vld [vmem:[#allocation10 + $0x48] sm:$0xff]
    %v635 = vld [vmem:[#allocation10 + $0x50] sm:$0xff]
    %v636 = vld [vmem:[#allocation10 + $0x58] sm:$0xff]
    %v637 = vld [vmem:[#allocation10 + $0x60] sm:$0xff]
    %v638 = vld [vmem:[#allocation10 + $0x68] sm:$0xff]
    %v639 = vld [vmem:[#allocation10 + $0x70] sm:$0xff]
    %v640 = vld [vmem:[#allocation10 + $0x78] sm:$0xff]
    %v641 = vld [vmem:[#allocation11] sm:$0x1]
    %v643 = vperm.slane %v641, 0
    %645 = vmatpush.msra.mxu0 %v640
    %646 = vmatpush.msra.mxu0 %v639
    %647 = vmatpush.msra.mxu0 %v638
    %648 = vmatpush.msra.mxu0 %v637
    %649 = vmatpush.msra.mxu0 %v636
    %650 = vmatpush.msra.mxu0 %v635
    %651 = vmatpush.msra.mxu0 %v634
    %652 = vmatpush.msra.mxu0 %v633
    %653 = vmatpush.msra.mxu0 %v632
    %654 = vmatpush.msra.mxu0 %v631
    %655 = vmatpush.msra.mxu0 %v630
    %656 = vmatpush.msra.mxu0 %v629
    %657 = vmatpush.msra.mxu0 %v628
    %658 = vmatpush.msra.mxu0 %v627
    %659 = vmatpush.msra.mxu0 %v626
    %660 = vmatpush.msra.mxu0 %v625
    %661 = vmatmul.f32.gmra.mxu0 %v622
    %v662 = vpop.f32.mrf.mxu0
    %v663 = vadd.f32 %v643, %v662
    %664 = vmatmul.f32.gmra.mxu0 %v623
    %v665 = vpop.f32.mrf.mxu0
    %v666 = vadd.f32 %v643, %v665
    %667 = vmatmul.f32.gmra.mxu0 %v624
    %v668 = vpop.f32.mrf.mxu0
    %v669 = vadd.f32 %v643, %v668
    %670 = vdwg.mxu0
    %v671 = vmax.f32 %v663, 0.0
    %v672 = vmax.f32 %v666, 0.0
    %v673 = vmax.f32 %v669, 0.0
    %v674 = vld [vmem:[#allocation13] sm:$0xff]
    %v675 = vld [vmem:[#allocation13 + $0x8] sm:$0xff]
    %v676 = vld [vmem:[#allocation13 + $0x10] sm:$0xff]
    %v677 = vld [vmem:[#allocation13 + $0x18] sm:$0xff]
    %v678 = vld [vmem:[#allocation13 + $0x20] sm:$0xff]
    %v679 = vld [vmem:[#allocation13 + $0x28] sm:$0xff]
    %v680 = vld [vmem:[#allocation13 + $0x30] sm:$0xff]
    %v681 = vld [vmem:[#allocation13 + $0x38] sm:$0xff]
    %v682 = vld [vmem:[#allocation13 + $0x40] sm:$0xff]
    %v683 = vld [vmem:[#allocation13 + $0x48] sm:$0xff]
    %v684 = vld [vmem:[#allocation13 + $0x50] sm:$0xff]
    %v685 = vld [vmem:[#allocation13 + $0x58] sm:$0xff]
    %v686 = vld [vmem:[#allocation13 + $0x60] sm:$0xff]
    %v687 = vld [vmem:[#allocation13 + $0x68] sm:$0xff]
    %v688 = vld [vmem:[#allocation13 + $0x70] sm:$0xff]
    %v689 = vld [vmem:[#allocation13 + $0x78] sm:$0xff]
    %v690 = vld [vmem:[#allocation13 + $0x80] sm:$0xff]
    %v691 = vld [vmem:[#allocation13 + $0x88] sm:$0xff]
    %v692 = vld [vmem:[#allocation13 + $0x90] sm:$0xff]
    %v693 = vld [vmem:[#allocation13 + $0x98] sm:$0xff]
    %v694 = vld [vmem:[#allocation13 + $0xa0] sm:$0xff]
    %v695 = vld [vmem:[#allocation13 + $0xa8] sm:$0xff]
    %v696 = vld [vmem:[#allocation13 + $0xb0] sm:$0xff]
    %v697 = vld [vmem:[#allocation13 + $0xb8] sm:$0xff]
    %v698 = vld [vmem:[#allocation13 + $0xc0] sm:$0xff]
    %v699 = vld [vmem:[#allocation13 + $0xc8] sm:$0xff]
    %v700 = vld [vmem:[#allocation13 + $0xd0] sm:$0xff]
    %v701 = vld [vmem:[#allocation13 + $0xd8] sm:$0xff]
    %v702 = vld [vmem:[#allocation13 + $0xe0] sm:$0xff]
    %v703 = vld [vmem:[#allocation13 + $0xe8] sm:$0xff]
    %v704 = vld [vmem:[#allocation13 + $0xf0] sm:$0xff]
    %v705 = vld [vmem:[#allocation13 + $0xf8] sm:$0xff]
    %v706 = vld [vmem:[#allocation13 + $0x100] sm:$0xff]
    %v707 = vld [vmem:[#allocation13 + $0x108] sm:$0xff]
    %v708 = vld [vmem:[#allocation13 + $0x110] sm:$0xff]
    %v709 = vld [vmem:[#allocation13 + $0x118] sm:$0xff]
    %v710 = vld [vmem:[#allocation13 + $0x120] sm:$0xff]
    %v711 = vld [vmem:[#allocation13 + $0x128] sm:$0xff]
    %v712 = vld [vmem:[#allocation13 + $0x130] sm:$0xff]
    %v713 = vld [vmem:[#allocation13 + $0x138] sm:$0xff]
    %v714 = vld [vmem:[#allocation13 + $0x140] sm:$0xff]
    %v715 = vld [vmem:[#allocation13 + $0x148] sm:$0xff]
    %v716 = vld [vmem:[#allocation13 + $0x150] sm:$0xff]
    %v717 = vld [vmem:[#allocation13 + $0x158] sm:$0xff]
    %v718 = vld [vmem:[#allocation13 + $0x160] sm:$0xff]
    %v719 = vld [vmem:[#allocation13 + $0x168] sm:$0xff]
    %v720 = vld [vmem:[#allocation13 + $0x170] sm:$0xff]
    %v721 = vld [vmem:[#allocation13 + $0x178] sm:$0xff]
    %v722 = vld [vmem:[#allocation13 + $0x180] sm:$0xff]
    %v723 = vld [vmem:[#allocation13 + $0x188] sm:$0xff]
    %v724 = vld [vmem:[#allocation13 + $0x190] sm:$0xff]
    %v725 = vld [vmem:[#allocation13 + $0x198] sm:$0xff]
    %v726 = vld [vmem:[#allocation13 + $0x1a0] sm:$0xff]
    %v727 = vld [vmem:[#allocation13 + $0x1a8] sm:$0xff]
    %v728 = vld [vmem:[#allocation13 + $0x1b0] sm:$0xff]
    %v729 = vld [vmem:[#allocation13 + $0x1b8] sm:$0xff]
    %v730 = vld [vmem:[#allocation13 + $0x1c0] sm:$0xff]
    %v731 = vld [vmem:[#allocation13 + $0x1c8] sm:$0xff]
    %v732 = vld [vmem:[#allocation13 + $0x1d0] sm:$0xff]
    %v733 = vld [vmem:[#allocation13 + $0x1d8] sm:$0xff]
    %v734 = vld [vmem:[#allocation13 + $0x1e0] sm:$0xff]
    %v735 = vld [vmem:[#allocation13 + $0x1e8] sm:$0xff]
    %v736 = vld [vmem:[#allocation13 + $0x1f0] sm:$0xff]
    %v737 = vld [vmem:[#allocation13 + $0x1f8] sm:$0xff]
    %v738 = vld [vmem:[#allocation13 + $0x200] sm:$0xff]
    %v739 = vld [vmem:[#allocation13 + $0x208] sm:$0xff]
    %v740 = vld [vmem:[#allocation13 + $0x210] sm:$0xff]
    %v741 = vld [vmem:[#allocation13 + $0x218] sm:$0xff]
    %v742 = vld [vmem:[#allocation13 + $0x220] sm:$0xff]
    %v743 = vld [vmem:[#allocation13 + $0x228] sm:$0xff]
    %v744 = vld [vmem:[#allocation13 + $0x230] sm:$0xff]
    %v745 = vld [vmem:[#allocation13 + $0x238] sm:$0xff]
    %v746 = vld [vmem:[#allocation13 + $0x240] sm:$0xff]
    %v747 = vld [vmem:[#allocation13 + $0x248] sm:$0xff]
    %v748 = vld [vmem:[#allocation13 + $0x250] sm:$0xff]
    %v749 = vld [vmem:[#allocation13 + $0x258] sm:$0xff]
    %v750 = vld [vmem:[#allocation13 + $0x260] sm:$0xff]
    %v751 = vld [vmem:[#allocation13 + $0x268] sm:$0xff]
    %v752 = vld [vmem:[#allocation13 + $0x270] sm:$0xff]
    %v753 = vld [vmem:[#allocation13 + $0x278] sm:$0xff]
    %v754 = vld [vmem:[#allocation13 + $0x280] sm:$0xff]
    %v755 = vld [vmem:[#allocation13 + $0x288] sm:$0xff]
    %v756 = vld [vmem:[#allocation13 + $0x290] sm:$0xff]
    %v757 = vld [vmem:[#allocation13 + $0x298] sm:$0xff]
    %v758 = vld [vmem:[#allocation13 + $0x2a0] sm:$0xff]
    %v759 = vld [vmem:[#allocation13 + $0x2a8] sm:$0xff]
    %v760 = vld [vmem:[#allocation13 + $0x2b0] sm:$0xff]
    %v761 = vld [vmem:[#allocation13 + $0x2b8] sm:$0xff]
    %v762 = vld [vmem:[#allocation13 + $0x2c0] sm:$0xff]
    %v763 = vld [vmem:[#allocation13 + $0x2c8] sm:$0xff]
    %v764 = vld [vmem:[#allocation13 + $0x2d0] sm:$0xff]
    %v765 = vld [vmem:[#allocation13 + $0x2d8] sm:$0xff]
    %v766 = vld [vmem:[#allocation13 + $0x2e0] sm:$0xff]
    %v767 = vld [vmem:[#allocation13 + $0x2e8] sm:$0xff]
    %v768 = vld [vmem:[#allocation13 + $0x2f0] sm:$0xff]
    %v769 = vld [vmem:[#allocation13 + $0x2f8] sm:$0xff]
    %v770 = vld [vmem:[#allocation13 + $0x300] sm:$0xff]
    %v771 = vld [vmem:[#allocation13 + $0x308] sm:$0xff]
    %v772 = vld [vmem:[#allocation13 + $0x310] sm:$0xff]
    %v773 = vld [vmem:[#allocation13 + $0x318] sm:$0xff]
    %v774 = vld [vmem:[#allocation13 + $0x320] sm:$0xff]
    %v775 = vld [vmem:[#allocation13 + $0x328] sm:$0xff]
    %v776 = vld [vmem:[#allocation13 + $0x330] sm:$0xff]
    %v777 = vld [vmem:[#allocation13 + $0x338] sm:$0xff]
    %v778 = vld [vmem:[#allocation13 + $0x340] sm:$0xff]
    %v779 = vld [vmem:[#allocation13 + $0x348] sm:$0xff]
    %v780 = vld [vmem:[#allocation13 + $0x350] sm:$0xff]
    %v781 = vld [vmem:[#allocation13 + $0x358] sm:$0xff]
    %v782 = vld [vmem:[#allocation13 + $0x360] sm:$0xff]
    %v783 = vld [vmem:[#allocation13 + $0x368] sm:$0xff]
    %v784 = vld [vmem:[#allocation13 + $0x370] sm:$0xff]
    %v785 = vld [vmem:[#allocation13 + $0x378] sm:$0xff]
    %v786 = vld [vmem:[#allocation13 + $0x380] sm:$0xff]
    %v787 = vld [vmem:[#allocation13 + $0x388] sm:$0xff]
    %v788 = vld [vmem:[#allocation13 + $0x390] sm:$0xff]
    %v789 = vld [vmem:[#allocation13 + $0x398] sm:$0xff]
    %v790 = vld [vmem:[#allocation13 + $0x3a0] sm:$0xff]
    %v791 = vld [vmem:[#allocation13 + $0x3a8] sm:$0xff]
    %v792 = vld [vmem:[#allocation13 + $0x3b0] sm:$0xff]
    %v793 = vld [vmem:[#allocation13 + $0x3b8] sm:$0xff]
    %v794 = vld [vmem:[#allocation13 + $0x3c0] sm:$0xff]
    %v795 = vld [vmem:[#allocation13 + $0x3c8] sm:$0xff]
    %v796 = vld [vmem:[#allocation13 + $0x3d0] sm:$0xff]
    %v797 = vld [vmem:[#allocation13 + $0x3d8] sm:$0xff]
    %v798 = vld [vmem:[#allocation13 + $0x3e0] sm:$0xff]
    %v799 = vld [vmem:[#allocation13 + $0x3e8] sm:$0xff]
    %v800 = vld [vmem:[#allocation13 + $0x3f0] sm:$0xff]
    %v801 = vld [vmem:[#allocation13 + $0x3f8] sm:$0xff]
    %v802 = vld [vmem:[#allocation13 + $0x400] sm:$0xff]
    %v803 = vld [vmem:[#allocation13 + $0x408] sm:$0xff]
    %v804 = vld [vmem:[#allocation13 + $0x410] sm:$0xff]
    %v805 = vld [vmem:[#allocation13 + $0x418] sm:$0xff]
    %v806 = vld [vmem:[#allocation13 + $0x420] sm:$0xff]
    %v807 = vld [vmem:[#allocation13 + $0x428] sm:$0xff]
    %v808 = vld [vmem:[#allocation13 + $0x430] sm:$0xff]
    %v809 = vld [vmem:[#allocation13 + $0x438] sm:$0xff]
    %v810 = vld [vmem:[#allocation13 + $0x440] sm:$0xff]
    %v811 = vld [vmem:[#allocation13 + $0x448] sm:$0xff]
    %v812 = vld [vmem:[#allocation13 + $0x450] sm:$0xff]
    %v813 = vld [vmem:[#allocation13 + $0x458] sm:$0xff]
    %v814 = vld [vmem:[#allocation13 + $0x460] sm:$0xff]
    %v815 = vld [vmem:[#allocation13 + $0x468] sm:$0xff]
    %v816 = vld [vmem:[#allocation13 + $0x470] sm:$0xff]
    %v817 = vld [vmem:[#allocation13 + $0x478] sm:$0xff]
    %v818 = vld [vmem:[#allocation13 + $0x480] sm:$0xff]
    %v819 = vld [vmem:[#allocation13 + $0x488] sm:$0xff]
    %v820 = vld [vmem:[#allocation13 + $0x490] sm:$0xff]
    %v821 = vld [vmem:[#allocation13 + $0x498] sm:$0xff]
    %v822 = vld [vmem:[#allocation13 + $0x4a0] sm:$0xff]
    %v823 = vld [vmem:[#allocation13 + $0x4a8] sm:$0xff]
    %v824 = vld [vmem:[#allocation13 + $0x4b0] sm:$0xff]
    %v825 = vld [vmem:[#allocation13 + $0x4b8] sm:$0xff]
    %v826 = vld [vmem:[#allocation13 + $0x4c0] sm:$0xff]
    %v827 = vld [vmem:[#allocation13 + $0x4c8] sm:$0xff]
    %v828 = vld [vmem:[#allocation13 + $0x4d0] sm:$0xff]
    %v829 = vld [vmem:[#allocation13 + $0x4d8] sm:$0xff]
    %v830 = vld [vmem:[#allocation13 + $0x4e0] sm:$0xff]
    %v831 = vld [vmem:[#allocation13 + $0x4e8] sm:$0xff]
    %v832 = vld [vmem:[#allocation13 + $0x4f0] sm:$0xff]
    %v833 = vld [vmem:[#allocation13 + $0x4f8] sm:$0xff]
    %v834 = vld [vmem:[#allocation13 + $0x500] sm:$0xff]
    %v835 = vld [vmem:[#allocation13 + $0x508] sm:$0xff]
    %v836 = vld [vmem:[#allocation13 + $0x510] sm:$0xff]
    %v837 = vld [vmem:[#allocation13 + $0x518] sm:$0xff]
    %v838 = vld [vmem:[#allocation13 + $0x520] sm:$0xff]
    %v839 = vld [vmem:[#allocation13 + $0x528] sm:$0xff]
    %v840 = vld [vmem:[#allocation13 + $0x530] sm:$0xff]
    %v841 = vld [vmem:[#allocation13 + $0x538] sm:$0xff]
    %v842 = vld [vmem:[#allocation13 + $0x540] sm:$0xff]
    %v843 = vld [vmem:[#allocation13 + $0x548] sm:$0xff]
    %v844 = vld [vmem:[#allocation13 + $0x550] sm:$0xff]
    %v845 = vld [vmem:[#allocation13 + $0x558] sm:$0xff]
    %v846 = vld [vmem:[#allocation13 + $0x560] sm:$0xff]
    %v847 = vld [vmem:[#allocation13 + $0x568] sm:$0xff]
    %v848 = vld [vmem:[#allocation13 + $0x570] sm:$0xff]
    %v849 = vld [vmem:[#allocation13 + $0x578] sm:$0xff]
    %v850 = vld [vmem:[#allocation13 + $0x580] sm:$0xff]
    %v851 = vld [vmem:[#allocation13 + $0x588] sm:$0xff]
    %v852 = vld [vmem:[#allocation13 + $0x590] sm:$0xff]
    %v853 = vld [vmem:[#allocation13 + $0x598] sm:$0xff]
    %v854 = vld [vmem:[#allocation13 + $0x5a0] sm:$0xff]
    %v855 = vld [vmem:[#allocation13 + $0x5a8] sm:$0xff]
    %v856 = vld [vmem:[#allocation13 + $0x5b0] sm:$0xff]
    %v857 = vld [vmem:[#allocation13 + $0x5b8] sm:$0xff]
    %v858 = vld [vmem:[#allocation13 + $0x5c0] sm:$0xff]
    %v859 = vld [vmem:[#allocation13 + $0x5c8] sm:$0xff]
    %v860 = vld [vmem:[#allocation13 + $0x5d0] sm:$0xff]
    %v861 = vld [vmem:[#allocation13 + $0x5d8] sm:$0xff]
    %v862 = vld [vmem:[#allocation13 + $0x5e0] sm:$0xff]
    %v863 = vld [vmem:[#allocation13 + $0x5e8] sm:$0xff]
    %v864 = vld [vmem:[#allocation13 + $0x5f0] sm:$0xff]
    %v865 = vld [vmem:[#allocation13 + $0x5f8] sm:$0xff]
    %v866 = vld [vmem:[#allocation13 + $0x600] sm:$0xff]
    %v867 = vld [vmem:[#allocation13 + $0x608] sm:$0xff]
    %v868 = vld [vmem:[#allocation13 + $0x610] sm:$0xff]
    %v869 = vld [vmem:[#allocation13 + $0x618] sm:$0xff]
    %v870 = vld [vmem:[#allocation13 + $0x620] sm:$0xff]
    %v871 = vld [vmem:[#allocation13 + $0x628] sm:$0xff]
    %v872 = vld [vmem:[#allocation13 + $0x630] sm:$0xff]
    %v873 = vld [vmem:[#allocation13 + $0x638] sm:$0xff]
    %v874 = vld [vmem:[#allocation13 + $0x640] sm:$0xff]
    %v875 = vld [vmem:[#allocation13 + $0x648] sm:$0xff]
    %v876 = vld [vmem:[#allocation13 + $0x650] sm:$0xff]
    %v877 = vld [vmem:[#allocation13 + $0x658] sm:$0xff]
    %v878 = vld [vmem:[#allocation13 + $0x660] sm:$0xff]
    %v879 = vld [vmem:[#allocation13 + $0x668] sm:$0xff]
    %v880 = vld [vmem:[#allocation13 + $0x670] sm:$0xff]
    %v881 = vld [vmem:[#allocation13 + $0x678] sm:$0xff]
    %v882 = vld [vmem:[#allocation13 + $0x680] sm:$0xff]
    %v883 = vld [vmem:[#allocation13 + $0x688] sm:$0xff]
    %v884 = vld [vmem:[#allocation13 + $0x690] sm:$0xff]
    %v885 = vld [vmem:[#allocation13 + $0x698] sm:$0xff]
    %v886 = vld [vmem:[#allocation13 + $0x6a0] sm:$0xff]
    %v887 = vld [vmem:[#allocation13 + $0x6a8] sm:$0xff]
    %v888 = vld [vmem:[#allocation13 + $0x6b0] sm:$0xff]
    %v889 = vld [vmem:[#allocation13 + $0x6b8] sm:$0xff]
    %v890 = vld [vmem:[#allocation13 + $0x6c0] sm:$0xff]
    %v891 = vld [vmem:[#allocation13 + $0x6c8] sm:$0xff]
    %v892 = vld [vmem:[#allocation13 + $0x6d0] sm:$0xff]
    %v893 = vld [vmem:[#allocation13 + $0x6d8] sm:$0xff]
    %v894 = vld [vmem:[#allocation13 + $0x6e0] sm:$0xff]
    %v895 = vld [vmem:[#allocation13 + $0x6e8] sm:$0xff]
    %v896 = vld [vmem:[#allocation13 + $0x6f0] sm:$0xff]
    %v897 = vld [vmem:[#allocation13 + $0x6f8] sm:$0xff]
    %v898 = vld [vmem:[#allocation13 + $0x700] sm:$0xff]
    %v899 = vld [vmem:[#allocation13 + $0x708] sm:$0xff]
    %v900 = vld [vmem:[#allocation13 + $0x710] sm:$0xff]
    %v901 = vld [vmem:[#allocation13 + $0x718] sm:$0xff]
    %v902 = vld [vmem:[#allocation13 + $0x720] sm:$0xff]
    %v903 = vld [vmem:[#allocation13 + $0x728] sm:$0xff]
    %v904 = vld [vmem:[#allocation13 + $0x730] sm:$0xff]
    %v905 = vld [vmem:[#allocation13 + $0x738] sm:$0xff]
    %v906 = vld [vmem:[#allocation13 + $0x740] sm:$0xff]
    %v907 = vld [vmem:[#allocation13 + $0x748] sm:$0xff]
    %v908 = vld [vmem:[#allocation13 + $0x750] sm:$0xff]
    %v909 = vld [vmem:[#allocation13 + $0x758] sm:$0xff]
    %v910 = vld [vmem:[#allocation13 + $0x760] sm:$0xff]
    %v911 = vld [vmem:[#allocation13 + $0x768] sm:$0xff]
    %v912 = vld [vmem:[#allocation13 + $0x770] sm:$0xff]
    %v913 = vld [vmem:[#allocation13 + $0x778] sm:$0xff]
    %v914 = vld [vmem:[#allocation13 + $0x780] sm:$0xff]
    %v915 = vld [vmem:[#allocation13 + $0x788] sm:$0xff]
    %v916 = vld [vmem:[#allocation13 + $0x790] sm:$0xff]
    %v917 = vld [vmem:[#allocation13 + $0x798] sm:$0xff]
    %v918 = vld [vmem:[#allocation13 + $0x7a0] sm:$0xff]
    %v919 = vld [vmem:[#allocation13 + $0x7a8] sm:$0xff]
    %v920 = vld [vmem:[#allocation13 + $0x7b0] sm:$0xff]
    %v921 = vld [vmem:[#allocation13 + $0x7b8] sm:$0xff]
    %v922 = vld [vmem:[#allocation13 + $0x7c0] sm:$0xff]
    %v923 = vld [vmem:[#allocation13 + $0x7c8] sm:$0xff]
    %v924 = vld [vmem:[#allocation13 + $0x7d0] sm:$0xff]
    %v925 = vld [vmem:[#allocation13 + $0x7d8] sm:$0xff]
    %v926 = vld [vmem:[#allocation13 + $0x7e0] sm:$0xff]
    %v927 = vld [vmem:[#allocation13 + $0x7e8] sm:$0xff]
    %v928 = vld [vmem:[#allocation13 + $0x7f0] sm:$0xff]
    %v929 = vld [vmem:[#allocation13 + $0x7f8] sm:$0xff]
    %930 = vmatpush.msra.mxu0 %v914
    %931 = vmatpush.msra.mxu0 %v898
    %932 = vmatpush.msra.mxu0 %v882
    %933 = vmatpush.msra.mxu0 %v866
    %934 = vmatpush.msra.mxu0 %v850
    %935 = vmatpush.msra.mxu0 %v834
    %936 = vmatpush.msra.mxu0 %v818
    %937 = vmatpush.msra.mxu0 %v802
    %938 = vmatpush.msra.mxu0 %v786
    %939 = vmatpush.msra.mxu0 %v770
    %940 = vmatpush.msra.mxu0 %v754
    %941 = vmatpush.msra.mxu0 %v738
    %942 = vmatpush.msra.mxu0 %v722
    %943 = vmatpush.msra.mxu0 %v706
    %944 = vmatpush.msra.mxu0 %v690
    %945 = vmatpush.msra.mxu0 %v674
    %946 = vmatmul.f32.gmra.mxu0 %v671
    %v947 = vpop.f32.mrf.mxu0
    %v948 = vadd.f32 0.0, %v947
    %949 = vmatmul.f32.gmra.mxu0 %v672
    %v950 = vpop.f32.mrf.mxu0
    %v951 = vadd.f32 0.0, %v950
    %952 = vmatmul.f32.gmra.mxu0 %v673
    %v953 = vpop.f32.mrf.mxu0
    %v954 = vadd.f32 0.0, %v953
    %955 = vdwg.mxu0
    %956 = vmatpush.msra.mxu0 %v915
    %957 = vmatpush.msra.mxu0 %v899
    %958 = vmatpush.msra.mxu0 %v883
    %959 = vmatpush.msra.mxu0 %v867
    %960 = vmatpush.msra.mxu0 %v851
    %961 = vmatpush.msra.mxu0 %v835
    %962 = vmatpush.msra.mxu0 %v819
    %963 = vmatpush.msra.mxu0 %v803
    %964 = vmatpush.msra.mxu0 %v787
    %965 = vmatpush.msra.mxu0 %v771
    %966 = vmatpush.msra.mxu0 %v755
    %967 = vmatpush.msra.mxu0 %v739
    %968 = vmatpush.msra.mxu0 %v723
    %969 = vmatpush.msra.mxu0 %v707
    %970 = vmatpush.msra.mxu0 %v691
    %971 = vmatpush.msra.mxu0 %v675
    %972 = vmatmul.f32.gmra.mxu0 %v671
    %v973 = vpop.f32.mrf.mxu0
    %v974 = vadd.f32 0.0, %v973
    %975 = vmatmul.f32.gmra.mxu0 %v672
    %v976 = vpop.f32.mrf.mxu0
    %v977 = vadd.f32 0.0, %v976
    %978 = vmatmul.f32.gmra.mxu0 %v673
    %v979 = vpop.f32.mrf.mxu0
    %v980 = vadd.f32 0.0, %v979
    %981 = vdwg.mxu0
    %982 = vmatpush.msra.mxu0 %v916
    %983 = vmatpush.msra.mxu0 %v900
    %984 = vmatpush.msra.mxu0 %v884
    %985 = vmatpush.msra.mxu0 %v868
    %986 = vmatpush.msra.mxu0 %v852
    %987 = vmatpush.msra.mxu0 %v836
    %988 = vmatpush.msra.mxu0 %v820
    %989 = vmatpush.msra.mxu0 %v804
    %990 = vmatpush.msra.mxu0 %v788
    %991 = vmatpush.msra.mxu0 %v772
    %992 = vmatpush.msra.mxu0 %v756
    %993 = vmatpush.msra.mxu0 %v740
    %994 = vmatpush.msra.mxu0 %v724
    %995 = vmatpush.msra.mxu0 %v708
    %996 = vmatpush.msra.mxu0 %v692
    %997 = vmatpush.msra.mxu0 %v676
    %998 = vmatmul.f32.gmra.mxu0 %v671
    %v999 = vpop.f32.mrf.mxu0
    %v1000 = vadd.f32 0.0, %v999
    %1001 = vmatmul.f32.gmra.mxu0 %v672
    %v1002 = vpop.f32.mrf.mxu0
    %v1003 = vadd.f32 0.0, %v1002
    %1004 = vmatmul.f32.gmra.mxu0 %v673
    %v1005 = vpop.f32.mrf.mxu0
    %v1006 = vadd.f32 0.0, %v1005
    %1007 = vdwg.mxu0
    %1008 = vmatpush.msra.mxu0 %v917
    %1009 = vmatpush.msra.mxu0 %v901
    %1010 = vmatpush.msra.mxu0 %v885
    %1011 = vmatpush.msra.mxu0 %v869
    %1012 = vmatpush.msra.mxu0 %v853
    %1013 = vmatpush.msra.mxu0 %v837
    %1014 = vmatpush.msra.mxu0 %v821
    %1015 = vmatpush.msra.mxu0 %v805
    %1016 = vmatpush.msra.mxu0 %v789
    %1017 = vmatpush.msra.mxu0 %v773
    %1018 = vmatpush.msra.mxu0 %v757
    %1019 = vmatpush.msra.mxu0 %v741
    %1020 = vmatpush.msra.mxu0 %v725
    %1021 = vmatpush.msra.mxu0 %v709
    %1022 = vmatpush.msra.mxu0 %v693
    %1023 = vmatpush.msra.mxu0 %v677
    %1024 = vmatmul.f32.gmra.mxu0 %v671
    %v1025 = vpop.f32.mrf.mxu0
    %v1026 = vadd.f32 0.0, %v1025
    %1027 = vmatmul.f32.gmra.mxu0 %v672
    %v1028 = vpop.f32.mrf.mxu0
    %v1029 = vadd.f32 0.0, %v1028
    %1030 = vmatmul.f32.gmra.mxu0 %v673
    %v1031 = vpop.f32.mrf.mxu0
    %v1032 = vadd.f32 0.0, %v1031
    %1033 = vdwg.mxu0
    %1034 = vmatpush.msra.mxu0 %v918
    %1035 = vmatpush.msra.mxu0 %v902
    %1036 = vmatpush.msra.mxu0 %v886
    %1037 = vmatpush.msra.mxu0 %v870
    %1038 = vmatpush.msra.mxu0 %v854
    %1039 = vmatpush.msra.mxu0 %v838
    %1040 = vmatpush.msra.mxu0 %v822
    %1041 = vmatpush.msra.mxu0 %v806
    %1042 = vmatpush.msra.mxu0 %v790
    %1043 = vmatpush.msra.mxu0 %v774
    %1044 = vmatpush.msra.mxu0 %v758
    %1045 = vmatpush.msra.mxu0 %v742
    %1046 = vmatpush.msra.mxu0 %v726
    %1047 = vmatpush.msra.mxu0 %v710
    %1048 = vmatpush.msra.mxu0 %v694
    %1049 = vmatpush.msra.mxu0 %v678
    %1050 = vmatmul.f32.gmra.mxu0 %v671
    %v1051 = vpop.f32.mrf.mxu0
    %v1052 = vadd.f32 0.0, %v1051
    %1053 = vmatmul.f32.gmra.mxu0 %v672
    %v1054 = vpop.f32.mrf.mxu0
    %v1055 = vadd.f32 0.0, %v1054
    %1056 = vmatmul.f32.gmra.mxu0 %v673
    %v1057 = vpop.f32.mrf.mxu0
    %v1058 = vadd.f32 0.0, %v1057
    %1059 = vdwg.mxu0
    %1060 = vmatpush.msra.mxu0 %v919
    %1061 = vmatpush.msra.mxu0 %v903
    %1062 = vmatpush.msra.mxu0 %v887
    %1063 = vmatpush.msra.mxu0 %v871
    %1064 = vmatpush.msra.mxu0 %v855
    %1065 = vmatpush.msra.mxu0 %v839
    %1066 = vmatpush.msra.mxu0 %v823
    %1067 = vmatpush.msra.mxu0 %v807
    %1068 = vmatpush.msra.mxu0 %v791
    %1069 = vmatpush.msra.mxu0 %v775
    %1070 = vmatpush.msra.mxu0 %v759
    %1071 = vmatpush.msra.mxu0 %v743
    %1072 = vmatpush.msra.mxu0 %v727
    %1073 = vmatpush.msra.mxu0 %v711
    %1074 = vmatpush.msra.mxu0 %v695
    %1075 = vmatpush.msra.mxu0 %v679
    %1076 = vmatmul.f32.gmra.mxu0 %v671
    %v1077 = vpop.f32.mrf.mxu0
    %v1078 = vadd.f32 0.0, %v1077
    %1079 = vmatmul.f32.gmra.mxu0 %v672
    %v1080 = vpop.f32.mrf.mxu0
    %v1081 = vadd.f32 0.0, %v1080
    %1082 = vmatmul.f32.gmra.mxu0 %v673
    %v1083 = vpop.f32.mrf.mxu0
    %v1084 = vadd.f32 0.0, %v1083
    %1085 = vdwg.mxu0
    %1086 = vmatpush.msra.mxu0 %v920
    %1087 = vmatpush.msra.mxu0 %v904
    %1088 = vmatpush.msra.mxu0 %v888
    %1089 = vmatpush.msra.mxu0 %v872
    %1090 = vmatpush.msra.mxu0 %v856
    %1091 = vmatpush.msra.mxu0 %v840
    %1092 = vmatpush.msra.mxu0 %v824
    %1093 = vmatpush.msra.mxu0 %v808
    %1094 = vmatpush.msra.mxu0 %v792
    %1095 = vmatpush.msra.mxu0 %v776
    %1096 = vmatpush.msra.mxu0 %v760
    %1097 = vmatpush.msra.mxu0 %v744
    %1098 = vmatpush.msra.mxu0 %v728
    %1099 = vmatpush.msra.mxu0 %v712
    %1100 = vmatpush.msra.mxu0 %v696
    %1101 = vmatpush.msra.mxu0 %v680
    %1102 = vmatmul.f32.gmra.mxu0 %v671
    %v1103 = vpop.f32.mrf.mxu0
    %v1104 = vadd.f32 0.0, %v1103
    %1105 = vmatmul.f32.gmra.mxu0 %v672
    %v1106 = vpop.f32.mrf.mxu0
    %v1107 = vadd.f32 0.0, %v1106
    %1108 = vmatmul.f32.gmra.mxu0 %v673
    %v1109 = vpop.f32.mrf.mxu0
    %v1110 = vadd.f32 0.0, %v1109
    %1111 = vdwg.mxu0
    %1112 = vmatpush.msra.mxu0 %v921
    %1113 = vmatpush.msra.mxu0 %v905
    %1114 = vmatpush.msra.mxu0 %v889
    %1115 = vmatpush.msra.mxu0 %v873
    %1116 = vmatpush.msra.mxu0 %v857
    %1117 = vmatpush.msra.mxu0 %v841
    %1118 = vmatpush.msra.mxu0 %v825
    %1119 = vmatpush.msra.mxu0 %v809
    %1120 = vmatpush.msra.mxu0 %v793
    %1121 = vmatpush.msra.mxu0 %v777
    %1122 = vmatpush.msra.mxu0 %v761
    %1123 = vmatpush.msra.mxu0 %v745
    %1124 = vmatpush.msra.mxu0 %v729
    %1125 = vmatpush.msra.mxu0 %v713
    %1126 = vmatpush.msra.mxu0 %v697
    %1127 = vmatpush.msra.mxu0 %v681
    %1128 = vmatmul.f32.gmra.mxu0 %v671
    %v1129 = vpop.f32.mrf.mxu0
    %v1130 = vadd.f32 0.0, %v1129
    %1131 = vmatmul.f32.gmra.mxu0 %v672
    %v1132 = vpop.f32.mrf.mxu0
    %v1133 = vadd.f32 0.0, %v1132
    %1134 = vmatmul.f32.gmra.mxu0 %v673
    %v1135 = vpop.f32.mrf.mxu0
    %v1136 = vadd.f32 0.0, %v1135
    %1137 = vdwg.mxu0
    %1138 = vmatpush.msra.mxu0 %v922
    %1139 = vmatpush.msra.mxu0 %v906
    %1140 = vmatpush.msra.mxu0 %v890
    %1141 = vmatpush.msra.mxu0 %v874
    %1142 = vmatpush.msra.mxu0 %v858
    %1143 = vmatpush.msra.mxu0 %v842
    %1144 = vmatpush.msra.mxu0 %v826
    %1145 = vmatpush.msra.mxu0 %v810
    %1146 = vmatpush.msra.mxu0 %v794
    %1147 = vmatpush.msra.mxu0 %v778
    %1148 = vmatpush.msra.mxu0 %v762
    %1149 = vmatpush.msra.mxu0 %v746
    %1150 = vmatpush.msra.mxu0 %v730
    %1151 = vmatpush.msra.mxu0 %v714
    %1152 = vmatpush.msra.mxu0 %v698
    %1153 = vmatpush.msra.mxu0 %v682
    %1154 = vmatmul.f32.gmra.mxu0 %v671
    %v1155 = vpop.f32.mrf.mxu0
    %v1156 = vadd.f32 0.0, %v1155
    %1157 = vmatmul.f32.gmra.mxu0 %v672
    %v1158 = vpop.f32.mrf.mxu0
    %v1159 = vadd.f32 0.0, %v1158
    %1160 = vmatmul.f32.gmra.mxu0 %v673
    %v1161 = vpop.f32.mrf.mxu0
    %v1162 = vadd.f32 0.0, %v1161
    %1163 = vdwg.mxu0
    %1164 = vmatpush.msra.mxu0 %v923
    %1165 = vmatpush.msra.mxu0 %v907
    %1166 = vmatpush.msra.mxu0 %v891
    %1167 = vmatpush.msra.mxu0 %v875
    %1168 = vmatpush.msra.mxu0 %v859
    %1169 = vmatpush.msra.mxu0 %v843
    %1170 = vmatpush.msra.mxu0 %v827
    %1171 = vmatpush.msra.mxu0 %v811
    %1172 = vmatpush.msra.mxu0 %v795
    %1173 = vmatpush.msra.mxu0 %v779
    %1174 = vmatpush.msra.mxu0 %v763
    %1175 = vmatpush.msra.mxu0 %v747
    %1176 = vmatpush.msra.mxu0 %v731
    %1177 = vmatpush.msra.mxu0 %v715
    %1178 = vmatpush.msra.mxu0 %v699
    %1179 = vmatpush.msra.mxu0 %v683
    %1180 = vmatmul.f32.gmra.mxu0 %v671
    %v1181 = vpop.f32.mrf.mxu0
    %v1182 = vadd.f32 0.0, %v1181
    %1183 = vmatmul.f32.gmra.mxu0 %v672
    %v1184 = vpop.f32.mrf.mxu0
    %v1185 = vadd.f32 0.0, %v1184
    %1186 = vmatmul.f32.gmra.mxu0 %v673
    %v1187 = vpop.f32.mrf.mxu0
    %v1188 = vadd.f32 0.0, %v1187
    %1189 = vdwg.mxu0
    %1190 = vmatpush.msra.mxu0 %v924
    %1191 = vmatpush.msra.mxu0 %v908
    %1192 = vmatpush.msra.mxu0 %v892
    %1193 = vmatpush.msra.mxu0 %v876
    %1194 = vmatpush.msra.mxu0 %v860
    %1195 = vmatpush.msra.mxu0 %v844
    %1196 = vmatpush.msra.mxu0 %v828
    %1197 = vmatpush.msra.mxu0 %v812
    %1198 = vmatpush.msra.mxu0 %v796
    %1199 = vmatpush.msra.mxu0 %v780
    %1200 = vmatpush.msra.mxu0 %v764
    %1201 = vmatpush.msra.mxu0 %v748
    %1202 = vmatpush.msra.mxu0 %v732
    %1203 = vmatpush.msra.mxu0 %v716
    %1204 = vmatpush.msra.mxu0 %v700
    %1205 = vmatpush.msra.mxu0 %v684
    %1206 = vmatmul.f32.gmra.mxu0 %v671
    %v1207 = vpop.f32.mrf.mxu0
    %v1208 = vadd.f32 0.0, %v1207
    %1209 = vmatmul.f32.gmra.mxu0 %v672
    %v1210 = vpop.f32.mrf.mxu0
    %v1211 = vadd.f32 0.0, %v1210
    %1212 = vmatmul.f32.gmra.mxu0 %v673
    %v1213 = vpop.f32.mrf.mxu0
    %v1214 = vadd.f32 0.0, %v1213
    %1215 = vdwg.mxu0
    %1216 = vmatpush.msra.mxu0 %v925
    %1217 = vmatpush.msra.mxu0 %v909
    %1218 = vmatpush.msra.mxu0 %v893
    %1219 = vmatpush.msra.mxu0 %v877
    %1220 = vmatpush.msra.mxu0 %v861
    %1221 = vmatpush.msra.mxu0 %v845
    %1222 = vmatpush.msra.mxu0 %v829
    %1223 = vmatpush.msra.mxu0 %v813
    %1224 = vmatpush.msra.mxu0 %v797
    %1225 = vmatpush.msra.mxu0 %v781
    %1226 = vmatpush.msra.mxu0 %v765
    %1227 = vmatpush.msra.mxu0 %v749
    %1228 = vmatpush.msra.mxu0 %v733
    %1229 = vmatpush.msra.mxu0 %v717
    %1230 = vmatpush.msra.mxu0 %v701
    %1231 = vmatpush.msra.mxu0 %v685
    %1232 = vmatmul.f32.gmra.mxu0 %v671
    %v1233 = vpop.f32.mrf.mxu0
    %v1234 = vadd.f32 0.0, %v1233
    %1235 = vmatmul.f32.gmra.mxu0 %v672
    %v1236 = vpop.f32.mrf.mxu0
    %v1237 = vadd.f32 0.0, %v1236
    %1238 = vmatmul.f32.gmra.mxu0 %v673
    %v1239 = vpop.f32.mrf.mxu0
    %v1240 = vadd.f32 0.0, %v1239
    %1241 = vdwg.mxu0
    %1242 = vmatpush.msra.mxu0 %v926
    %1243 = vmatpush.msra.mxu0 %v910
    %1244 = vmatpush.msra.mxu0 %v894
    %1245 = vmatpush.msra.mxu0 %v878
    %1246 = vmatpush.msra.mxu0 %v862
    %1247 = vmatpush.msra.mxu0 %v846
    %1248 = vmatpush.msra.mxu0 %v830
    %1249 = vmatpush.msra.mxu0 %v814
    %1250 = vmatpush.msra.mxu0 %v798
    %1251 = vmatpush.msra.mxu0 %v782
    %1252 = vmatpush.msra.mxu0 %v766
    %1253 = vmatpush.msra.mxu0 %v750
    %1254 = vmatpush.msra.mxu0 %v734
    %1255 = vmatpush.msra.mxu0 %v718
    %1256 = vmatpush.msra.mxu0 %v702
    %1257 = vmatpush.msra.mxu0 %v686
    %1258 = vmatmul.f32.gmra.mxu0 %v671
    %v1259 = vpop.f32.mrf.mxu0
    %v1260 = vadd.f32 0.0, %v1259
    %1261 = vmatmul.f32.gmra.mxu0 %v672
    %v1262 = vpop.f32.mrf.mxu0
    %v1263 = vadd.f32 0.0, %v1262
    %1264 = vmatmul.f32.gmra.mxu0 %v673
    %v1265 = vpop.f32.mrf.mxu0
    %v1266 = vadd.f32 0.0, %v1265
    %1267 = vdwg.mxu0
    %1268 = vmatpush.msra.mxu0 %v927
    %1269 = vmatpush.msra.mxu0 %v911
    %1270 = vmatpush.msra.mxu0 %v895
    %1271 = vmatpush.msra.mxu0 %v879
    %1272 = vmatpush.msra.mxu0 %v863
    %1273 = vmatpush.msra.mxu0 %v847
    %1274 = vmatpush.msra.mxu0 %v831
    %1275 = vmatpush.msra.mxu0 %v815
    %1276 = vmatpush.msra.mxu0 %v799
    %1277 = vmatpush.msra.mxu0 %v783
    %1278 = vmatpush.msra.mxu0 %v767
    %1279 = vmatpush.msra.mxu0 %v751
    %1280 = vmatpush.msra.mxu0 %v735
    %1281 = vmatpush.msra.mxu0 %v719
    %1282 = vmatpush.msra.mxu0 %v703
    %1283 = vmatpush.msra.mxu0 %v687
    %1284 = vmatmul.f32.gmra.mxu0 %v671
    %v1285 = vpop.f32.mrf.mxu0
    %v1286 = vadd.f32 0.0, %v1285
    %1287 = vmatmul.f32.gmra.mxu0 %v672
    %v1288 = vpop.f32.mrf.mxu0
    %v1289 = vadd.f32 0.0, %v1288
    %1290 = vmatmul.f32.gmra.mxu0 %v673
    %v1291 = vpop.f32.mrf.mxu0
    %v1292 = vadd.f32 0.0, %v1291
    %1293 = vdwg.mxu0
    %1294 = vmatpush.msra.mxu0 %v928
    %1295 = vmatpush.msra.mxu0 %v912
    %1296 = vmatpush.msra.mxu0 %v896
    %1297 = vmatpush.msra.mxu0 %v880
    %1298 = vmatpush.msra.mxu0 %v864
    %1299 = vmatpush.msra.mxu0 %v848
    %1300 = vmatpush.msra.mxu0 %v832
    %1301 = vmatpush.msra.mxu0 %v816
    %1302 = vmatpush.msra.mxu0 %v800
    %1303 = vmatpush.msra.mxu0 %v784
    %1304 = vmatpush.msra.mxu0 %v768
    %1305 = vmatpush.msra.mxu0 %v752
    %1306 = vmatpush.msra.mxu0 %v736
    %1307 = vmatpush.msra.mxu0 %v720
    %1308 = vmatpush.msra.mxu0 %v704
    %1309 = vmatpush.msra.mxu0 %v688
    %1310 = vmatmul.f32.gmra.mxu0 %v671
    %v1311 = vpop.f32.mrf.mxu0
    %v1312 = vadd.f32 0.0, %v1311
    %1313 = vmatmul.f32.gmra.mxu0 %v672
    %v1314 = vpop.f32.mrf.mxu0
    %v1315 = vadd.f32 0.0, %v1314
    %1316 = vmatmul.f32.gmra.mxu0 %v673
    %v1317 = vpop.f32.mrf.mxu0
    %v1318 = vadd.f32 0.0, %v1317
    %1319 = vdwg.mxu0
    %1320 = vmatpush.msra.mxu0 %v929
    %1321 = vmatpush.msra.mxu0 %v913
    %1322 = vmatpush.msra.mxu0 %v897
    %1323 = vmatpush.msra.mxu0 %v881
    %1324 = vmatpush.msra.mxu0 %v865
    %1325 = vmatpush.msra.mxu0 %v849
    %1326 = vmatpush.msra.mxu0 %v833
    %1327 = vmatpush.msra.mxu0 %v817
    %1328 = vmatpush.msra.mxu0 %v801
    %1329 = vmatpush.msra.mxu0 %v785
    %1330 = vmatpush.msra.mxu0 %v769
    %1331 = vmatpush.msra.mxu0 %v753
    %1332 = vmatpush.msra.mxu0 %v737
    %1333 = vmatpush.msra.mxu0 %v721
    %1334 = vmatpush.msra.mxu0 %v705
    %1335 = vmatpush.msra.mxu0 %v689
    %1336 = vmatmul.f32.gmra.mxu0 %v671
    %v1337 = vpop.f32.mrf.mxu0
    %v1338 = vadd.f32 0.0, %v1337
    %1339 = vmatmul.f32.gmra.mxu0 %v672
    %v1340 = vpop.f32.mrf.mxu0
    %v1341 = vadd.f32 0.0, %v1340
    %1342 = vmatmul.f32.gmra.mxu0 %v673
    %v1343 = vpop.f32.mrf.mxu0
    %v1344 = vadd.f32 0.0, %v1343
    %1345 = vdwg.mxu0
    %vm1346 = vcmask 130048
    %v1348 = vsel %vm1346, %v556, 0
    %v1351 = vsel %vm1346, %v557, 0
    %v1354 = vsel %vm1346, %v558, 0
    %1356 = vmatpush.msra.mxu0 0.0
    %1357 = vmatpush.msra.mxu0 0.0
    %1358 = vmatpush.msra.mxu0 0.0
    %1359 = vmatpush.msra.mxu0 0.0
    %1360 = vmatpush.msra.mxu0 0.0
    %1361 = vmatpush.msra.mxu0 0.0
    %1362 = vmatpush.msra.mxu0 0.0
    %1363 = vmatpush.msra.mxu0 0.0
    %1364 = vmatpush.msra.mxu0 0.0
    %1365 = vmatpush.msra.mxu0 0.0
    %1366 = vmatpush.msra.mxu0 0.0
    %1367 = vmatpush.msra.mxu0 0.0
    %1368 = vmatpush.msra.mxu0 0.0
    %1369 = vmatpush.msra.mxu0 0.0
    %1370 = vmatpush.msra.mxu0 %v621
    %1371 = vmatpush.msra.mxu0 %v620
    %1372 = vmatmul.f32.gmra.mxu0 %v1348
    %v1373 = vpop.f32.mrf.mxu0
    %v1374 = vadd.f32 0.0, %v1373
    %1375 = vmatmul.f32.gmra.mxu0 %v1351
    %v1376 = vpop.f32.mrf.mxu0
    %v1377 = vadd.f32 0.0, %v1376
    %1378 = vmatmul.f32.gmra.mxu0 %v1354
    %v1379 = vpop.f32.mrf.mxu0
    %v1380 = vadd.f32 0.0, %v1379
    %1381 = vdwg.mxu0
    %v1382 = vld [vmem:[#allocation14] sm:$0xff]
    %v1383 = vld [vmem:[#allocation14 + $0x8] sm:$0xff]
    %v1384 = vld [vmem:[#allocation14 + $0x10] sm:$0xff]
    %v1385 = vld [vmem:[#allocation14 + $0x18] sm:$0xff]
    %v1386 = vld [vmem:[#allocation14 + $0x20] sm:$0xff]
    %v1387 = vld [vmem:[#allocation14 + $0x28] sm:$0xff]
    %v1388 = vld [vmem:[#allocation14 + $0x30] sm:$0xff]
    %v1389 = vld [vmem:[#allocation14 + $0x38] sm:$0xff]
    %v1390 = vld [vmem:[#allocation14 + $0x40] sm:$0xff]
    %v1391 = vld [vmem:[#allocation14 + $0x48] sm:$0xff]
    %v1392 = vld [vmem:[#allocation14 + $0x50] sm:$0xff]
    %v1393 = vld [vmem:[#allocation14 + $0x58] sm:$0xff]
    %v1394 = vld [vmem:[#allocation14 + $0x60] sm:$0xff]
    %v1395 = vld [vmem:[#allocation14 + $0x68] sm:$0xff]
    %v1396 = vld [vmem:[#allocation14 + $0x70] sm:$0xff]
    %v1397 = vld [vmem:[#allocation14 + $0x78] sm:$0xff]
    %1399 = vset.pattern.permute.xlu0 0
    %1400 = vperm.xlu0 %1399, %v1374
    %v1401 = vpop.permute.xlu0 %1400
    %1404 = vset.pattern.permute.xlu0 0
    %1405 = vperm.xlu0 %1404, %v1377
    %v1406 = vpop.permute.xlu0 %1405
    %1409 = vset.pattern.permute.xlu0 0
    %1410 = vperm.xlu0 %1409, %v1380
    %v1411 = vpop.permute.xlu0 %1410
    %v1413 = vmul.f32 %v1401, %v948
    %v1414 = vmul.f32 %v1406, %v951
    %v1415 = vmul.f32 %v1411, %v954
    %1416 = vmatpush.msra.mxu0 %v1397
    %1417 = vmatpush.msra.mxu0 %v1396
    %1418 = vmatpush.msra.mxu0 %v1395
    %1419 = vmatpush.msra.mxu0 %v1394
    %1420 = vmatpush.msra.mxu0 %v1393
    %1421 = vmatpush.msra.mxu0 %v1392
    %1422 = vmatpush.msra.mxu0 %v1391
    %1423 = vmatpush.msra.mxu0 %v1390
    %1424 = vmatpush.msra.mxu0 %v1389
    %1425 = vmatpush.msra.mxu0 %v1388
    %1426 = vmatpush.msra.mxu0 %v1387
    %1427 = vmatpush.msra.mxu0 %v1386
    %1428 = vmatpush.msra.mxu0 %v1385
    %1429 = vmatpush.msra.mxu0 %v1384
    %1430 = vmatpush.msra.mxu0 %v1383
    %1431 = vmatpush.msra.mxu0 %v1382
    %1432 = vmatmul.f32.gmra.mxu0 %v1374
    %v1433 = vpop.f32.mrf.mxu0
    %v1434 = vadd.f32 %v1413, %v1433
    %1435 = vmatmul.f32.gmra.mxu0 %v1377
    %v1436 = vpop.f32.mrf.mxu0
    %v1437 = vadd.f32 %v1414, %v1436
    %1438 = vmatmul.f32.gmra.mxu0 %v1380
    %v1439 = vpop.f32.mrf.mxu0
    %v1440 = vadd.f32 %v1415, %v1439
    %1441 = vdwg.mxu0
    %1442 = vset.pattern.permute.xlu0 1
    %1443 = vperm.xlu0 %1442, %v1374
    %v1444 = vpop.permute.xlu0 %1443
    %1446 = vset.pattern.permute.xlu0 1
    %1447 = vperm.xlu0 %1446, %v1377
    %v1448 = vpop.permute.xlu0 %1447
    %1450 = vset.pattern.permute.xlu0 1
    %1451 = vperm.xlu0 %1450, %v1380
    %v1452 = vpop.permute.xlu0 %1451
    %v1454 = vmul.f32 %v1444, %v974
    %v1455 = vmul.f32 %v1448, %v977
    %v1456 = vmul.f32 %v1452, %v980
    %v1457 = vadd.f32 %v1434, %v1454
    %v1458 = vadd.f32 %v1437, %v1455
    %v1459 = vadd.f32 %v1440, %v1456
    %1460 = vset.pattern.permute.xlu0 2
    %1461 = vperm.xlu0 %1460, %v1374
    %v1462 = vpop.permute.xlu0 %1461
    %1464 = vset.pattern.permute.xlu0 2
    %1465 = vperm.xlu0 %1464, %v1377
    %v1466 = vpop.permute.xlu0 %1465
    %1468 = vset.pattern.permute.xlu0 2
    %1469 = vperm.xlu0 %1468, %v1380
    %v1470 = vpop.permute.xlu0 %1469
    %v1472 = vmul.f32 %v1462, %v1000
    %v1473 = vmul.f32 %v1466, %v1003
    %v1474 = vmul.f32 %v1470, %v1006
    %v1475 = vadd.f32 %v1457, %v1472
    %v1476 = vadd.f32 %v1458, %v1473
    %v1477 = vadd.f32 %v1459, %v1474
    %1478 = vset.pattern.permute.xlu0 3
    %1479 = vperm.xlu0 %1478, %v1374
    %v1480 = vpop.permute.xlu0 %1479
    %1482 = vset.pattern.permute.xlu0 3
    %1483 = vperm.xlu0 %1482, %v1377
    %v1484 = vpop.permute.xlu0 %1483
    %1486 = vset.pattern.permute.xlu0 3
    %1487 = vperm.xlu0 %1486, %v1380
    %v1488 = vpop.permute.xlu0 %1487
    %v1490 = vmul.f32 %v1480, %v1026
    %v1491 = vmul.f32 %v1484, %v1029
    %v1492 = vmul.f32 %v1488, %v1032
    %v1493 = vadd.f32 %v1475, %v1490
    %v1494 = vadd.f32 %v1476, %v1491
    %v1495 = vadd.f32 %v1477, %v1492
    %1496 = vset.pattern.permute.xlu0 4
    %1497 = vperm.xlu0 %1496, %v1374
    %v1498 = vpop.permute.xlu0 %1497
    %1500 = vset.pattern.permute.xlu0 4
    %1501 = vperm.xlu0 %1500, %v1377
    %v1502 = vpop.permute.xlu0 %1501
    %1504 = vset.pattern.permute.xlu0 4
    %1505 = vperm.xlu0 %1504, %v1380
    %v1506 = vpop.permute.xlu0 %1505
    %v1508 = vmul.f32 %v1498, %v1052
    %v1509 = vmul.f32 %v1502, %v1055
    %v1510 = vmul.f32 %v1506, %v1058
    %v1511 = vadd.f32 %v1493, %v1508
    %v1512 = vadd.f32 %v1494, %v1509
    %v1513 = vadd.f32 %v1495, %v1510
    %1514 = vset.pattern.permute.xlu0 5
    %1515 = vperm.xlu0 %1514, %v1374
    %v1516 = vpop.permute.xlu0 %1515
    %1518 = vset.pattern.permute.xlu0 5
    %1519 = vperm.xlu0 %1518, %v1377
    %v1520 = vpop.permute.xlu0 %1519
    %1522 = vset.pattern.permute.xlu0 5
    %1523 = vperm.xlu0 %1522, %v1380
    %v1524 = vpop.permute.xlu0 %1523
    %v1526 = vmul.f32 %v1516, %v1078
    %v1527 = vmul.f32 %v1520, %v1081
    %v1528 = vmul.f32 %v1524, %v1084
    %v1529 = vadd.f32 %v1511, %v1526
    %v1530 = vadd.f32 %v1512, %v1527
    %v1531 = vadd.f32 %v1513, %v1528
    %1532 = vset.pattern.permute.xlu0 6
    %1533 = vperm.xlu0 %1532, %v1374
    %v1534 = vpop.permute.xlu0 %1533
    %1536 = vset.pattern.permute.xlu0 6
    %1537 = vperm.xlu0 %1536, %v1377
    %v1538 = vpop.permute.xlu0 %1537
    %1540 = vset.pattern.permute.xlu0 6
    %1541 = vperm.xlu0 %1540, %v1380
    %v1542 = vpop.permute.xlu0 %1541
    %v1544 = vmul.f32 %v1534, %v1104
    %v1545 = vmul.f32 %v1538, %v1107
    %v1546 = vmul.f32 %v1542, %v1110
    %v1547 = vadd.f32 %v1529, %v1544
    %v1548 = vadd.f32 %v1530, %v1545
    %v1549 = vadd.f32 %v1531, %v1546
    %1550 = vset.pattern.permute.xlu0 7
    %1551 = vperm.xlu0 %1550, %v1374
    %v1552 = vpop.permute.xlu0 %1551
    %1554 = vset.pattern.permute.xlu0 7
    %1555 = vperm.xlu0 %1554, %v1377
    %v1556 = vpop.permute.xlu0 %1555
    %1558 = vset.pattern.permute.xlu0 7
    %1559 = vperm.xlu0 %1558, %v1380
    %v1560 = vpop.permute.xlu0 %1559
    %v1562 = vmul.f32 %v1552, %v1130
    %v1563 = vmul.f32 %v1556, %v1133
    %v1564 = vmul.f32 %v1560, %v1136
    %v1565 = vadd.f32 %v1547, %v1562
    %v1566 = vadd.f32 %v1548, %v1563
    %v1567 = vadd.f32 %v1549, %v1564
    %1568 = vset.pattern.permute.xlu0 8
    %1569 = vperm.xlu0 %1568, %v1374
    %v1570 = vpop.permute.xlu0 %1569
    %1572 = vset.pattern.permute.xlu0 8
    %1573 = vperm.xlu0 %1572, %v1377
    %v1574 = vpop.permute.xlu0 %1573
    %1576 = vset.pattern.permute.xlu0 8
    %1577 = vperm.xlu0 %1576, %v1380
    %v1578 = vpop.permute.xlu0 %1577
    %v1580 = vmul.f32 %v1570, %v1156
    %v1581 = vmul.f32 %v1574, %v1159
    %v1582 = vmul.f32 %v1578, %v1162
    %v1583 = vadd.f32 %v1565, %v1580
    %v1584 = vadd.f32 %v1566, %v1581
    %v1585 = vadd.f32 %v1567, %v1582
    %1586 = vset.pattern.permute.xlu0 9
    %1587 = vperm.xlu0 %1586, %v1374
    %v1588 = vpop.permute.xlu0 %1587
    %1590 = vset.pattern.permute.xlu0 9
    %1591 = vperm.xlu0 %1590, %v1377
    %v1592 = vpop.permute.xlu0 %1591
    %1594 = vset.pattern.permute.xlu0 9
    %1595 = vperm.xlu0 %1594, %v1380
    %v1596 = vpop.permute.xlu0 %1595
    %v1598 = vmul.f32 %v1588, %v1182
    %v1599 = vmul.f32 %v1592, %v1185
    %v1600 = vmul.f32 %v1596, %v1188
    %v1601 = vadd.f32 %v1583, %v1598
    %v1602 = vadd.f32 %v1584, %v1599
    %v1603 = vadd.f32 %v1585, %v1600
    %1604 = vset.pattern.permute.xlu0 10
    %1605 = vperm.xlu0 %1604, %v1374
    %v1606 = vpop.permute.xlu0 %1605
    %1608 = vset.pattern.permute.xlu0 10
    %1609 = vperm.xlu0 %1608, %v1377
    %v1610 = vpop.permute.xlu0 %1609
    %1612 = vset.pattern.permute.xlu0 10
    %1613 = vperm.xlu0 %1612, %v1380
    %v1614 = vpop.permute.xlu0 %1613
    %v1616 = vmul.f32 %v1606, %v1208
    %v1617 = vmul.f32 %v1610, %v1211
    %v1618 = vmul.f32 %v1614, %v1214
    %v1619 = vadd.f32 %v1601, %v1616
    %v1620 = vadd.f32 %v1602, %v1617
    %v1621 = vadd.f32 %v1603, %v1618
    %1622 = vset.pattern.permute.xlu0 11
    %1623 = vperm.xlu0 %1622, %v1374
    %v1624 = vpop.permute.xlu0 %1623
    %1626 = vset.pattern.permute.xlu0 11
    %1627 = vperm.xlu0 %1626, %v1377
    %v1628 = vpop.permute.xlu0 %1627
    %1630 = vset.pattern.permute.xlu0 11
    %1631 = vperm.xlu0 %1630, %v1380
    %v1632 = vpop.permute.xlu0 %1631
    %v1634 = vmul.f32 %v1624, %v1234
    %v1635 = vmul.f32 %v1628, %v1237
    %v1636 = vmul.f32 %v1632, %v1240
    %v1637 = vadd.f32 %v1619, %v1634
    %v1638 = vadd.f32 %v1620, %v1635
    %v1639 = vadd.f32 %v1621, %v1636
    %1640 = vset.pattern.permute.xlu0 12
    %1641 = vperm.xlu0 %1640, %v1374
    %v1642 = vpop.permute.xlu0 %1641
    %1644 = vset.pattern.permute.xlu0 12
    %1645 = vperm.xlu0 %1644, %v1377
    %v1646 = vpop.permute.xlu0 %1645
    %1648 = vset.pattern.permute.xlu0 12
    %1649 = vperm.xlu0 %1648, %v1380
    %v1650 = vpop.permute.xlu0 %1649
    %v1652 = vmul.f32 %v1642, %v1260
    %v1653 = vmul.f32 %v1646, %v1263
    %v1654 = vmul.f32 %v1650, %v1266
    %v1655 = vadd.f32 %v1637, %v1652
    %v1656 = vadd.f32 %v1638, %v1653
    %v1657 = vadd.f32 %v1639, %v1654
    %1658 = vset.pattern.permute.xlu0 13
    %1659 = vperm.xlu0 %1658, %v1374
    %v1660 = vpop.permute.xlu0 %1659
    %1662 = vset.pattern.permute.xlu0 13
    %1663 = vperm.xlu0 %1662, %v1377
    %v1664 = vpop.permute.xlu0 %1663
    %1666 = vset.pattern.permute.xlu0 13
    %1667 = vperm.xlu0 %1666, %v1380
    %v1668 = vpop.permute.xlu0 %1667
    %v1670 = vmul.f32 %v1660, %v1286
    %v1671 = vmul.f32 %v1664, %v1289
    %v1672 = vmul.f32 %v1668, %v1292
    %v1673 = vadd.f32 %v1655, %v1670
    %v1674 = vadd.f32 %v1656, %v1671
    %v1675 = vadd.f32 %v1657, %v1672
    %1676 = vset.pattern.permute.xlu0 14
    %1677 = vperm.xlu0 %1676, %v1374
    %v1678 = vpop.permute.xlu0 %1677
    %1680 = vset.pattern.permute.xlu0 14
    %1681 = vperm.xlu0 %1680, %v1377
    %v1682 = vpop.permute.xlu0 %1681
    %1684 = vset.pattern.permute.xlu0 14
    %1685 = vperm.xlu0 %1684, %v1380
    %v1686 = vpop.permute.xlu0 %1685
    %v1688 = vmul.f32 %v1678, %v1312
    %v1689 = vmul.f32 %v1682, %v1315
    %v1690 = vmul.f32 %v1686, %v1318
    %v1691 = vadd.f32 %v1673, %v1688
    %v1692 = vadd.f32 %v1674, %v1689
    %v1693 = vadd.f32 %v1675, %v1690
    %1694 = vset.pattern.permute.xlu0 15
    %1695 = vperm.xlu0 %1694, %v1374
    %v1696 = vpop.permute.xlu0 %1695
    %1698 = vset.pattern.permute.xlu0 15
    %1699 = vperm.xlu0 %1698, %v1377
    %v1700 = vpop.permute.xlu0 %1699
    %1702 = vset.pattern.permute.xlu0 15
    %1703 = vperm.xlu0 %1702, %v1380
    %v1704 = vpop.permute.xlu0 %1703
    %v1706 = vmul.f32 %v1696, %v1338
    %v1707 = vmul.f32 %v1700, %v1341
    %v1708 = vmul.f32 %v1704, %v1344
    %v1709 = vadd.f32 %v1691, %v1706
    %v1710 = vadd.f32 %v1692, %v1707
    %v1711 = vadd.f32 %v1693, %v1708
    %vm1712 = vcmask 195584
    %v1714 = vsel %vm1712, %v568, 0
    %v1717 = vsel %vm1712, %v569, 0
    %1719 = vmatpush.msra.mxu0 0.0
    %1720 = vmatpush.msra.mxu0 0.0
    %1721 = vmatpush.msra.mxu0 0.0
    %1722 = vmatpush.msra.mxu0 0.0
    %1723 = vmatpush.msra.mxu0 0.0
    %1724 = vmatpush.msra.mxu0 0.0
    %1725 = vmatpush.msra.mxu0 0.0
    %1726 = vmatpush.msra.mxu0 0.0
    %1727 = vmatpush.msra.mxu0 0.0
    %1728 = vmatpush.msra.mxu0 0.0
    %1729 = vmatpush.msra.mxu0 0.0
    %1730 = vmatpush.msra.mxu0 0.0
    %1731 = vmatpush.msra.mxu0 0.0
    %1732 = vmatpush.msra.mxu0 %v1711
    %1733 = vmatpush.msra.mxu0 %v1710
    %1734 = vmatpush.msra.mxu0 %v1709
    %1735 = vmatmul.f32.gmra.mxu0 %v1714
    %v1736 = vpop.f32.mrf.mxu0
    %v1737 = vadd.f32 0.0, %v1736
    %1738 = vmatmul.f32.gmra.mxu0 %v1717
    %v1739 = vpop.f32.mrf.mxu0
    %v1740 = vadd.f32 0.0, %v1739
    %1741 = vdwg.mxu0
    %v1742 = vld [vmem:[#allocation16] sm:$0xff]
    %v1743 = vld [vmem:[#allocation16 + $0x8] sm:$0xff]
    %v1744 = vld [vmem:[#allocation16 + $0x10] sm:$0xff]
    %v1745 = vld [vmem:[#allocation16 + $0x18] sm:$0xff]
    %v1746 = vld [vmem:[#allocation16 + $0x20] sm:$0xff]
    %v1747 = vld [vmem:[#allocation16 + $0x28] sm:$0xff]
    %v1748 = vld [vmem:[#allocation16 + $0x30] sm:$0xff]
    %v1749 = vld [vmem:[#allocation16 + $0x38] sm:$0xff]
    %v1750 = vld [vmem:[#allocation16 + $0x40] sm:$0xff]
    %v1751 = vld [vmem:[#allocation16 + $0x48] sm:$0xff]
    %v1752 = vld [vmem:[#allocation16 + $0x50] sm:$0xff]
    %v1753 = vld [vmem:[#allocation16 + $0x58] sm:$0xff]
    %v1754 = vld [vmem:[#allocation16 + $0x60] sm:$0xff]
    %v1755 = vld [vmem:[#allocation16 + $0x68] sm:$0xff]
    %v1756 = vld [vmem:[#allocation16 + $0x70] sm:$0xff]
    %v1757 = vld [vmem:[#allocation16 + $0x78] sm:$0xff]
    %v1758 = vld [vmem:[#allocation17] sm:$0x1]
    %v1760 = vperm.slane %v1758, 0
    %1762 = vmatpush.msra.mxu0 %v1757
    %1763 = vmatpush.msra.mxu0 %v1756
    %1764 = vmatpush.msra.mxu0 %v1755
    %1765 = vmatpush.msra.mxu0 %v1754
    %1766 = vmatpush.msra.mxu0 %v1753
    %1767 = vmatpush.msra.mxu0 %v1752
    %1768 = vmatpush.msra.mxu0 %v1751
    %1769 = vmatpush.msra.mxu0 %v1750
    %1770 = vmatpush.msra.mxu0 %v1749
    %1771 = vmatpush.msra.mxu0 %v1748
    %1772 = vmatpush.msra.mxu0 %v1747
    %1773 = vmatpush.msra.mxu0 %v1746
    %1774 = vmatpush.msra.mxu0 %v1745
    %1775 = vmatpush.msra.mxu0 %v1744
    %1776 = vmatpush.msra.mxu0 %v1743
    %1777 = vmatpush.msra.mxu0 %v1742
    %1778 = vmatmul.f32.gmra.mxu0 %v620
    %v1779 = vpop.f32.mrf.mxu0
    %v1780 = vadd.f32 %v1760, %v1779
    %1781 = vmatmul.f32.gmra.mxu0 %v621
    %v1782 = vpop.f32.mrf.mxu0
    %v1783 = vadd.f32 %v1760, %v1782
    %1784 = vdwg.mxu0
    %v1785 = vadd.f32 %v1780, %v1737
    %v1786 = vadd.f32 %v1783, %v1740
    %v1787 = vmax.f32 %v1785, 0.0
    %v1788 = vmax.f32 %v1786, 0.0
    %v1789 = vld [vmem:[#allocation19] sm:$0x1]
    %v1791 = vperm.slane %v1789, 0
    %v1793 = vmul.f32 %v1787, %v1791
    %v1794 = vmul.f32 %v1788, %v1791
    %v1795 = vld [vmem:[#allocation20] sm:$0x1]
    %v1797 = vperm.slane %v1795, 0
    %v1799 = vadd.f32 %v1793, %v1797
    %v1800 = vadd.f32 %v1794, %v1797
    %v1801 = vld [vmem:[#allocation22] sm:$0xff]
    %v1802 = vld [vmem:[#allocation22 + $0x8] sm:$0xff]
    %v1803 = vld [vmem:[#allocation22 + $0x10] sm:$0xff]
    %v1804 = vld [vmem:[#allocation22 + $0x18] sm:$0xff]
    %v1805 = vld [vmem:[#allocation22 + $0x20] sm:$0xff]
    %v1806 = vld [vmem:[#allocation22 + $0x28] sm:$0xff]
    %v1807 = vld [vmem:[#allocation22 + $0x30] sm:$0xff]
    %v1808 = vld [vmem:[#allocation22 + $0x38] sm:$0xff]
    %v1809 = vld [vmem:[#allocation22 + $0x40] sm:$0xff]
    %v1810 = vld [vmem:[#allocation22 + $0x48] sm:$0xff]
    %v1811 = vld [vmem:[#allocation22 + $0x50] sm:$0xff]
    %v1812 = vld [vmem:[#allocation22 + $0x58] sm:$0xff]
    %v1813 = vld [vmem:[#allocation22 + $0x60] sm:$0xff]
    %v1814 = vld [vmem:[#allocation22 + $0x68] sm:$0xff]
    %v1815 = vld [vmem:[#allocation22 + $0x70] sm:$0xff]
    %v1816 = vld [vmem:[#allocation22 + $0x78] sm:$0xff]
    %v1817 = vld [vmem:[#allocation22 + $0x80] sm:$0xff]
    %v1818 = vld [vmem:[#allocation22 + $0x88] sm:$0xff]
    %v1819 = vld [vmem:[#allocation22 + $0x90] sm:$0xff]
    %v1820 = vld [vmem:[#allocation22 + $0x98] sm:$0xff]
    %v1821 = vld [vmem:[#allocation22 + $0xa0] sm:$0xff]
    %v1822 = vld [vmem:[#allocation22 + $0xa8] sm:$0xff]
    %v1823 = vld [vmem:[#allocation22 + $0xb0] sm:$0xff]
    %v1824 = vld [vmem:[#allocation22 + $0xb8] sm:$0xff]
    %v1825 = vld [vmem:[#allocation22 + $0xc0] sm:$0xff]
    %v1826 = vld [vmem:[#allocation22 + $0xc8] sm:$0xff]
    %v1827 = vld [vmem:[#allocation22 + $0xd0] sm:$0xff]
    %v1828 = vld [vmem:[#allocation22 + $0xd8] sm:$0xff]
    %v1829 = vld [vmem:[#allocation22 + $0xe0] sm:$0xff]
    %v1830 = vld [vmem:[#allocation22 + $0xe8] sm:$0xff]
    %v1831 = vld [vmem:[#allocation22 + $0xf0] sm:$0xff]
    %v1832 = vld [vmem:[#allocation22 + $0xf8] sm:$0xff]
    %v1833 = vld [vmem:[#allocation22 + $0x100] sm:$0xff]
    %v1834 = vld [vmem:[#allocation22 + $0x108] sm:$0xff]
    %v1835 = vld [vmem:[#allocation22 + $0x110] sm:$0xff]
    %v1836 = vld [vmem:[#allocation22 + $0x118] sm:$0xff]
    %v1837 = vld [vmem:[#allocation22 + $0x120] sm:$0xff]
    %v1838 = vld [vmem:[#allocation22 + $0x128] sm:$0xff]
    %v1839 = vld [vmem:[#allocation22 + $0x130] sm:$0xff]
    %v1840 = vld [vmem:[#allocation22 + $0x138] sm:$0xff]
    %v1841 = vld [vmem:[#allocation22 + $0x140] sm:$0xff]
    %v1842 = vld [vmem:[#allocation22 + $0x148] sm:$0xff]
    %v1843 = vld [vmem:[#allocation22 + $0x150] sm:$0xff]
    %v1844 = vld [vmem:[#allocation22 + $0x158] sm:$0xff]
    %v1845 = vld [vmem:[#allocation22 + $0x160] sm:$0xff]
    %v1846 = vld [vmem:[#allocation22 + $0x168] sm:$0xff]
    %v1847 = vld [vmem:[#allocation22 + $0x170] sm:$0xff]
    %v1848 = vld [vmem:[#allocation22 + $0x178] sm:$0xff]
    %v1849 = vld [vmem:[%s35] sm:$0x7]
    %v1851 = vperm.slane %v1849, 0
    %v1852 = vperm.slane %v1849, 1
    %v1853 = vperm.slane %v1849, 2
    %1857 = vmatpush.msra.mxu0 %v1846
    %1858 = vmatpush.msra.mxu0 %v1843
    %1859 = vmatpush.msra.mxu0 %v1840
    %1860 = vmatpush.msra.mxu0 %v1837
    %1861 = vmatpush.msra.mxu0 %v1834
    %1862 = vmatpush.msra.mxu0 %v1831
    %1863 = vmatpush.msra.mxu0 %v1828
    %1864 = vmatpush.msra.mxu0 %v1825
    %1865 = vmatpush.msra.mxu0 %v1822
    %1866 = vmatpush.msra.mxu0 %v1819
    %1867 = vmatpush.msra.mxu0 %v1816
    %1868 = vmatpush.msra.mxu0 %v1813
    %1869 = vmatpush.msra.mxu0 %v1810
    %1870 = vmatpush.msra.mxu0 %v1807
    %1871 = vmatpush.msra.mxu0 %v1804
    %1872 = vmatpush.msra.mxu0 %v1801
    %1873 = vmatmul.f32.gmra.mxu0 %v1799
    %v1874 = vpop.f32.mrf.mxu0
    %v1875 = vadd.f32 %v1851, %v1874
    %1876 = vmatmul.f32.gmra.mxu0 %v1800
    %v1877 = vpop.f32.mrf.mxu0
    %v1878 = vadd.f32 %v1851, %v1877
    %1879 = vdwg.mxu0
    %1880 = vmatpush.msra.mxu0 %v1847
    %1881 = vmatpush.msra.mxu0 %v1844
    %1882 = vmatpush.msra.mxu0 %v1841
    %1883 = vmatpush.msra.mxu0 %v1838
    %1884 = vmatpush.msra.mxu0 %v1835
    %1885 = vmatpush.msra.mxu0 %v1832
    %1886 = vmatpush.msra.mxu0 %v1829
    %1887 = vmatpush.msra.mxu0 %v1826
    %1888 = vmatpush.msra.mxu0 %v1823
    %1889 = vmatpush.msra.mxu0 %v1820
    %1890 = vmatpush.msra.mxu0 %v1817
    %1891 = vmatpush.msra.mxu0 %v1814
    %1892 = vmatpush.msra.mxu0 %v1811
    %1893 = vmatpush.msra.mxu0 %v1808
    %1894 = vmatpush.msra.mxu0 %v1805
    %1895 = vmatpush.msra.mxu0 %v1802
    %1896 = vmatmul.f32.gmra.mxu0 %v1799
    %v1897 = vpop.f32.mrf.mxu0
    %v1898 = vadd.f32 %v1852, %v1897
    %1899 = vmatmul.f32.gmra.mxu0 %v1800
    %v1900 = vpop.f32.mrf.mxu0
    %v1901 = vadd.f32 %v1852, %v1900
    %1902 = vdwg.mxu0
    %1903 = vmatpush.msra.mxu0 %v1848
    %1904 = vmatpush.msra.mxu0 %v1845
    %1905 = vmatpush.msra.mxu0 %v1842
    %1906 = vmatpush.msra.mxu0 %v1839
    %1907 = vmatpush.msra.mxu0 %v1836
    %1908 = vmatpush.msra.mxu0 %v1833
    %1909 = vmatpush.msra.mxu0 %v1830
    %1910 = vmatpush.msra.mxu0 %v1827
    %1911 = vmatpush.msra.mxu0 %v1824
    %1912 = vmatpush.msra.mxu0 %v1821
    %1913 = vmatpush.msra.mxu0 %v1818
    %1914 = vmatpush.msra.mxu0 %v1815
    %1915 = vmatpush.msra.mxu0 %v1812
    %1916 = vmatpush.msra.mxu0 %v1809
    %1917 = vmatpush.msra.mxu0 %v1806
    %1918 = vmatpush.msra.mxu0 %v1803
    %1919 = vmatmul.f32.gmra.mxu0 %v1799
    %v1920 = vpop.f32.mrf.mxu0
    %v1921 = vadd.f32 %v1853, %v1920
    %1922 = vmatmul.f32.gmra.mxu0 %v1800
    %v1923 = vpop.f32.mrf.mxu0
    %v1924 = vadd.f32 %v1853, %v1923
    %1925 = vdwg.mxu0
    %v1926 = vld [vmem:[#allocation23] sm:$0xff]
    %v1927 = vld [vmem:[#allocation23 + $0x8] sm:$0xff]
    %v1928 = vld [vmem:[#allocation23 + $0x10] sm:$0xff]
    %v1929 = vld [vmem:[#allocation23 + $0x18] sm:$0xff]
    %v1930 = vld [vmem:[#allocation23 + $0x20] sm:$0xff]
    %v1931 = vld [vmem:[#allocation23 + $0x28] sm:$0xff]
    %v1932 = vld [vmem:[#allocation23 + $0x30] sm:$0xff]
    %v1933 = vld [vmem:[#allocation23 + $0x38] sm:$0xff]
    %v1934 = vld [vmem:[#allocation23 + $0x40] sm:$0xff]
    %v1935 = vld [vmem:[#allocation23 + $0x48] sm:$0xff]
    %v1936 = vld [vmem:[#allocation23 + $0x50] sm:$0xff]
    %v1937 = vld [vmem:[#allocation23 + $0x58] sm:$0xff]
    %v1938 = vld [vmem:[#allocation23 + $0x60] sm:$0xff]
    %v1939 = vld [vmem:[#allocation23 + $0x68] sm:$0xff]
    %v1940 = vld [vmem:[#allocation23 + $0x70] sm:$0xff]
    %v1941 = vld [vmem:[#allocation23 + $0x78] sm:$0xff]
    %v1942 = vld [vmem:[#allocation23 + $0x80] sm:$0xff]
    %v1943 = vld [vmem:[#allocation23 + $0x88] sm:$0xff]
    %v1944 = vld [vmem:[#allocation23 + $0x90] sm:$0xff]
    %v1945 = vld [vmem:[#allocation23 + $0x98] sm:$0xff]
    %v1946 = vld [vmem:[#allocation23 + $0xa0] sm:$0xff]
    %v1947 = vld [vmem:[#allocation23 + $0xa8] sm:$0xff]
    %v1948 = vld [vmem:[#allocation23 + $0xb0] sm:$0xff]
    %v1949 = vld [vmem:[#allocation23 + $0xb8] sm:$0xff]
    %v1950 = vld [vmem:[#allocation23 + $0xc0] sm:$0xff]
    %v1951 = vld [vmem:[#allocation23 + $0xc8] sm:$0xff]
    %v1952 = vld [vmem:[#allocation23 + $0xd0] sm:$0xff]
    %v1953 = vld [vmem:[#allocation23 + $0xd8] sm:$0xff]
    %v1954 = vld [vmem:[#allocation23 + $0xe0] sm:$0xff]
    %v1955 = vld [vmem:[#allocation23 + $0xe8] sm:$0xff]
    %v1956 = vld [vmem:[#allocation23 + $0xf0] sm:$0xff]
    %v1957 = vld [vmem:[#allocation23 + $0xf8] sm:$0xff]
    %v1958 = vld [vmem:[#allocation23 + $0x100] sm:$0xff]
    %v1959 = vld [vmem:[#allocation23 + $0x108] sm:$0xff]
    %v1960 = vld [vmem:[#allocation23 + $0x110] sm:$0xff]
    %v1961 = vld [vmem:[#allocation23 + $0x118] sm:$0xff]
    %v1962 = vld [vmem:[#allocation23 + $0x120] sm:$0xff]
    %v1963 = vld [vmem:[#allocation23 + $0x128] sm:$0xff]
    %v1964 = vld [vmem:[#allocation23 + $0x130] sm:$0xff]
    %v1965 = vld [vmem:[#allocation23 + $0x138] sm:$0xff]
    %v1966 = vld [vmem:[#allocation23 + $0x140] sm:$0xff]
    %v1967 = vld [vmem:[#allocation23 + $0x148] sm:$0xff]
    %v1968 = vld [vmem:[#allocation23 + $0x150] sm:$0xff]
    %v1969 = vld [vmem:[#allocation23 + $0x158] sm:$0xff]
    %v1970 = vld [vmem:[#allocation23 + $0x160] sm:$0xff]
    %v1971 = vld [vmem:[#allocation23 + $0x168] sm:$0xff]
    %v1972 = vld [vmem:[#allocation23 + $0x170] sm:$0xff]
    %v1973 = vld [vmem:[#allocation23 + $0x178] sm:$0xff]
    %v1974 = vld [vmem:[%s37] sm:$0x7]
    %v1976 = vperm.slane %v1974, 0
    %v1977 = vperm.slane %v1974, 1
    %v1978 = vperm.slane %v1974, 2
    %1982 = vmatpush.msra.mxu0 %v1971
    %1983 = vmatpush.msra.mxu0 %v1968
    %1984 = vmatpush.msra.mxu0 %v1965
    %1985 = vmatpush.msra.mxu0 %v1962
    %1986 = vmatpush.msra.mxu0 %v1959
    %1987 = vmatpush.msra.mxu0 %v1956
    %1988 = vmatpush.msra.mxu0 %v1953
    %1989 = vmatpush.msra.mxu0 %v1950
    %1990 = vmatpush.msra.mxu0 %v1947
    %1991 = vmatpush.msra.mxu0 %v1944
    %1992 = vmatpush.msra.mxu0 %v1941
    %1993 = vmatpush.msra.mxu0 %v1938
    %1994 = vmatpush.msra.mxu0 %v1935
    %1995 = vmatpush.msra.mxu0 %v1932
    %1996 = vmatpush.msra.mxu0 %v1929
    %1997 = vmatpush.msra.mxu0 %v1926
    %1998 = vmatmul.f32.gmra.mxu0 %v620
    %v1999 = vpop.f32.mrf.mxu0
    %v2000 = vadd.f32 %v1976, %v1999
    %2001 = vmatmul.f32.gmra.mxu0 %v621
    %v2002 = vpop.f32.mrf.mxu0
    %v2003 = vadd.f32 %v1976, %v2002
    %2004 = vdwg.mxu0
    %2005 = vmatpush.msra.mxu0 %v1972
    %2006 = vmatpush.msra.mxu0 %v1969
    %2007 = vmatpush.msra.mxu0 %v1966
    %2008 = vmatpush.msra.mxu0 %v1963
    %2009 = vmatpush.msra.mxu0 %v1960
    %2010 = vmatpush.msra.mxu0 %v1957
    %2011 = vmatpush.msra.mxu0 %v1954
    %2012 = vmatpush.msra.mxu0 %v1951
    %2013 = vmatpush.msra.mxu0 %v1948
    %2014 = vmatpush.msra.mxu0 %v1945
    %2015 = vmatpush.msra.mxu0 %v1942
    %2016 = vmatpush.msra.mxu0 %v1939
    %2017 = vmatpush.msra.mxu0 %v1936
    %2018 = vmatpush.msra.mxu0 %v1933
    %2019 = vmatpush.msra.mxu0 %v1930
    %2020 = vmatpush.msra.mxu0 %v1927
    %2021 = vmatmul.f32.gmra.mxu0 %v620
    %v2022 = vpop.f32.mrf.mxu0
    %v2023 = vadd.f32 %v1977, %v2022
    %2024 = vmatmul.f32.gmra.mxu0 %v621
    %v2025 = vpop.f32.mrf.mxu0
    %v2026 = vadd.f32 %v1977, %v2025
    %2027 = vdwg.mxu0
    %2028 = vmatpush.msra.mxu0 %v1973
    %2029 = vmatpush.msra.mxu0 %v1970
    %2030 = vmatpush.msra.mxu0 %v1967
    %2031 = vmatpush.msra.mxu0 %v1964
    %2032 = vmatpush.msra.mxu0 %v1961
    %2033 = vmatpush.msra.mxu0 %v1958
    %2034 = vmatpush.msra.mxu0 %v1955
    %2035 = vmatpush.msra.mxu0 %v1952
    %2036 = vmatpush.msra.mxu0 %v1949
    %2037 = vmatpush.msra.mxu0 %v1946
    %2038 = vmatpush.msra.mxu0 %v1943
    %2039 = vmatpush.msra.mxu0 %v1940
    %2040 = vmatpush.msra.mxu0 %v1937
    %2041 = vmatpush.msra.mxu0 %v1934
    %2042 = vmatpush.msra.mxu0 %v1931
    %2043 = vmatpush.msra.mxu0 %v1928
    %2044 = vmatmul.f32.gmra.mxu0 %v620
    %v2045 = vpop.f32.mrf.mxu0
    %v2046 = vadd.f32 %v1978, %v2045
    %2047 = vmatmul.f32.gmra.mxu0 %v621
    %v2048 = vpop.f32.mrf.mxu0
    %v2049 = vadd.f32 %v1978, %v2048
    %2050 = vdwg.mxu0
    %v2051 = vadd.f32 %v1875, %v2000
    %v2052 = vadd.f32 %v1878, %v2003
    %v2053 = vxor.u32 %v2051, 2147483648
    %v2054 = vxor.u32 %v2052, 2147483648
    %v2055 = vmul.f32 %v2053, 1.442695
    %v2056 = vpow.pop %v2055
    %v2057 = vmul.f32 %v2054, 1.442695
    %v2058 = vpow.pop %v2057
    %v2059 = vadd.f32 %v2056, 1.0
    %v2060 = vadd.f32 %v2058, 1.0
    %v2061 = vrcp.pop %v2059
    %v2062 = vmul.f32 %v2059, %v2061
    %v2063 = vsub.f32 1.0, %v2062
    %v2064 = vmul.f32 %v2061, %v2063
    %v2065 = vadd.f32 %v2061, %v2064
    %vm2066 = vweird.f32 %v2059
    %vm2067 = vweird.f32 %v2061
    %vm2068 = vmor %vm2066, %vm2067
    %v2069 = vsel %vm2068, %v2061, %v2065
    %v2070 = vand.u32 2147483647, %v2059
    %vm2071 = vcmp.eq.f32.partialorder %v2070, 8.507059e+37
    %v2072 = vand.u32 %v2059, 2147483648
    %v2073 = vor.u32 1.1754944e-38, %v2072
    %v2074 = vsel %vm2071, %v2073, %v2069
    %v2075 = vmul.f32 1.0, %v2074
    %v2076 = vrcp.pop %v2060
    %v2077 = vmul.f32 %v2060, %v2076
    %v2078 = vsub.f32 1.0, %v2077
    %v2079 = vmul.f32 %v2076, %v2078
    %v2080 = vadd.f32 %v2076, %v2079
    %vm2081 = vweird.f32 %v2060
    %vm2082 = vweird.f32 %v2076
    %vm2083 = vmor %vm2081, %vm2082
    %v2084 = vsel %vm2083, %v2076, %v2080
    %v2085 = vand.u32 2147483647, %v2060
    %vm2086 = vcmp.eq.f32.partialorder %v2085, 8.507059e+37
    %v2087 = vand.u32 %v2060, 2147483648
    %v2088 = vor.u32 1.1754944e-38, %v2087
    %v2089 = vsel %vm2086, %v2088, %v2084
    %v2090 = vmul.f32 1.0, %v2089
    %v2091 = vadd.f32 %v1898, %v2023
    %v2092 = vadd.f32 %v1901, %v2026
    %v2093 = vxor.u32 %v2091, 2147483648
    %v2094 = vxor.u32 %v2092, 2147483648
    %v2095 = vmul.f32 %v2093, 1.442695
    %v2096 = vpow.pop %v2095
    %v2097 = vmul.f32 %v2094, 1.442695
    %v2098 = vpow.pop %v2097
    %v2099 = vadd.f32 %v2096, 1.0
    %v2100 = vadd.f32 %v2098, 1.0
    %v2101 = vrcp.pop %v2099
    %v2102 = vmul.f32 %v2099, %v2101
    %v2103 = vsub.f32 1.0, %v2102
    %v2104 = vmul.f32 %v2101, %v2103
    %v2105 = vadd.f32 %v2101, %v2104
    %vm2106 = vweird.f32 %v2099
    %vm2107 = vweird.f32 %v2101
    %vm2108 = vmor %vm2106, %vm2107
    %v2109 = vsel %vm2108, %v2101, %v2105
    %v2110 = vand.u32 2147483647, %v2099
    %vm2111 = vcmp.eq.f32.partialorder %v2110, 8.507059e+37
    %v2112 = vand.u32 %v2099, 2147483648
    %v2113 = vor.u32 1.1754944e-38, %v2112
    %v2114 = vsel %vm2111, %v2113, %v2109
    %v2115 = vmul.f32 1.0, %v2114
    %v2116 = vrcp.pop %v2100
    %v2117 = vmul.f32 %v2100, %v2116
    %v2118 = vsub.f32 1.0, %v2117
    %v2119 = vmul.f32 %v2116, %v2118
    %v2120 = vadd.f32 %v2116, %v2119
    %vm2121 = vweird.f32 %v2100
    %vm2122 = vweird.f32 %v2116
    %vm2123 = vmor %vm2121, %vm2122
    %v2124 = vsel %vm2123, %v2116, %v2120
    %v2125 = vand.u32 2147483647, %v2100
    %vm2126 = vcmp.eq.f32.partialorder %v2125, 8.507059e+37
    %v2127 = vand.u32 %v2100, 2147483648
    %v2128 = vor.u32 1.1754944e-38, %v2127
    %v2129 = vsel %vm2126, %v2128, %v2124
    %v2130 = vmul.f32 1.0, %v2129
    %v2131 = vmul.f32 %v2075, %v2046
    %v2132 = vmul.f32 %v2090, %v2049
    %v2133 = vadd.f32 %v1921, %v2131
    %v2134 = vadd.f32 %v1924, %v2132
    %v2135 = vtanh.pop %v2133
    %v2136 = vtanh.pop %v2134
    %v2137 = vsub.f32 1.0, %v2115
    %v2138 = vsub.f32 1.0, %v2130
    %v2139 = vmul.f32 %v2137, %v2135
    %v2140 = vmul.f32 %v2138, %v2136
    %v2141 = vmul.f32 %v2115, %v620
    %v2142 = vmul.f32 %v2130, %v621
    %v2143 = vadd.f32 %v2139, %v2141
    %v2144 = vadd.f32 %v2140, %v2142
    %v2145 = vld [vmem:[#allocation25] sm:$0xff]
    %v2146 = vld [vmem:[#allocation25 + $0x8] sm:$0xff]
    %v2147 = vld [vmem:[#allocation25 + $0x10] sm:$0xff]
    %v2148 = vld [vmem:[#allocation25 + $0x18] sm:$0xff]
    %v2149 = vld [vmem:[#allocation25 + $0x20] sm:$0xff]
    %v2150 = vld [vmem:[#allocation25 + $0x28] sm:$0xff]
    %v2151 = vld [vmem:[#allocation25 + $0x30] sm:$0xff]
    %v2152 = vld [vmem:[#allocation25 + $0x38] sm:$0xff]
    %v2153 = vld [vmem:[#allocation25 + $0x40] sm:$0xff]
    %v2154 = vld [vmem:[#allocation25 + $0x48] sm:$0xff]
    %v2155 = vld [vmem:[#allocation25 + $0x50] sm:$0xff]
    %v2156 = vld [vmem:[#allocation25 + $0x58] sm:$0xff]
    %v2157 = vld [vmem:[#allocation25 + $0x60] sm:$0xff]
    %v2158 = vld [vmem:[#allocation25 + $0x68] sm:$0xff]
    %v2159 = vld [vmem:[#allocation25 + $0x70] sm:$0xff]
    %v2160 = vld [vmem:[#allocation25 + $0x78] sm:$0xff]
    %v2161 = vld [vmem:[%s41] sm:$0x1]
    %v2163 = vperm.slane %v2161, 0
    %2165 = vmatpush.msra.mxu0 %v2160
    %2166 = vmatpush.msra.mxu0 %v2159
    %2167 = vmatpush.msra.mxu0 %v2158
    %2168 = vmatpush.msra.mxu0 %v2157
    %2169 = vmatpush.msra.mxu0 %v2156
    %2170 = vmatpush.msra.mxu0 %v2155
    %2171 = vmatpush.msra.mxu0 %v2154
    %2172 = vmatpush.msra.mxu0 %v2153
    %2173 = vmatpush.msra.mxu0 %v2152
    %2174 = vmatpush.msra.mxu0 %v2151
    %2175 = vmatpush.msra.mxu0 %v2150
    %2176 = vmatpush.msra.mxu0 %v2149
    %2177 = vmatpush.msra.mxu0 %v2148
    %2178 = vmatpush.msra.mxu0 %v2147
    %2179 = vmatpush.msra.mxu0 %v2146
    %2180 = vmatpush.msra.mxu0 %v2145
    %2181 = vmatmul.f32.gmra.mxu0 %v622
    %v2182 = vpop.f32.mrf.mxu0
    %v2183 = vadd.f32 %v2163, %v2182
    %2184 = vmatmul.f32.gmra.mxu0 %v623
    %v2185 = vpop.f32.mrf.mxu0
    %v2186 = vadd.f32 %v2163, %v2185
    %2187 = vmatmul.f32.gmra.mxu0 %v624
    %v2188 = vpop.f32.mrf.mxu0
    %v2189 = vadd.f32 %v2163, %v2188
    %2190 = vdwg.mxu0
    %v2191 = vmax.f32 %v2183, 0.0
    %v2192 = vmax.f32 %v2186, 0.0
    %v2193 = vmax.f32 %v2189, 0.0
    %v2194 = vld [vmem:[#allocation26] sm:$0xff]
    %v2195 = vld [vmem:[#allocation26 + $0x8] sm:$0xff]
    %v2196 = vld [vmem:[#allocation26 + $0x10] sm:$0xff]
    %v2197 = vld [vmem:[#allocation26 + $0x18] sm:$0xff]
    %v2198 = vld [vmem:[#allocation26 + $0x20] sm:$0xff]
    %v2199 = vld [vmem:[#allocation26 + $0x28] sm:$0xff]
    %v2200 = vld [vmem:[#allocation26 + $0x30] sm:$0xff]
    %v2201 = vld [vmem:[#allocation26 + $0x38] sm:$0xff]
    %v2202 = vld [vmem:[#allocation26 + $0x40] sm:$0xff]
    %v2203 = vld [vmem:[#allocation26 + $0x48] sm:$0xff]
    %v2204 = vld [vmem:[#allocation26 + $0x50] sm:$0xff]
    %v2205 = vld [vmem:[#allocation26 + $0x58] sm:$0xff]
    %v2206 = vld [vmem:[#allocation26 + $0x60] sm:$0xff]
    %v2207 = vld [vmem:[#allocation26 + $0x68] sm:$0xff]
    %v2208 = vld [vmem:[#allocation26 + $0x70] sm:$0xff]
    %v2209 = vld [vmem:[#allocation26 + $0x78] sm:$0xff]
    %v2210 = vld [vmem:[#allocation26 + $0x80] sm:$0xff]
    %v2211 = vld [vmem:[#allocation26 + $0x88] sm:$0xff]
    %v2212 = vld [vmem:[#allocation26 + $0x90] sm:$0xff]
    %v2213 = vld [vmem:[#allocation26 + $0x98] sm:$0xff]
    %v2214 = vld [vmem:[#allocation26 + $0xa0] sm:$0xff]
    %v2215 = vld [vmem:[#allocation26 + $0xa8] sm:$0xff]
    %v2216 = vld [vmem:[#allocation26 + $0xb0] sm:$0xff]
    %v2217 = vld [vmem:[#allocation26 + $0xb8] sm:$0xff]
    %v2218 = vld [vmem:[#allocation26 + $0xc0] sm:$0xff]
    %v2219 = vld [vmem:[#allocation26 + $0xc8] sm:$0xff]
    %v2220 = vld [vmem:[#allocation26 + $0xd0] sm:$0xff]
    %v2221 = vld [vmem:[#allocation26 + $0xd8] sm:$0xff]
    %v2222 = vld [vmem:[#allocation26 + $0xe0] sm:$0xff]
    %v2223 = vld [vmem:[#allocation26 + $0xe8] sm:$0xff]
    %v2224 = vld [vmem:[#allocation26 + $0xf0] sm:$0xff]
    %v2225 = vld [vmem:[#allocation26 + $0xf8] sm:$0xff]
    %v2226 = vld [vmem:[#allocation26 + $0x100] sm:$0xff]
    %v2227 = vld [vmem:[#allocation26 + $0x108] sm:$0xff]
    %v2228 = vld [vmem:[#allocation26 + $0x110] sm:$0xff]
    %v2229 = vld [vmem:[#allocation26 + $0x118] sm:$0xff]
    %v2230 = vld [vmem:[#allocation26 + $0x120] sm:$0xff]
    %v2231 = vld [vmem:[#allocation26 + $0x128] sm:$0xff]
    %v2232 = vld [vmem:[#allocation26 + $0x130] sm:$0xff]
    %v2233 = vld [vmem:[#allocation26 + $0x138] sm:$0xff]
    %v2234 = vld [vmem:[#allocation26 + $0x140] sm:$0xff]
    %v2235 = vld [vmem:[#allocation26 + $0x148] sm:$0xff]
    %v2236 = vld [vmem:[#allocation26 + $0x150] sm:$0xff]
    %v2237 = vld [vmem:[#allocation26 + $0x158] sm:$0xff]
    %v2238 = vld [vmem:[#allocation26 + $0x160] sm:$0xff]
    %v2239 = vld [vmem:[#allocation26 + $0x168] sm:$0xff]
    %v2240 = vld [vmem:[#allocation26 + $0x170] sm:$0xff]
    %v2241 = vld [vmem:[#allocation26 + $0x178] sm:$0xff]
    %v2242 = vld [vmem:[#allocation26 + $0x180] sm:$0xff]
    %v2243 = vld [vmem:[#allocation26 + $0x188] sm:$0xff]
    %v2244 = vld [vmem:[#allocation26 + $0x190] sm:$0xff]
    %v2245 = vld [vmem:[#allocation26 + $0x198] sm:$0xff]
    %v2246 = vld [vmem:[#allocation26 + $0x1a0] sm:$0xff]
    %v2247 = vld [vmem:[#allocation26 + $0x1a8] sm:$0xff]
    %v2248 = vld [vmem:[#allocation26 + $0x1b0] sm:$0xff]
    %v2249 = vld [vmem:[#allocation26 + $0x1b8] sm:$0xff]
    %v2250 = vld [vmem:[#allocation26 + $0x1c0] sm:$0xff]
    %v2251 = vld [vmem:[#allocation26 + $0x1c8] sm:$0xff]
    %v2252 = vld [vmem:[#allocation26 + $0x1d0] sm:$0xff]
    %v2253 = vld [vmem:[#allocation26 + $0x1d8] sm:$0xff]
    %v2254 = vld [vmem:[#allocation26 + $0x1e0] sm:$0xff]
    %v2255 = vld [vmem:[#allocation26 + $0x1e8] sm:$0xff]
    %v2256 = vld [vmem:[#allocation26 + $0x1f0] sm:$0xff]
    %v2257 = vld [vmem:[#allocation26 + $0x1f8] sm:$0xff]
    %v2258 = vld [vmem:[#allocation26 + $0x200] sm:$0xff]
    %v2259 = vld [vmem:[#allocation26 + $0x208] sm:$0xff]
    %v2260 = vld [vmem:[#allocation26 + $0x210] sm:$0xff]
    %v2261 = vld [vmem:[#allocation26 + $0x218] sm:$0xff]
    %v2262 = vld [vmem:[#allocation26 + $0x220] sm:$0xff]
    %v2263 = vld [vmem:[#allocation26 + $0x228] sm:$0xff]
    %v2264 = vld [vmem:[#allocation26 + $0x230] sm:$0xff]
    %v2265 = vld [vmem:[#allocation26 + $0x238] sm:$0xff]
    %v2266 = vld [vmem:[#allocation26 + $0x240] sm:$0xff]
    %v2267 = vld [vmem:[#allocation26 + $0x248] sm:$0xff]
    %v2268 = vld [vmem:[#allocation26 + $0x250] sm:$0xff]
    %v2269 = vld [vmem:[#allocation26 + $0x258] sm:$0xff]
    %v2270 = vld [vmem:[#allocation26 + $0x260] sm:$0xff]
    %v2271 = vld [vmem:[#allocation26 + $0x268] sm:$0xff]
    %v2272 = vld [vmem:[#allocation26 + $0x270] sm:$0xff]
    %v2273 = vld [vmem:[#allocation26 + $0x278] sm:$0xff]
    %v2274 = vld [vmem:[#allocation26 + $0x280] sm:$0xff]
    %v2275 = vld [vmem:[#allocation26 + $0x288] sm:$0xff]
    %v2276 = vld [vmem:[#allocation26 + $0x290] sm:$0xff]
    %v2277 = vld [vmem:[#allocation26 + $0x298] sm:$0xff]
    %v2278 = vld [vmem:[#allocation26 + $0x2a0] sm:$0xff]
    %v2279 = vld [vmem:[#allocation26 + $0x2a8] sm:$0xff]
    %v2280 = vld [vmem:[#allocation26 + $0x2b0] sm:$0xff]
    %v2281 = vld [vmem:[#allocation26 + $0x2b8] sm:$0xff]
    %v2282 = vld [vmem:[#allocation26 + $0x2c0] sm:$0xff]
    %v2283 = vld [vmem:[#allocation26 + $0x2c8] sm:$0xff]
    %v2284 = vld [vmem:[#allocation26 + $0x2d0] sm:$0xff]
    %v2285 = vld [vmem:[#allocation26 + $0x2d8] sm:$0xff]
    %v2286 = vld [vmem:[#allocation26 + $0x2e0] sm:$0xff]
    %v2287 = vld [vmem:[#allocation26 + $0x2e8] sm:$0xff]
    %v2288 = vld [vmem:[#allocation26 + $0x2f0] sm:$0xff]
    %v2289 = vld [vmem:[#allocation26 + $0x2f8] sm:$0xff]
    %v2290 = vld [vmem:[#allocation26 + $0x300] sm:$0xff]
    %v2291 = vld [vmem:[#allocation26 + $0x308] sm:$0xff]
    %v2292 = vld [vmem:[#allocation26 + $0x310] sm:$0xff]
    %v2293 = vld [vmem:[#allocation26 + $0x318] sm:$0xff]
    %v2294 = vld [vmem:[#allocation26 + $0x320] sm:$0xff]
    %v2295 = vld [vmem:[#allocation26 + $0x328] sm:$0xff]
    %v2296 = vld [vmem:[#allocation26 + $0x330] sm:$0xff]
    %v2297 = vld [vmem:[#allocation26 + $0x338] sm:$0xff]
    %v2298 = vld [vmem:[#allocation26 + $0x340] sm:$0xff]
    %v2299 = vld [vmem:[#allocation26 + $0x348] sm:$0xff]
    %v2300 = vld [vmem:[#allocation26 + $0x350] sm:$0xff]
    %v2301 = vld [vmem:[#allocation26 + $0x358] sm:$0xff]
    %v2302 = vld [vmem:[#allocation26 + $0x360] sm:$0xff]
    %v2303 = vld [vmem:[#allocation26 + $0x368] sm:$0xff]
    %v2304 = vld [vmem:[#allocation26 + $0x370] sm:$0xff]
    %v2305 = vld [vmem:[#allocation26 + $0x378] sm:$0xff]
    %v2306 = vld [vmem:[#allocation26 + $0x380] sm:$0xff]
    %v2307 = vld [vmem:[#allocation26 + $0x388] sm:$0xff]
    %v2308 = vld [vmem:[#allocation26 + $0x390] sm:$0xff]
    %v2309 = vld [vmem:[#allocation26 + $0x398] sm:$0xff]
    %v2310 = vld [vmem:[#allocation26 + $0x3a0] sm:$0xff]
    %v2311 = vld [vmem:[#allocation26 + $0x3a8] sm:$0xff]
    %v2312 = vld [vmem:[#allocation26 + $0x3b0] sm:$0xff]
    %v2313 = vld [vmem:[#allocation26 + $0x3b8] sm:$0xff]
    %v2314 = vld [vmem:[#allocation26 + $0x3c0] sm:$0xff]
    %v2315 = vld [vmem:[#allocation26 + $0x3c8] sm:$0xff]
    %v2316 = vld [vmem:[#allocation26 + $0x3d0] sm:$0xff]
    %v2317 = vld [vmem:[#allocation26 + $0x3d8] sm:$0xff]
    %v2318 = vld [vmem:[#allocation26 + $0x3e0] sm:$0xff]
    %v2319 = vld [vmem:[#allocation26 + $0x3e8] sm:$0xff]
    %v2320 = vld [vmem:[#allocation26 + $0x3f0] sm:$0xff]
    %v2321 = vld [vmem:[#allocation26 + $0x3f8] sm:$0xff]
    %v2322 = vld [vmem:[#allocation26 + $0x400] sm:$0xff]
    %v2323 = vld [vmem:[#allocation26 + $0x408] sm:$0xff]
    %v2324 = vld [vmem:[#allocation26 + $0x410] sm:$0xff]
    %v2325 = vld [vmem:[#allocation26 + $0x418] sm:$0xff]
    %v2326 = vld [vmem:[#allocation26 + $0x420] sm:$0xff]
    %v2327 = vld [vmem:[#allocation26 + $0x428] sm:$0xff]
    %v2328 = vld [vmem:[#allocation26 + $0x430] sm:$0xff]
    %v2329 = vld [vmem:[#allocation26 + $0x438] sm:$0xff]
    %v2330 = vld [vmem:[#allocation26 + $0x440] sm:$0xff]
    %v2331 = vld [vmem:[#allocation26 + $0x448] sm:$0xff]
    %v2332 = vld [vmem:[#allocation26 + $0x450] sm:$0xff]
    %v2333 = vld [vmem:[#allocation26 + $0x458] sm:$0xff]
    %v2334 = vld [vmem:[#allocation26 + $0x460] sm:$0xff]
    %v2335 = vld [vmem:[#allocation26 + $0x468] sm:$0xff]
    %v2336 = vld [vmem:[#allocation26 + $0x470] sm:$0xff]
    %v2337 = vld [vmem:[#allocation26 + $0x478] sm:$0xff]
    %v2338 = vld [vmem:[#allocation26 + $0x480] sm:$0xff]
    %v2339 = vld [vmem:[#allocation26 + $0x488] sm:$0xff]
    %v2340 = vld [vmem:[#allocation26 + $0x490] sm:$0xff]
    %v2341 = vld [vmem:[#allocation26 + $0x498] sm:$0xff]
    %v2342 = vld [vmem:[#allocation26 + $0x4a0] sm:$0xff]
    %v2343 = vld [vmem:[#allocation26 + $0x4a8] sm:$0xff]
    %v2344 = vld [vmem:[#allocation26 + $0x4b0] sm:$0xff]
    %v2345 = vld [vmem:[#allocation26 + $0x4b8] sm:$0xff]
    %v2346 = vld [vmem:[#allocation26 + $0x4c0] sm:$0xff]
    %v2347 = vld [vmem:[#allocation26 + $0x4c8] sm:$0xff]
    %v2348 = vld [vmem:[#allocation26 + $0x4d0] sm:$0xff]
    %v2349 = vld [vmem:[#allocation26 + $0x4d8] sm:$0xff]
    %v2350 = vld [vmem:[#allocation26 + $0x4e0] sm:$0xff]
    %v2351 = vld [vmem:[#allocation26 + $0x4e8] sm:$0xff]
    %v2352 = vld [vmem:[#allocation26 + $0x4f0] sm:$0xff]
    %v2353 = vld [vmem:[#allocation26 + $0x4f8] sm:$0xff]
    %v2354 = vld [vmem:[#allocation26 + $0x500] sm:$0xff]
    %v2355 = vld [vmem:[#allocation26 + $0x508] sm:$0xff]
    %v2356 = vld [vmem:[#allocation26 + $0x510] sm:$0xff]
    %v2357 = vld [vmem:[#allocation26 + $0x518] sm:$0xff]
    %v2358 = vld [vmem:[#allocation26 + $0x520] sm:$0xff]
    %v2359 = vld [vmem:[#allocation26 + $0x528] sm:$0xff]
    %v2360 = vld [vmem:[#allocation26 + $0x530] sm:$0xff]
    %v2361 = vld [vmem:[#allocation26 + $0x538] sm:$0xff]
    %v2362 = vld [vmem:[#allocation26 + $0x540] sm:$0xff]
    %v2363 = vld [vmem:[#allocation26 + $0x548] sm:$0xff]
    %v2364 = vld [vmem:[#allocation26 + $0x550] sm:$0xff]
    %v2365 = vld [vmem:[#allocation26 + $0x558] sm:$0xff]
    %v2366 = vld [vmem:[#allocation26 + $0x560] sm:$0xff]
    %v2367 = vld [vmem:[#allocation26 + $0x568] sm:$0xff]
    %v2368 = vld [vmem:[#allocation26 + $0x570] sm:$0xff]
    %v2369 = vld [vmem:[#allocation26 + $0x578] sm:$0xff]
    %v2370 = vld [vmem:[#allocation26 + $0x580] sm:$0xff]
    %v2371 = vld [vmem:[#allocation26 + $0x588] sm:$0xff]
    %v2372 = vld [vmem:[#allocation26 + $0x590] sm:$0xff]
    %v2373 = vld [vmem:[#allocation26 + $0x598] sm:$0xff]
    %v2374 = vld [vmem:[#allocation26 + $0x5a0] sm:$0xff]
    %v2375 = vld [vmem:[#allocation26 + $0x5a8] sm:$0xff]
    %v2376 = vld [vmem:[#allocation26 + $0x5b0] sm:$0xff]
    %v2377 = vld [vmem:[#allocation26 + $0x5b8] sm:$0xff]
    %v2378 = vld [vmem:[#allocation26 + $0x5c0] sm:$0xff]
    %v2379 = vld [vmem:[#allocation26 + $0x5c8] sm:$0xff]
    %v2380 = vld [vmem:[#allocation26 + $0x5d0] sm:$0xff]
    %v2381 = vld [vmem:[#allocation26 + $0x5d8] sm:$0xff]
    %v2382 = vld [vmem:[#allocation26 + $0x5e0] sm:$0xff]
    %v2383 = vld [vmem:[#allocation26 + $0x5e8] sm:$0xff]
    %v2384 = vld [vmem:[#allocation26 + $0x5f0] sm:$0xff]
    %v2385 = vld [vmem:[#allocation26 + $0x5f8] sm:$0xff]
    %v2386 = vld [vmem:[#allocation26 + $0x600] sm:$0xff]
    %v2387 = vld [vmem:[#allocation26 + $0x608] sm:$0xff]
    %v2388 = vld [vmem:[#allocation26 + $0x610] sm:$0xff]
    %v2389 = vld [vmem:[#allocation26 + $0x618] sm:$0xff]
    %v2390 = vld [vmem:[#allocation26 + $0x620] sm:$0xff]
    %v2391 = vld [vmem:[#allocation26 + $0x628] sm:$0xff]
    %v2392 = vld [vmem:[#allocation26 + $0x630] sm:$0xff]
    %v2393 = vld [vmem:[#allocation26 + $0x638] sm:$0xff]
    %v2394 = vld [vmem:[#allocation26 + $0x640] sm:$0xff]
    %v2395 = vld [vmem:[#allocation26 + $0x648] sm:$0xff]
    %v2396 = vld [vmem:[#allocation26 + $0x650] sm:$0xff]
    %v2397 = vld [vmem:[#allocation26 + $0x658] sm:$0xff]
    %v2398 = vld [vmem:[#allocation26 + $0x660] sm:$0xff]
    %v2399 = vld [vmem:[#allocation26 + $0x668] sm:$0xff]
    %v2400 = vld [vmem:[#allocation26 + $0x670] sm:$0xff]
    %v2401 = vld [vmem:[#allocation26 + $0x678] sm:$0xff]
    %v2402 = vld [vmem:[#allocation26 + $0x680] sm:$0xff]
    %v2403 = vld [vmem:[#allocation26 + $0x688] sm:$0xff]
    %v2404 = vld [vmem:[#allocation26 + $0x690] sm:$0xff]
    %v2405 = vld [vmem:[#allocation26 + $0x698] sm:$0xff]
    %v2406 = vld [vmem:[#allocation26 + $0x6a0] sm:$0xff]
    %v2407 = vld [vmem:[#allocation26 + $0x6a8] sm:$0xff]
    %v2408 = vld [vmem:[#allocation26 + $0x6b0] sm:$0xff]
    %v2409 = vld [vmem:[#allocation26 + $0x6b8] sm:$0xff]
    %v2410 = vld [vmem:[#allocation26 + $0x6c0] sm:$0xff]
    %v2411 = vld [vmem:[#allocation26 + $0x6c8] sm:$0xff]
    %v2412 = vld [vmem:[#allocation26 + $0x6d0] sm:$0xff]
    %v2413 = vld [vmem:[#allocation26 + $0x6d8] sm:$0xff]
    %v2414 = vld [vmem:[#allocation26 + $0x6e0] sm:$0xff]
    %v2415 = vld [vmem:[#allocation26 + $0x6e8] sm:$0xff]
    %v2416 = vld [vmem:[#allocation26 + $0x6f0] sm:$0xff]
    %v2417 = vld [vmem:[#allocation26 + $0x6f8] sm:$0xff]
    %v2418 = vld [vmem:[#allocation26 + $0x700] sm:$0xff]
    %v2419 = vld [vmem:[#allocation26 + $0x708] sm:$0xff]
    %v2420 = vld [vmem:[#allocation26 + $0x710] sm:$0xff]
    %v2421 = vld [vmem:[#allocation26 + $0x718] sm:$0xff]
    %v2422 = vld [vmem:[#allocation26 + $0x720] sm:$0xff]
    %v2423 = vld [vmem:[#allocation26 + $0x728] sm:$0xff]
    %v2424 = vld [vmem:[#allocation26 + $0x730] sm:$0xff]
    %v2425 = vld [vmem:[#allocation26 + $0x738] sm:$0xff]
    %v2426 = vld [vmem:[#allocation26 + $0x740] sm:$0xff]
    %v2427 = vld [vmem:[#allocation26 + $0x748] sm:$0xff]
    %v2428 = vld [vmem:[#allocation26 + $0x750] sm:$0xff]
    %v2429 = vld [vmem:[#allocation26 + $0x758] sm:$0xff]
    %v2430 = vld [vmem:[#allocation26 + $0x760] sm:$0xff]
    %v2431 = vld [vmem:[#allocation26 + $0x768] sm:$0xff]
    %v2432 = vld [vmem:[#allocation26 + $0x770] sm:$0xff]
    %v2433 = vld [vmem:[#allocation26 + $0x778] sm:$0xff]
    %v2434 = vld [vmem:[#allocation26 + $0x780] sm:$0xff]
    %v2435 = vld [vmem:[#allocation26 + $0x788] sm:$0xff]
    %v2436 = vld [vmem:[#allocation26 + $0x790] sm:$0xff]
    %v2437 = vld [vmem:[#allocation26 + $0x798] sm:$0xff]
    %v2438 = vld [vmem:[#allocation26 + $0x7a0] sm:$0xff]
    %v2439 = vld [vmem:[#allocation26 + $0x7a8] sm:$0xff]
    %v2440 = vld [vmem:[#allocation26 + $0x7b0] sm:$0xff]
    %v2441 = vld [vmem:[#allocation26 + $0x7b8] sm:$0xff]
    %v2442 = vld [vmem:[#allocation26 + $0x7c0] sm:$0xff]
    %v2443 = vld [vmem:[#allocation26 + $0x7c8] sm:$0xff]
    %v2444 = vld [vmem:[#allocation26 + $0x7d0] sm:$0xff]
    %v2445 = vld [vmem:[#allocation26 + $0x7d8] sm:$0xff]
    %v2446 = vld [vmem:[#allocation26 + $0x7e0] sm:$0xff]
    %v2447 = vld [vmem:[#allocation26 + $0x7e8] sm:$0xff]
    %v2448 = vld [vmem:[#allocation26 + $0x7f0] sm:$0xff]
    %v2449 = vld [vmem:[#allocation26 + $0x7f8] sm:$0xff]
    %2450 = vmatpush.msra.mxu0 %v2434
    %2451 = vmatpush.msra.mxu0 %v2418
    %2452 = vmatpush.msra.mxu0 %v2402
    %2453 = vmatpush.msra.mxu0 %v2386
    %2454 = vmatpush.msra.mxu0 %v2370
    %2455 = vmatpush.msra.mxu0 %v2354
    %2456 = vmatpush.msra.mxu0 %v2338
    %2457 = vmatpush.msra.mxu0 %v2322
    %2458 = vmatpush.msra.mxu0 %v2306
    %2459 = vmatpush.msra.mxu0 %v2290
    %2460 = vmatpush.msra.mxu0 %v2274
    %2461 = vmatpush.msra.mxu0 %v2258
    %2462 = vmatpush.msra.mxu0 %v2242
    %2463 = vmatpush.msra.mxu0 %v2226
    %2464 = vmatpush.msra.mxu0 %v2210
    %2465 = vmatpush.msra.mxu0 %v2194
    %2466 = vmatmul.f32.gmra.mxu0 %v2191
    %v2467 = vpop.f32.mrf.mxu0
    %v2468 = vadd.f32 0.0, %v2467
    %2469 = vmatmul.f32.gmra.mxu0 %v2192
    %v2470 = vpop.f32.mrf.mxu0
    %v2471 = vadd.f32 0.0, %v2470
    %2472 = vmatmul.f32.gmra.mxu0 %v2193
    %v2473 = vpop.f32.mrf.mxu0
    %v2474 = vadd.f32 0.0, %v2473
    %2475 = vdwg.mxu0
    %2476 = vmatpush.msra.mxu0 %v2435
    %2477 = vmatpush.msra.mxu0 %v2419
    %2478 = vmatpush.msra.mxu0 %v2403
    %2479 = vmatpush.msra.mxu0 %v2387
    %2480 = vmatpush.msra.mxu0 %v2371
    %2481 = vmatpush.msra.mxu0 %v2355
    %2482 = vmatpush.msra.mxu0 %v2339
    %2483 = vmatpush.msra.mxu0 %v2323
    %2484 = vmatpush.msra.mxu0 %v2307
    %2485 = vmatpush.msra.mxu0 %v2291
    %2486 = vmatpush.msra.mxu0 %v2275
    %2487 = vmatpush.msra.mxu0 %v2259
    %2488 = vmatpush.msra.mxu0 %v2243
    %2489 = vmatpush.msra.mxu0 %v2227
    %2490 = vmatpush.msra.mxu0 %v2211
    %2491 = vmatpush.msra.mxu0 %v2195
    %2492 = vmatmul.f32.gmra.mxu0 %v2191
    %v2493 = vpop.f32.mrf.mxu0
    %v2494 = vadd.f32 0.0, %v2493
    %2495 = vmatmul.f32.gmra.mxu0 %v2192
    %v2496 = vpop.f32.mrf.mxu0
    %v2497 = vadd.f32 0.0, %v2496
    %2498 = vmatmul.f32.gmra.mxu0 %v2193
    %v2499 = vpop.f32.mrf.mxu0
    %v2500 = vadd.f32 0.0, %v2499
    %2501 = vdwg.mxu0
    %2502 = vmatpush.msra.mxu0 %v2436
    %2503 = vmatpush.msra.mxu0 %v2420
    %2504 = vmatpush.msra.mxu0 %v2404
    %2505 = vmatpush.msra.mxu0 %v2388
    %2506 = vmatpush.msra.mxu0 %v2372
    %2507 = vmatpush.msra.mxu0 %v2356
    %2508 = vmatpush.msra.mxu0 %v2340
    %2509 = vmatpush.msra.mxu0 %v2324
    %2510 = vmatpush.msra.mxu0 %v2308
    %2511 = vmatpush.msra.mxu0 %v2292
    %2512 = vmatpush.msra.mxu0 %v2276
    %2513 = vmatpush.msra.mxu0 %v2260
    %2514 = vmatpush.msra.mxu0 %v2244
    %2515 = vmatpush.msra.mxu0 %v2228
    %2516 = vmatpush.msra.mxu0 %v2212
    %2517 = vmatpush.msra.mxu0 %v2196
    %2518 = vmatmul.f32.gmra.mxu0 %v2191
    %v2519 = vpop.f32.mrf.mxu0
    %v2520 = vadd.f32 0.0, %v2519
    %2521 = vmatmul.f32.gmra.mxu0 %v2192
    %v2522 = vpop.f32.mrf.mxu0
    %v2523 = vadd.f32 0.0, %v2522
    %2524 = vmatmul.f32.gmra.mxu0 %v2193
    %v2525 = vpop.f32.mrf.mxu0
    %v2526 = vadd.f32 0.0, %v2525
    %2527 = vdwg.mxu0
    %2528 = vmatpush.msra.mxu0 %v2437
    %2529 = vmatpush.msra.mxu0 %v2421
    %2530 = vmatpush.msra.mxu0 %v2405
    %2531 = vmatpush.msra.mxu0 %v2389
    %2532 = vmatpush.msra.mxu0 %v2373
    %2533 = vmatpush.msra.mxu0 %v2357
    %2534 = vmatpush.msra.mxu0 %v2341
    %2535 = vmatpush.msra.mxu0 %v2325
    %2536 = vmatpush.msra.mxu0 %v2309
    %2537 = vmatpush.msra.mxu0 %v2293
    %2538 = vmatpush.msra.mxu0 %v2277
    %2539 = vmatpush.msra.mxu0 %v2261
    %2540 = vmatpush.msra.mxu0 %v2245
    %2541 = vmatpush.msra.mxu0 %v2229
    %2542 = vmatpush.msra.mxu0 %v2213
    %2543 = vmatpush.msra.mxu0 %v2197
    %2544 = vmatmul.f32.gmra.mxu0 %v2191
    %v2545 = vpop.f32.mrf.mxu0
    %v2546 = vadd.f32 0.0, %v2545
    %2547 = vmatmul.f32.gmra.mxu0 %v2192
    %v2548 = vpop.f32.mrf.mxu0
    %v2549 = vadd.f32 0.0, %v2548
    %2550 = vmatmul.f32.gmra.mxu0 %v2193
    %v2551 = vpop.f32.mrf.mxu0
    %v2552 = vadd.f32 0.0, %v2551
    %2553 = vdwg.mxu0
    %2554 = vmatpush.msra.mxu0 %v2438
    %2555 = vmatpush.msra.mxu0 %v2422
    %2556 = vmatpush.msra.mxu0 %v2406
    %2557 = vmatpush.msra.mxu0 %v2390
    %2558 = vmatpush.msra.mxu0 %v2374
    %2559 = vmatpush.msra.mxu0 %v2358
    %2560 = vmatpush.msra.mxu0 %v2342
    %2561 = vmatpush.msra.mxu0 %v2326
    %2562 = vmatpush.msra.mxu0 %v2310
    %2563 = vmatpush.msra.mxu0 %v2294
    %2564 = vmatpush.msra.mxu0 %v2278
    %2565 = vmatpush.msra.mxu0 %v2262
    %2566 = vmatpush.msra.mxu0 %v2246
    %2567 = vmatpush.msra.mxu0 %v2230
    %2568 = vmatpush.msra.mxu0 %v2214
    %2569 = vmatpush.msra.mxu0 %v2198
    %2570 = vmatmul.f32.gmra.mxu0 %v2191
    %v2571 = vpop.f32.mrf.mxu0
    %v2572 = vadd.f32 0.0, %v2571
    %2573 = vmatmul.f32.gmra.mxu0 %v2192
    %v2574 = vpop.f32.mrf.mxu0
    %v2575 = vadd.f32 0.0, %v2574
    %2576 = vmatmul.f32.gmra.mxu0 %v2193
    %v2577 = vpop.f32.mrf.mxu0
    %v2578 = vadd.f32 0.0, %v2577
    %2579 = vdwg.mxu0
    %2580 = vmatpush.msra.mxu0 %v2439
    %2581 = vmatpush.msra.mxu0 %v2423
    %2582 = vmatpush.msra.mxu0 %v2407
    %2583 = vmatpush.msra.mxu0 %v2391
    %2584 = vmatpush.msra.mxu0 %v2375
    %2585 = vmatpush.msra.mxu0 %v2359
    %2586 = vmatpush.msra.mxu0 %v2343
    %2587 = vmatpush.msra.mxu0 %v2327
    %2588 = vmatpush.msra.mxu0 %v2311
    %2589 = vmatpush.msra.mxu0 %v2295
    %2590 = vmatpush.msra.mxu0 %v2279
    %2591 = vmatpush.msra.mxu0 %v2263
    %2592 = vmatpush.msra.mxu0 %v2247
    %2593 = vmatpush.msra.mxu0 %v2231
    %2594 = vmatpush.msra.mxu0 %v2215
    %2595 = vmatpush.msra.mxu0 %v2199
    %2596 = vmatmul.f32.gmra.mxu0 %v2191
    %v2597 = vpop.f32.mrf.mxu0
    %v2598 = vadd.f32 0.0, %v2597
    %2599 = vmatmul.f32.gmra.mxu0 %v2192
    %v2600 = vpop.f32.mrf.mxu0
    %v2601 = vadd.f32 0.0, %v2600
    %2602 = vmatmul.f32.gmra.mxu0 %v2193
    %v2603 = vpop.f32.mrf.mxu0
    %v2604 = vadd.f32 0.0, %v2603
    %2605 = vdwg.mxu0
    %2606 = vmatpush.msra.mxu0 %v2440
    %2607 = vmatpush.msra.mxu0 %v2424
    %2608 = vmatpush.msra.mxu0 %v2408
    %2609 = vmatpush.msra.mxu0 %v2392
    %2610 = vmatpush.msra.mxu0 %v2376
    %2611 = vmatpush.msra.mxu0 %v2360
    %2612 = vmatpush.msra.mxu0 %v2344
    %2613 = vmatpush.msra.mxu0 %v2328
    %2614 = vmatpush.msra.mxu0 %v2312
    %2615 = vmatpush.msra.mxu0 %v2296
    %2616 = vmatpush.msra.mxu0 %v2280
    %2617 = vmatpush.msra.mxu0 %v2264
    %2618 = vmatpush.msra.mxu0 %v2248
    %2619 = vmatpush.msra.mxu0 %v2232
    %2620 = vmatpush.msra.mxu0 %v2216
    %2621 = vmatpush.msra.mxu0 %v2200
    %2622 = vmatmul.f32.gmra.mxu0 %v2191
    %v2623 = vpop.f32.mrf.mxu0
    %v2624 = vadd.f32 0.0, %v2623
    %2625 = vmatmul.f32.gmra.mxu0 %v2192
    %v2626 = vpop.f32.mrf.mxu0
    %v2627 = vadd.f32 0.0, %v2626
    %2628 = vmatmul.f32.gmra.mxu0 %v2193
    %v2629 = vpop.f32.mrf.mxu0
    %v2630 = vadd.f32 0.0, %v2629
    %2631 = vdwg.mxu0
    %2632 = vmatpush.msra.mxu0 %v2441
    %2633 = vmatpush.msra.mxu0 %v2425
    %2634 = vmatpush.msra.mxu0 %v2409
    %2635 = vmatpush.msra.mxu0 %v2393
    %2636 = vmatpush.msra.mxu0 %v2377
    %2637 = vmatpush.msra.mxu0 %v2361
    %2638 = vmatpush.msra.mxu0 %v2345
    %2639 = vmatpush.msra.mxu0 %v2329
    %2640 = vmatpush.msra.mxu0 %v2313
    %2641 = vmatpush.msra.mxu0 %v2297
    %2642 = vmatpush.msra.mxu0 %v2281
    %2643 = vmatpush.msra.mxu0 %v2265
    %2644 = vmatpush.msra.mxu0 %v2249
    %2645 = vmatpush.msra.mxu0 %v2233
    %2646 = vmatpush.msra.mxu0 %v2217
    %2647 = vmatpush.msra.mxu0 %v2201
    %2648 = vmatmul.f32.gmra.mxu0 %v2191
    %v2649 = vpop.f32.mrf.mxu0
    %v2650 = vadd.f32 0.0, %v2649
    %2651 = vmatmul.f32.gmra.mxu0 %v2192
    %v2652 = vpop.f32.mrf.mxu0
    %v2653 = vadd.f32 0.0, %v2652
    %2654 = vmatmul.f32.gmra.mxu0 %v2193
    %v2655 = vpop.f32.mrf.mxu0
    %v2656 = vadd.f32 0.0, %v2655
    %2657 = vdwg.mxu0
    %2658 = vmatpush.msra.mxu0 %v2442
    %2659 = vmatpush.msra.mxu0 %v2426
    %2660 = vmatpush.msra.mxu0 %v2410
    %2661 = vmatpush.msra.mxu0 %v2394
    %2662 = vmatpush.msra.mxu0 %v2378
    %2663 = vmatpush.msra.mxu0 %v2362
    %2664 = vmatpush.msra.mxu0 %v2346
    %2665 = vmatpush.msra.mxu0 %v2330
    %2666 = vmatpush.msra.mxu0 %v2314
    %2667 = vmatpush.msra.mxu0 %v2298
    %2668 = vmatpush.msra.mxu0 %v2282
    %2669 = vmatpush.msra.mxu0 %v2266
    %2670 = vmatpush.msra.mxu0 %v2250
    %2671 = vmatpush.msra.mxu0 %v2234
    %2672 = vmatpush.msra.mxu0 %v2218
    %2673 = vmatpush.msra.mxu0 %v2202
    %2674 = vmatmul.f32.gmra.mxu0 %v2191
    %v2675 = vpop.f32.mrf.mxu0
    %v2676 = vadd.f32 0.0, %v2675
    %2677 = vmatmul.f32.gmra.mxu0 %v2192
    %v2678 = vpop.f32.mrf.mxu0
    %v2679 = vadd.f32 0.0, %v2678
    %2680 = vmatmul.f32.gmra.mxu0 %v2193
    %v2681 = vpop.f32.mrf.mxu0
    %v2682 = vadd.f32 0.0, %v2681
    %2683 = vdwg.mxu0
    %2684 = vmatpush.msra.mxu0 %v2443
    %2685 = vmatpush.msra.mxu0 %v2427
    %2686 = vmatpush.msra.mxu0 %v2411
    %2687 = vmatpush.msra.mxu0 %v2395
    %2688 = vmatpush.msra.mxu0 %v2379
    %2689 = vmatpush.msra.mxu0 %v2363
    %2690 = vmatpush.msra.mxu0 %v2347
    %2691 = vmatpush.msra.mxu0 %v2331
    %2692 = vmatpush.msra.mxu0 %v2315
    %2693 = vmatpush.msra.mxu0 %v2299
    %2694 = vmatpush.msra.mxu0 %v2283
    %2695 = vmatpush.msra.mxu0 %v2267
    %2696 = vmatpush.msra.mxu0 %v2251
    %2697 = vmatpush.msra.mxu0 %v2235
    %2698 = vmatpush.msra.mxu0 %v2219
    %2699 = vmatpush.msra.mxu0 %v2203
    %2700 = vmatmul.f32.gmra.mxu0 %v2191
    %v2701 = vpop.f32.mrf.mxu0
    %v2702 = vadd.f32 0.0, %v2701
    %2703 = vmatmul.f32.gmra.mxu0 %v2192
    %v2704 = vpop.f32.mrf.mxu0
    %v2705 = vadd.f32 0.0, %v2704
    %2706 = vmatmul.f32.gmra.mxu0 %v2193
    %v2707 = vpop.f32.mrf.mxu0
    %v2708 = vadd.f32 0.0, %v2707
    %2709 = vdwg.mxu0
    %2710 = vmatpush.msra.mxu0 %v2444
    %2711 = vmatpush.msra.mxu0 %v2428
    %2712 = vmatpush.msra.mxu0 %v2412
    %2713 = vmatpush.msra.mxu0 %v2396
    %2714 = vmatpush.msra.mxu0 %v2380
    %2715 = vmatpush.msra.mxu0 %v2364
    %2716 = vmatpush.msra.mxu0 %v2348
    %2717 = vmatpush.msra.mxu0 %v2332
    %2718 = vmatpush.msra.mxu0 %v2316
    %2719 = vmatpush.msra.mxu0 %v2300
    %2720 = vmatpush.msra.mxu0 %v2284
    %2721 = vmatpush.msra.mxu0 %v2268
    %2722 = vmatpush.msra.mxu0 %v2252
    %2723 = vmatpush.msra.mxu0 %v2236
    %2724 = vmatpush.msra.mxu0 %v2220
    %2725 = vmatpush.msra.mxu0 %v2204
    %2726 = vmatmul.f32.gmra.mxu0 %v2191
    %v2727 = vpop.f32.mrf.mxu0
    %v2728 = vadd.f32 0.0, %v2727
    %2729 = vmatmul.f32.gmra.mxu0 %v2192
    %v2730 = vpop.f32.mrf.mxu0
    %v2731 = vadd.f32 0.0, %v2730
    %2732 = vmatmul.f32.gmra.mxu0 %v2193
    %v2733 = vpop.f32.mrf.mxu0
    %v2734 = vadd.f32 0.0, %v2733
    %2735 = vdwg.mxu0
    %2736 = vmatpush.msra.mxu0 %v2445
    %2737 = vmatpush.msra.mxu0 %v2429
    %2738 = vmatpush.msra.mxu0 %v2413
    %2739 = vmatpush.msra.mxu0 %v2397
    %2740 = vmatpush.msra.mxu0 %v2381
    %2741 = vmatpush.msra.mxu0 %v2365
    %2742 = vmatpush.msra.mxu0 %v2349
    %2743 = vmatpush.msra.mxu0 %v2333
    %2744 = vmatpush.msra.mxu0 %v2317
    %2745 = vmatpush.msra.mxu0 %v2301
    %2746 = vmatpush.msra.mxu0 %v2285
    %2747 = vmatpush.msra.mxu0 %v2269
    %2748 = vmatpush.msra.mxu0 %v2253
    %2749 = vmatpush.msra.mxu0 %v2237
    %2750 = vmatpush.msra.mxu0 %v2221
    %2751 = vmatpush.msra.mxu0 %v2205
    %2752 = vmatmul.f32.gmra.mxu0 %v2191
    %v2753 = vpop.f32.mrf.mxu0
    %v2754 = vadd.f32 0.0, %v2753
    %2755 = vmatmul.f32.gmra.mxu0 %v2192
    %v2756 = vpop.f32.mrf.mxu0
    %v2757 = vadd.f32 0.0, %v2756
    %2758 = vmatmul.f32.gmra.mxu0 %v2193
    %v2759 = vpop.f32.mrf.mxu0
    %v2760 = vadd.f32 0.0, %v2759
    %2761 = vdwg.mxu0
    %2762 = vmatpush.msra.mxu0 %v2446
    %2763 = vmatpush.msra.mxu0 %v2430
    %2764 = vmatpush.msra.mxu0 %v2414
    %2765 = vmatpush.msra.mxu0 %v2398
    %2766 = vmatpush.msra.mxu0 %v2382
    %2767 = vmatpush.msra.mxu0 %v2366
    %2768 = vmatpush.msra.mxu0 %v2350
    %2769 = vmatpush.msra.mxu0 %v2334
    %2770 = vmatpush.msra.mxu0 %v2318
    %2771 = vmatpush.msra.mxu0 %v2302
    %2772 = vmatpush.msra.mxu0 %v2286
    %2773 = vmatpush.msra.mxu0 %v2270
    %2774 = vmatpush.msra.mxu0 %v2254
    %2775 = vmatpush.msra.mxu0 %v2238
    %2776 = vmatpush.msra.mxu0 %v2222
    %2777 = vmatpush.msra.mxu0 %v2206
    %2778 = vmatmul.f32.gmra.mxu0 %v2191
    %v2779 = vpop.f32.mrf.mxu0
    %v2780 = vadd.f32 0.0, %v2779
    %2781 = vmatmul.f32.gmra.mxu0 %v2192
    %v2782 = vpop.f32.mrf.mxu0
    %v2783 = vadd.f32 0.0, %v2782
    %2784 = vmatmul.f32.gmra.mxu0 %v2193
    %v2785 = vpop.f32.mrf.mxu0
    %v2786 = vadd.f32 0.0, %v2785
    %2787 = vdwg.mxu0
    %2788 = vmatpush.msra.mxu0 %v2447
    %2789 = vmatpush.msra.mxu0 %v2431
    %2790 = vmatpush.msra.mxu0 %v2415
    %2791 = vmatpush.msra.mxu0 %v2399
    %2792 = vmatpush.msra.mxu0 %v2383
    %2793 = vmatpush.msra.mxu0 %v2367
    %2794 = vmatpush.msra.mxu0 %v2351
    %2795 = vmatpush.msra.mxu0 %v2335
    %2796 = vmatpush.msra.mxu0 %v2319
    %2797 = vmatpush.msra.mxu0 %v2303
    %2798 = vmatpush.msra.mxu0 %v2287
    %2799 = vmatpush.msra.mxu0 %v2271
    %2800 = vmatpush.msra.mxu0 %v2255
    %2801 = vmatpush.msra.mxu0 %v2239
    %2802 = vmatpush.msra.mxu0 %v2223
    %2803 = vmatpush.msra.mxu0 %v2207
    %2804 = vmatmul.f32.gmra.mxu0 %v2191
    %v2805 = vpop.f32.mrf.mxu0
    %v2806 = vadd.f32 0.0, %v2805
    %2807 = vmatmul.f32.gmra.mxu0 %v2192
    %v2808 = vpop.f32.mrf.mxu0
    %v2809 = vadd.f32 0.0, %v2808
    %2810 = vmatmul.f32.gmra.mxu0 %v2193
    %v2811 = vpop.f32.mrf.mxu0
    %v2812 = vadd.f32 0.0, %v2811
    %2813 = vdwg.mxu0
    %2814 = vmatpush.msra.mxu0 %v2448
    %2815 = vmatpush.msra.mxu0 %v2432
    %2816 = vmatpush.msra.mxu0 %v2416
    %2817 = vmatpush.msra.mxu0 %v2400
    %2818 = vmatpush.msra.mxu0 %v2384
    %2819 = vmatpush.msra.mxu0 %v2368
    %2820 = vmatpush.msra.mxu0 %v2352
    %2821 = vmatpush.msra.mxu0 %v2336
    %2822 = vmatpush.msra.mxu0 %v2320
    %2823 = vmatpush.msra.mxu0 %v2304
    %2824 = vmatpush.msra.mxu0 %v2288
    %2825 = vmatpush.msra.mxu0 %v2272
    %2826 = vmatpush.msra.mxu0 %v2256
    %2827 = vmatpush.msra.mxu0 %v2240
    %2828 = vmatpush.msra.mxu0 %v2224
    %2829 = vmatpush.msra.mxu0 %v2208
    %2830 = vmatmul.f32.gmra.mxu0 %v2191
    %v2831 = vpop.f32.mrf.mxu0
    %v2832 = vadd.f32 0.0, %v2831
    %2833 = vmatmul.f32.gmra.mxu0 %v2192
    %v2834 = vpop.f32.mrf.mxu0
    %v2835 = vadd.f32 0.0, %v2834
    %2836 = vmatmul.f32.gmra.mxu0 %v2193
    %v2837 = vpop.f32.mrf.mxu0
    %v2838 = vadd.f32 0.0, %v2837
    %2839 = vdwg.mxu0
    %2840 = vmatpush.msra.mxu0 %v2449
    %2841 = vmatpush.msra.mxu0 %v2433
    %2842 = vmatpush.msra.mxu0 %v2417
    %2843 = vmatpush.msra.mxu0 %v2401
    %2844 = vmatpush.msra.mxu0 %v2385
    %2845 = vmatpush.msra.mxu0 %v2369
    %2846 = vmatpush.msra.mxu0 %v2353
    %2847 = vmatpush.msra.mxu0 %v2337
    %2848 = vmatpush.msra.mxu0 %v2321
    %2849 = vmatpush.msra.mxu0 %v2305
    %2850 = vmatpush.msra.mxu0 %v2289
    %2851 = vmatpush.msra.mxu0 %v2273
    %2852 = vmatpush.msra.mxu0 %v2257
    %2853 = vmatpush.msra.mxu0 %v2241
    %2854 = vmatpush.msra.mxu0 %v2225
    %2855 = vmatpush.msra.mxu0 %v2209
    %2856 = vmatmul.f32.gmra.mxu0 %v2191
    %v2857 = vpop.f32.mrf.mxu0
    %v2858 = vadd.f32 0.0, %v2857
    %2859 = vmatmul.f32.gmra.mxu0 %v2192
    %v2860 = vpop.f32.mrf.mxu0
    %v2861 = vadd.f32 0.0, %v2860
    %2862 = vmatmul.f32.gmra.mxu0 %v2193
    %v2863 = vpop.f32.mrf.mxu0
    %v2864 = vadd.f32 0.0, %v2863
    %2865 = vdwg.mxu0
    %2866 = vmatpush.msra.mxu0 0.0
    %2867 = vmatpush.msra.mxu0 0.0
    %2868 = vmatpush.msra.mxu0 0.0
    %2869 = vmatpush.msra.mxu0 0.0
    %2870 = vmatpush.msra.mxu0 0.0
    %2871 = vmatpush.msra.mxu0 0.0
    %2872 = vmatpush.msra.mxu0 0.0
    %2873 = vmatpush.msra.mxu0 0.0
    %2874 = vmatpush.msra.mxu0 0.0
    %2875 = vmatpush.msra.mxu0 0.0
    %2876 = vmatpush.msra.mxu0 0.0
    %2877 = vmatpush.msra.mxu0 0.0
    %2878 = vmatpush.msra.mxu0 0.0
    %2879 = vmatpush.msra.mxu0 0.0
    %2880 = vmatpush.msra.mxu0 %v2144
    %2881 = vmatpush.msra.mxu0 %v2143
    %2882 = vmatmul.f32.gmra.mxu0 %v1348
    %v2883 = vpop.f32.mrf.mxu0
    %v2884 = vadd.f32 0.0, %v2883
    %2885 = vmatmul.f32.gmra.mxu0 %v1351
    %v2886 = vpop.f32.mrf.mxu0
    %v2887 = vadd.f32 0.0, %v2886
    %2888 = vmatmul.f32.gmra.mxu0 %v1354
    %v2889 = vpop.f32.mrf.mxu0
    %v2890 = vadd.f32 0.0, %v2889
    %2891 = vdwg.mxu0
    %v2892 = vld [vmem:[#allocation28] sm:$0xff]
    %v2893 = vld [vmem:[#allocation28 + $0x8] sm:$0xff]
    %v2894 = vld [vmem:[#allocation28 + $0x10] sm:$0xff]
    %v2895 = vld [vmem:[#allocation28 + $0x18] sm:$0xff]
    %v2896 = vld [vmem:[#allocation28 + $0x20] sm:$0xff]
    %v2897 = vld [vmem:[#allocation28 + $0x28] sm:$0xff]
    %v2898 = vld [vmem:[#allocation28 + $0x30] sm:$0xff]
    %v2899 = vld [vmem:[#allocation28 + $0x38] sm:$0xff]
    %v2900 = vld [vmem:[#allocation28 + $0x40] sm:$0xff]
    %v2901 = vld [vmem:[#allocation28 + $0x48] sm:$0xff]
    %v2902 = vld [vmem:[#allocation28 + $0x50] sm:$0xff]
    %v2903 = vld [vmem:[#allocation28 + $0x58] sm:$0xff]
    %v2904 = vld [vmem:[#allocation28 + $0x60] sm:$0xff]
    %v2905 = vld [vmem:[#allocation28 + $0x68] sm:$0xff]
    %v2906 = vld [vmem:[#allocation28 + $0x70] sm:$0xff]
    %v2907 = vld [vmem:[#allocation28 + $0x78] sm:$0xff]
    %2909 = vset.pattern.permute.xlu0 0
    %2910 = vperm.xlu0 %2909, %v2884
    %v2911 = vpop.permute.xlu0 %2910
    %2914 = vset.pattern.permute.xlu0 0
    %2915 = vperm.xlu0 %2914, %v2887
    %v2916 = vpop.permute.xlu0 %2915
    %2919 = vset.pattern.permute.xlu0 0
    %2920 = vperm.xlu0 %2919, %v2890
    %v2921 = vpop.permute.xlu0 %2920
    %v2923 = vmul.f32 %v2911, %v2468
    %v2924 = vmul.f32 %v2916, %v2471
    %v2925 = vmul.f32 %v2921, %v2474
    %2926 = vmatpush.msra.mxu0 %v2907
    %2927 = vmatpush.msra.mxu0 %v2906
    %2928 = vmatpush.msra.mxu0 %v2905
    %2929 = vmatpush.msra.mxu0 %v2904
    %2930 = vmatpush.msra.mxu0 %v2903
    %2931 = vmatpush.msra.mxu0 %v2902
    %2932 = vmatpush.msra.mxu0 %v2901
    %2933 = vmatpush.msra.mxu0 %v2900
    %2934 = vmatpush.msra.mxu0 %v2899
    %2935 = vmatpush.msra.mxu0 %v2898
    %2936 = vmatpush.msra.mxu0 %v2897
    %2937 = vmatpush.msra.mxu0 %v2896
    %2938 = vmatpush.msra.mxu0 %v2895
    %2939 = vmatpush.msra.mxu0 %v2894
    %2940 = vmatpush.msra.mxu0 %v2893
    %2941 = vmatpush.msra.mxu0 %v2892
    %2942 = vmatmul.f32.gmra.mxu0 %v2884
    %v2943 = vpop.f32.mrf.mxu0
    %v2944 = vadd.f32 %v2923, %v2943
    %2945 = vmatmul.f32.gmra.mxu0 %v2887
    %v2946 = vpop.f32.mrf.mxu0
    %v2947 = vadd.f32 %v2924, %v2946
    %2948 = vmatmul.f32.gmra.mxu0 %v2890
    %v2949 = vpop.f32.mrf.mxu0
    %v2950 = vadd.f32 %v2925, %v2949
    %2951 = vdwg.mxu0
    %2952 = vset.pattern.permute.xlu0 1
    %2953 = vperm.xlu0 %2952, %v2884
    %v2954 = vpop.permute.xlu0 %2953
    %2956 = vset.pattern.permute.xlu0 1
    %2957 = vperm.xlu0 %2956, %v2887
    %v2958 = vpop.permute.xlu0 %2957
    %2960 = vset.pattern.permute.xlu0 1
    %2961 = vperm.xlu0 %2960, %v2890
    %v2962 = vpop.permute.xlu0 %2961
    %v2964 = vmul.f32 %v2954, %v2494
    %v2965 = vmul.f32 %v2958, %v2497
    %v2966 = vmul.f32 %v2962, %v2500
    %v2967 = vadd.f32 %v2944, %v2964
    %v2968 = vadd.f32 %v2947, %v2965
    %v2969 = vadd.f32 %v2950, %v2966
    %2970 = vset.pattern.permute.xlu0 2
    %2971 = vperm.xlu0 %2970, %v2884
    %v2972 = vpop.permute.xlu0 %2971
    %2974 = vset.pattern.permute.xlu0 2
    %2975 = vperm.xlu0 %2974, %v2887
    %v2976 = vpop.permute.xlu0 %2975
    %2978 = vset.pattern.permute.xlu0 2
    %2979 = vperm.xlu0 %2978, %v2890
    %v2980 = vpop.permute.xlu0 %2979
    %v2982 = vmul.f32 %v2972, %v2520
    %v2983 = vmul.f32 %v2976, %v2523
    %v2984 = vmul.f32 %v2980, %v2526
    %v2985 = vadd.f32 %v2967, %v2982
    %v2986 = vadd.f32 %v2968, %v2983
    %v2987 = vadd.f32 %v2969, %v2984
    %2988 = vset.pattern.permute.xlu0 3
    %2989 = vperm.xlu0 %2988, %v2884
    %v2990 = vpop.permute.xlu0 %2989
    %2992 = vset.pattern.permute.xlu0 3
    %2993 = vperm.xlu0 %2992, %v2887
    %v2994 = vpop.permute.xlu0 %2993
    %2996 = vset.pattern.permute.xlu0 3
    %2997 = vperm.xlu0 %2996, %v2890
    %v2998 = vpop.permute.xlu0 %2997
    %v3000 = vmul.f32 %v2990, %v2546
    %v3001 = vmul.f32 %v2994, %v2549
    %v3002 = vmul.f32 %v2998, %v2552
    %v3003 = vadd.f32 %v2985, %v3000
    %v3004 = vadd.f32 %v2986, %v3001
    %v3005 = vadd.f32 %v2987, %v3002
    %3006 = vset.pattern.permute.xlu0 4
    %3007 = vperm.xlu0 %3006, %v2884
    %v3008 = vpop.permute.xlu0 %3007
    %3010 = vset.pattern.permute.xlu0 4
    %3011 = vperm.xlu0 %3010, %v2887
    %v3012 = vpop.permute.xlu0 %3011
    %3014 = vset.pattern.permute.xlu0 4
    %3015 = vperm.xlu0 %3014, %v2890
    %v3016 = vpop.permute.xlu0 %3015
    %v3018 = vmul.f32 %v3008, %v2572
    %v3019 = vmul.f32 %v3012, %v2575
    %v3020 = vmul.f32 %v3016, %v2578
    %v3021 = vadd.f32 %v3003, %v3018
    %v3022 = vadd.f32 %v3004, %v3019
    %v3023 = vadd.f32 %v3005, %v3020
    %3024 = vset.pattern.permute.xlu0 5
    %3025 = vperm.xlu0 %3024, %v2884
    %v3026 = vpop.permute.xlu0 %3025
    %3028 = vset.pattern.permute.xlu0 5
    %3029 = vperm.xlu0 %3028, %v2887
    %v3030 = vpop.permute.xlu0 %3029
    %3032 = vset.pattern.permute.xlu0 5
    %3033 = vperm.xlu0 %3032, %v2890
    %v3034 = vpop.permute.xlu0 %3033
    %v3036 = vmul.f32 %v3026, %v2598
    %v3037 = vmul.f32 %v3030, %v2601
    %v3038 = vmul.f32 %v3034, %v2604
    %v3039 = vadd.f32 %v3021, %v3036
    %v3040 = vadd.f32 %v3022, %v3037
    %v3041 = vadd.f32 %v3023, %v3038
    %3042 = vset.pattern.permute.xlu0 6
    %3043 = vperm.xlu0 %3042, %v2884
    %v3044 = vpop.permute.xlu0 %3043
    %3046 = vset.pattern.permute.xlu0 6
    %3047 = vperm.xlu0 %3046, %v2887
    %v3048 = vpop.permute.xlu0 %3047
    %3050 = vset.pattern.permute.xlu0 6
    %3051 = vperm.xlu0 %3050, %v2890
    %v3052 = vpop.permute.xlu0 %3051
    %v3054 = vmul.f32 %v3044, %v2624
    %v3055 = vmul.f32 %v3048, %v2627
    %v3056 = vmul.f32 %v3052, %v2630
    %v3057 = vadd.f32 %v3039, %v3054
    %v3058 = vadd.f32 %v3040, %v3055
    %v3059 = vadd.f32 %v3041, %v3056
    %3060 = vset.pattern.permute.xlu0 7
    %3061 = vperm.xlu0 %3060, %v2884
    %v3062 = vpop.permute.xlu0 %3061
    %3064 = vset.pattern.permute.xlu0 7
    %3065 = vperm.xlu0 %3064, %v2887
    %v3066 = vpop.permute.xlu0 %3065
    %3068 = vset.pattern.permute.xlu0 7
    %3069 = vperm.xlu0 %3068, %v2890
    %v3070 = vpop.permute.xlu0 %3069
    %v3072 = vmul.f32 %v3062, %v2650
    %v3073 = vmul.f32 %v3066, %v2653
    %v3074 = vmul.f32 %v3070, %v2656
    %v3075 = vadd.f32 %v3057, %v3072
    %v3076 = vadd.f32 %v3058, %v3073
    %v3077 = vadd.f32 %v3059, %v3074
    %3078 = vset.pattern.permute.xlu0 8
    %3079 = vperm.xlu0 %3078, %v2884
    %v3080 = vpop.permute.xlu0 %3079
    %3082 = vset.pattern.permute.xlu0 8
    %3083 = vperm.xlu0 %3082, %v2887
    %v3084 = vpop.permute.xlu0 %3083
    %3086 = vset.pattern.permute.xlu0 8
    %3087 = vperm.xlu0 %3086, %v2890
    %v3088 = vpop.permute.xlu0 %3087
    %v3090 = vmul.f32 %v3080, %v2676
    %v3091 = vmul.f32 %v3084, %v2679
    %v3092 = vmul.f32 %v3088, %v2682
    %v3093 = vadd.f32 %v3075, %v3090
    %v3094 = vadd.f32 %v3076, %v3091
    %v3095 = vadd.f32 %v3077, %v3092
    %3096 = vset.pattern.permute.xlu0 9
    %3097 = vperm.xlu0 %3096, %v2884
    %v3098 = vpop.permute.xlu0 %3097
    %3100 = vset.pattern.permute.xlu0 9
    %3101 = vperm.xlu0 %3100, %v2887
    %v3102 = vpop.permute.xlu0 %3101
    %3104 = vset.pattern.permute.xlu0 9
    %3105 = vperm.xlu0 %3104, %v2890
    %v3106 = vpop.permute.xlu0 %3105
    %v3108 = vmul.f32 %v3098, %v2702
    %v3109 = vmul.f32 %v3102, %v2705
    %v3110 = vmul.f32 %v3106, %v2708
    %v3111 = vadd.f32 %v3093, %v3108
    %v3112 = vadd.f32 %v3094, %v3109
    %v3113 = vadd.f32 %v3095, %v3110
    %3114 = vset.pattern.permute.xlu0 10
    %3115 = vperm.xlu0 %3114, %v2884
    %v3116 = vpop.permute.xlu0 %3115
    %3118 = vset.pattern.permute.xlu0 10
    %3119 = vperm.xlu0 %3118, %v2887
    %v3120 = vpop.permute.xlu0 %3119
    %3122 = vset.pattern.permute.xlu0 10
    %3123 = vperm.xlu0 %3122, %v2890
    %v3124 = vpop.permute.xlu0 %3123
    %v3126 = vmul.f32 %v3116, %v2728
    %v3127 = vmul.f32 %v3120, %v2731
    %v3128 = vmul.f32 %v3124, %v2734
    %v3129 = vadd.f32 %v3111, %v3126
    %v3130 = vadd.f32 %v3112, %v3127
    %v3131 = vadd.f32 %v3113, %v3128
    %3132 = vset.pattern.permute.xlu0 11
    %3133 = vperm.xlu0 %3132, %v2884
    %v3134 = vpop.permute.xlu0 %3133
    %3136 = vset.pattern.permute.xlu0 11
    %3137 = vperm.xlu0 %3136, %v2887
    %v3138 = vpop.permute.xlu0 %3137
    %3140 = vset.pattern.permute.xlu0 11
    %3141 = vperm.xlu0 %3140, %v2890
    %v3142 = vpop.permute.xlu0 %3141
    %v3144 = vmul.f32 %v3134, %v2754
    %v3145 = vmul.f32 %v3138, %v2757
    %v3146 = vmul.f32 %v3142, %v2760
    %v3147 = vadd.f32 %v3129, %v3144
    %v3148 = vadd.f32 %v3130, %v3145
    %v3149 = vadd.f32 %v3131, %v3146
    %3150 = vset.pattern.permute.xlu0 12
    %3151 = vperm.xlu0 %3150, %v2884
    %v3152 = vpop.permute.xlu0 %3151
    %3154 = vset.pattern.permute.xlu0 12
    %3155 = vperm.xlu0 %3154, %v2887
    %v3156 = vpop.permute.xlu0 %3155
    %3158 = vset.pattern.permute.xlu0 12
    %3159 = vperm.xlu0 %3158, %v2890
    %v3160 = vpop.permute.xlu0 %3159
    %v3162 = vmul.f32 %v3152, %v2780
    %v3163 = vmul.f32 %v3156, %v2783
    %v3164 = vmul.f32 %v3160, %v2786
    %v3165 = vadd.f32 %v3147, %v3162
    %v3166 = vadd.f32 %v3148, %v3163
    %v3167 = vadd.f32 %v3149, %v3164
    %3168 = vset.pattern.permute.xlu0 13
    %3169 = vperm.xlu0 %3168, %v2884
    %v3170 = vpop.permute.xlu0 %3169
    %3172 = vset.pattern.permute.xlu0 13
    %3173 = vperm.xlu0 %3172, %v2887
    %v3174 = vpop.permute.xlu0 %3173
    %3176 = vset.pattern.permute.xlu0 13
    %3177 = vperm.xlu0 %3176, %v2890
    %v3178 = vpop.permute.xlu0 %3177
    %v3180 = vmul.f32 %v3170, %v2806
    %v3181 = vmul.f32 %v3174, %v2809
    %v3182 = vmul.f32 %v3178, %v2812
    %v3183 = vadd.f32 %v3165, %v3180
    %v3184 = vadd.f32 %v3166, %v3181
    %v3185 = vadd.f32 %v3167, %v3182
    %3186 = vset.pattern.permute.xlu0 14
    %3187 = vperm.xlu0 %3186, %v2884
    %v3188 = vpop.permute.xlu0 %3187
    %3190 = vset.pattern.permute.xlu0 14
    %3191 = vperm.xlu0 %3190, %v2887
    %v3192 = vpop.permute.xlu0 %3191
    %3194 = vset.pattern.permute.xlu0 14
    %3195 = vperm.xlu0 %3194, %v2890
    %v3196 = vpop.permute.xlu0 %3195
    %v3198 = vmul.f32 %v3188, %v2832
    %v3199 = vmul.f32 %v3192, %v2835
    %v3200 = vmul.f32 %v3196, %v2838
    %v3201 = vadd.f32 %v3183, %v3198
    %v3202 = vadd.f32 %v3184, %v3199
    %v3203 = vadd.f32 %v3185, %v3200
    %3204 = vset.pattern.permute.xlu0 15
    %3205 = vperm.xlu0 %3204, %v2884
    %v3206 = vpop.permute.xlu0 %3205
    %3208 = vset.pattern.permute.xlu0 15
    %3209 = vperm.xlu0 %3208, %v2887
    %v3210 = vpop.permute.xlu0 %3209
    %3212 = vset.pattern.permute.xlu0 15
    %3213 = vperm.xlu0 %3212, %v2890
    %v3214 = vpop.permute.xlu0 %3213
    %v3216 = vmul.f32 %v3206, %v2858
    %v3217 = vmul.f32 %v3210, %v2861
    %v3218 = vmul.f32 %v3214, %v2864
    %v3219 = vadd.f32 %v3201, %v3216
    %v3220 = vadd.f32 %v3202, %v3217
    %v3221 = vadd.f32 %v3203, %v3218
    %3222 = vmatpush.msra.mxu0 0.0
    %3223 = vmatpush.msra.mxu0 0.0
    %3224 = vmatpush.msra.mxu0 0.0
    %3225 = vmatpush.msra.mxu0 0.0
    %3226 = vmatpush.msra.mxu0 0.0
    %3227 = vmatpush.msra.mxu0 0.0
    %3228 = vmatpush.msra.mxu0 0.0
    %3229 = vmatpush.msra.mxu0 0.0
    %3230 = vmatpush.msra.mxu0 0.0
    %3231 = vmatpush.msra.mxu0 0.0
    %3232 = vmatpush.msra.mxu0 0.0
    %3233 = vmatpush.msra.mxu0 0.0
    %3234 = vmatpush.msra.mxu0 0.0
    %3235 = vmatpush.msra.mxu0 %v3221
    %3236 = vmatpush.msra.mxu0 %v3220
    %3237 = vmatpush.msra.mxu0 %v3219
    %3238 = vmatmul.f32.gmra.mxu0 %v1714
    %v3239 = vpop.f32.mrf.mxu0
    %v3240 = vadd.f32 0.0, %v3239
    %3241 = vmatmul.f32.gmra.mxu0 %v1717
    %v3242 = vpop.f32.mrf.mxu0
    %v3243 = vadd.f32 0.0, %v3242
    %3244 = vdwg.mxu0
    %v3245 = vld [vmem:[#allocation29] sm:$0xff]
    %v3246 = vld [vmem:[#allocation29 + $0x8] sm:$0xff]
    %v3247 = vld [vmem:[#allocation29 + $0x10] sm:$0xff]
    %v3248 = vld [vmem:[#allocation29 + $0x18] sm:$0xff]
    %v3249 = vld [vmem:[#allocation29 + $0x20] sm:$0xff]
    %v3250 = vld [vmem:[#allocation29 + $0x28] sm:$0xff]
    %v3251 = vld [vmem:[#allocation29 + $0x30] sm:$0xff]
    %v3252 = vld [vmem:[#allocation29 + $0x38] sm:$0xff]
    %v3253 = vld [vmem:[#allocation29 + $0x40] sm:$0xff]
    %v3254 = vld [vmem:[#allocation29 + $0x48] sm:$0xff]
    %v3255 = vld [vmem:[#allocation29 + $0x50] sm:$0xff]
    %v3256 = vld [vmem:[#allocation29 + $0x58] sm:$0xff]
    %v3257 = vld [vmem:[#allocation29 + $0x60] sm:$0xff]
    %v3258 = vld [vmem:[#allocation29 + $0x68] sm:$0xff]
    %v3259 = vld [vmem:[#allocation29 + $0x70] sm:$0xff]
    %v3260 = vld [vmem:[#allocation29 + $0x78] sm:$0xff]
    %v3261 = vld [vmem:[%s49] sm:$0x1]
    %v3263 = vperm.slane %v3261, 0
    %3265 = vmatpush.msra.mxu0 %v3260
    %3266 = vmatpush.msra.mxu0 %v3259
    %3267 = vmatpush.msra.mxu0 %v3258
    %3268 = vmatpush.msra.mxu0 %v3257
    %3269 = vmatpush.msra.mxu0 %v3256
    %3270 = vmatpush.msra.mxu0 %v3255
    %3271 = vmatpush.msra.mxu0 %v3254
    %3272 = vmatpush.msra.mxu0 %v3253
    %3273 = vmatpush.msra.mxu0 %v3252
    %3274 = vmatpush.msra.mxu0 %v3251
    %3275 = vmatpush.msra.mxu0 %v3250
    %3276 = vmatpush.msra.mxu0 %v3249
    %3277 = vmatpush.msra.mxu0 %v3248
    %3278 = vmatpush.msra.mxu0 %v3247
    %3279 = vmatpush.msra.mxu0 %v3246
    %3280 = vmatpush.msra.mxu0 %v3245
    %3281 = vmatmul.f32.gmra.mxu0 %v2143
    %v3282 = vpop.f32.mrf.mxu0
    %v3283 = vadd.f32 %v3263, %v3282
    %3284 = vmatmul.f32.gmra.mxu0 %v2144
    %v3285 = vpop.f32.mrf.mxu0
    %v3286 = vadd.f32 %v3263, %v3285
    %3287 = vdwg.mxu0
    %v3288 = vadd.f32 %v3283, %v3240
    %v3289 = vadd.f32 %v3286, %v3243
    %v3290 = vmax.f32 %v3288, 0.0
    %v3291 = vmax.f32 %v3289, 0.0
    %v3292 = vld [vmem:[%s51] sm:$0x1]
    %v3294 = vperm.slane %v3292, 0
    %v3296 = vmul.f32 %v3290, %v3294
    %v3297 = vmul.f32 %v3291, %v3294
    %v3298 = vld [vmem:[%s53] sm:$0x1]
    %v3300 = vperm.slane %v3298, 0
    %v3302 = vadd.f32 %v3296, %v3300
    %v3303 = vadd.f32 %v3297, %v3300
    %v3304 = vld [vmem:[#allocation31] sm:$0xff]
    %v3305 = vld [vmem:[#allocation31 + $0x8] sm:$0xff]
    %v3306 = vld [vmem:[#allocation31 + $0x10] sm:$0xff]
    %v3307 = vld [vmem:[#allocation31 + $0x18] sm:$0xff]
    %v3308 = vld [vmem:[#allocation31 + $0x20] sm:$0xff]
    %v3309 = vld [vmem:[#allocation31 + $0x28] sm:$0xff]
    %v3310 = vld [vmem:[#allocation31 + $0x30] sm:$0xff]
    %v3311 = vld [vmem:[#allocation31 + $0x38] sm:$0xff]
    %v3312 = vld [vmem:[#allocation31 + $0x40] sm:$0xff]
    %v3313 = vld [vmem:[#allocation31 + $0x48] sm:$0xff]
    %v3314 = vld [vmem:[#allocation31 + $0x50] sm:$0xff]
    %v3315 = vld [vmem:[#allocation31 + $0x58] sm:$0xff]
    %v3316 = vld [vmem:[#allocation31 + $0x60] sm:$0xff]
    %v3317 = vld [vmem:[#allocation31 + $0x68] sm:$0xff]
    %v3318 = vld [vmem:[#allocation31 + $0x70] sm:$0xff]
    %v3319 = vld [vmem:[#allocation31 + $0x78] sm:$0xff]
    %v3320 = vld [vmem:[#allocation31 + $0x80] sm:$0xff]
    %v3321 = vld [vmem:[#allocation31 + $0x88] sm:$0xff]
    %v3322 = vld [vmem:[#allocation31 + $0x90] sm:$0xff]
    %v3323 = vld [vmem:[#allocation31 + $0x98] sm:$0xff]
    %v3324 = vld [vmem:[#allocation31 + $0xa0] sm:$0xff]
    %v3325 = vld [vmem:[#allocation31 + $0xa8] sm:$0xff]
    %v3326 = vld [vmem:[#allocation31 + $0xb0] sm:$0xff]
    %v3327 = vld [vmem:[#allocation31 + $0xb8] sm:$0xff]
    %v3328 = vld [vmem:[#allocation31 + $0xc0] sm:$0xff]
    %v3329 = vld [vmem:[#allocation31 + $0xc8] sm:$0xff]
    %v3330 = vld [vmem:[#allocation31 + $0xd0] sm:$0xff]
    %v3331 = vld [vmem:[#allocation31 + $0xd8] sm:$0xff]
    %v3332 = vld [vmem:[#allocation31 + $0xe0] sm:$0xff]
    %v3333 = vld [vmem:[#allocation31 + $0xe8] sm:$0xff]
    %v3334 = vld [vmem:[#allocation31 + $0xf0] sm:$0xff]
    %v3335 = vld [vmem:[#allocation31 + $0xf8] sm:$0xff]
    %v3336 = vld [vmem:[#allocation31 + $0x100] sm:$0xff]
    %v3337 = vld [vmem:[#allocation31 + $0x108] sm:$0xff]
    %v3338 = vld [vmem:[#allocation31 + $0x110] sm:$0xff]
    %v3339 = vld [vmem:[#allocation31 + $0x118] sm:$0xff]
    %v3340 = vld [vmem:[#allocation31 + $0x120] sm:$0xff]
    %v3341 = vld [vmem:[#allocation31 + $0x128] sm:$0xff]
    %v3342 = vld [vmem:[#allocation31 + $0x130] sm:$0xff]
    %v3343 = vld [vmem:[#allocation31 + $0x138] sm:$0xff]
    %v3344 = vld [vmem:[#allocation31 + $0x140] sm:$0xff]
    %v3345 = vld [vmem:[#allocation31 + $0x148] sm:$0xff]
    %v3346 = vld [vmem:[#allocation31 + $0x150] sm:$0xff]
    %v3347 = vld [vmem:[#allocation31 + $0x158] sm:$0xff]
    %v3348 = vld [vmem:[#allocation31 + $0x160] sm:$0xff]
    %v3349 = vld [vmem:[#allocation31 + $0x168] sm:$0xff]
    %v3350 = vld [vmem:[#allocation31 + $0x170] sm:$0xff]
    %v3351 = vld [vmem:[#allocation31 + $0x178] sm:$0xff]
    %v3352 = vld [vmem:[%s59] sm:$0x7]
    %v3354 = vperm.slane %v3352, 0
    %v3355 = vperm.slane %v3352, 1
    %v3356 = vperm.slane %v3352, 2
    %3360 = vmatpush.msra.mxu0 %v3349
    %3361 = vmatpush.msra.mxu0 %v3346
    %3362 = vmatpush.msra.mxu0 %v3343
    %3363 = vmatpush.msra.mxu0 %v3340
    %3364 = vmatpush.msra.mxu0 %v3337
    %3365 = vmatpush.msra.mxu0 %v3334
    %3366 = vmatpush.msra.mxu0 %v3331
    %3367 = vmatpush.msra.mxu0 %v3328
    %3368 = vmatpush.msra.mxu0 %v3325
    %3369 = vmatpush.msra.mxu0 %v3322
    %3370 = vmatpush.msra.mxu0 %v3319
    %3371 = vmatpush.msra.mxu0 %v3316
    %3372 = vmatpush.msra.mxu0 %v3313
    %3373 = vmatpush.msra.mxu0 %v3310
    %3374 = vmatpush.msra.mxu0 %v3307
    %3375 = vmatpush.msra.mxu0 %v3304
    %3376 = vmatmul.f32.gmra.mxu0 %v3302
    %v3377 = vpop.f32.mrf.mxu0
    %v3378 = vadd.f32 %v3354, %v3377
    %3379 = vmatmul.f32.gmra.mxu0 %v3303
    %v3380 = vpop.f32.mrf.mxu0
    %v3381 = vadd.f32 %v3354, %v3380
    %3382 = vdwg.mxu0
    %3383 = vmatpush.msra.mxu0 %v3350
    %3384 = vmatpush.msra.mxu0 %v3347
    %3385 = vmatpush.msra.mxu0 %v3344
    %3386 = vmatpush.msra.mxu0 %v3341
    %3387 = vmatpush.msra.mxu0 %v3338
    %3388 = vmatpush.msra.mxu0 %v3335
    %3389 = vmatpush.msra.mxu0 %v3332
    %3390 = vmatpush.msra.mxu0 %v3329
    %3391 = vmatpush.msra.mxu0 %v3326
    %3392 = vmatpush.msra.mxu0 %v3323
    %3393 = vmatpush.msra.mxu0 %v3320
    %3394 = vmatpush.msra.mxu0 %v3317
    %3395 = vmatpush.msra.mxu0 %v3314
    %3396 = vmatpush.msra.mxu0 %v3311
    %3397 = vmatpush.msra.mxu0 %v3308
    %3398 = vmatpush.msra.mxu0 %v3305
    %3399 = vmatmul.f32.gmra.mxu0 %v3302
    %v3400 = vpop.f32.mrf.mxu0
    %v3401 = vadd.f32 %v3355, %v3400
    %3402 = vmatmul.f32.gmra.mxu0 %v3303
    %v3403 = vpop.f32.mrf.mxu0
    %v3404 = vadd.f32 %v3355, %v3403
    %3405 = vdwg.mxu0
    %3406 = vmatpush.msra.mxu0 %v3351
    %3407 = vmatpush.msra.mxu0 %v3348
    %3408 = vmatpush.msra.mxu0 %v3345
    %3409 = vmatpush.msra.mxu0 %v3342
    %3410 = vmatpush.msra.mxu0 %v3339
    %3411 = vmatpush.msra.mxu0 %v3336
    %3412 = vmatpush.msra.mxu0 %v3333
    %3413 = vmatpush.msra.mxu0 %v3330
    %3414 = vmatpush.msra.mxu0 %v3327
    %3415 = vmatpush.msra.mxu0 %v3324
    %3416 = vmatpush.msra.mxu0 %v3321
    %3417 = vmatpush.msra.mxu0 %v3318
    %3418 = vmatpush.msra.mxu0 %v3315
    %3419 = vmatpush.msra.mxu0 %v3312
    %3420 = vmatpush.msra.mxu0 %v3309
    %3421 = vmatpush.msra.mxu0 %v3306
    %3422 = vmatmul.f32.gmra.mxu0 %v3302
    %v3423 = vpop.f32.mrf.mxu0
    %v3424 = vadd.f32 %v3356, %v3423
    %3425 = vmatmul.f32.gmra.mxu0 %v3303
    %v3426 = vpop.f32.mrf.mxu0
    %v3427 = vadd.f32 %v3356, %v3426
    %3428 = vdwg.mxu0
    %v3429 = vld [vmem:[#allocation32] sm:$0xff]
    %v3430 = vld [vmem:[#allocation32 + $0x8] sm:$0xff]
    %v3431 = vld [vmem:[#allocation32 + $0x10] sm:$0xff]
    %v3432 = vld [vmem:[#allocation32 + $0x18] sm:$0xff]
    %v3433 = vld [vmem:[#allocation32 + $0x20] sm:$0xff]
    %v3434 = vld [vmem:[#allocation32 + $0x28] sm:$0xff]
    %v3435 = vld [vmem:[#allocation32 + $0x30] sm:$0xff]
    %v3436 = vld [vmem:[#allocation32 + $0x38] sm:$0xff]
    %v3437 = vld [vmem:[#allocation32 + $0x40] sm:$0xff]
    %v3438 = vld [vmem:[#allocation32 + $0x48] sm:$0xff]
    %v3439 = vld [vmem:[#allocation32 + $0x50] sm:$0xff]
    %v3440 = vld [vmem:[#allocation32 + $0x58] sm:$0xff]
    %v3441 = vld [vmem:[#allocation32 + $0x60] sm:$0xff]
    %v3442 = vld [vmem:[#allocation32 + $0x68] sm:$0xff]
    %v3443 = vld [vmem:[#allocation32 + $0x70] sm:$0xff]
    %v3444 = vld [vmem:[#allocation32 + $0x78] sm:$0xff]
    %v3445 = vld [vmem:[#allocation32 + $0x80] sm:$0xff]
    %v3446 = vld [vmem:[#allocation32 + $0x88] sm:$0xff]
    %v3447 = vld [vmem:[#allocation32 + $0x90] sm:$0xff]
    %v3448 = vld [vmem:[#allocation32 + $0x98] sm:$0xff]
    %v3449 = vld [vmem:[#allocation32 + $0xa0] sm:$0xff]
    %v3450 = vld [vmem:[#allocation32 + $0xa8] sm:$0xff]
    %v3451 = vld [vmem:[#allocation32 + $0xb0] sm:$0xff]
    %v3452 = vld [vmem:[#allocation32 + $0xb8] sm:$0xff]
    %v3453 = vld [vmem:[#allocation32 + $0xc0] sm:$0xff]
    %v3454 = vld [vmem:[#allocation32 + $0xc8] sm:$0xff]
    %v3455 = vld [vmem:[#allocation32 + $0xd0] sm:$0xff]
    %v3456 = vld [vmem:[#allocation32 + $0xd8] sm:$0xff]
    %v3457 = vld [vmem:[#allocation32 + $0xe0] sm:$0xff]
    %v3458 = vld [vmem:[#allocation32 + $0xe8] sm:$0xff]
    %v3459 = vld [vmem:[#allocation32 + $0xf0] sm:$0xff]
    %v3460 = vld [vmem:[#allocation32 + $0xf8] sm:$0xff]
    %v3461 = vld [vmem:[#allocation32 + $0x100] sm:$0xff]
    %v3462 = vld [vmem:[#allocation32 + $0x108] sm:$0xff]
    %v3463 = vld [vmem:[#allocation32 + $0x110] sm:$0xff]
    %v3464 = vld [vmem:[#allocation32 + $0x118] sm:$0xff]
    %v3465 = vld [vmem:[#allocation32 + $0x120] sm:$0xff]
    %v3466 = vld [vmem:[#allocation32 + $0x128] sm:$0xff]
    %v3467 = vld [vmem:[#allocation32 + $0x130] sm:$0xff]
    %v3468 = vld [vmem:[#allocation32 + $0x138] sm:$0xff]
    %v3469 = vld [vmem:[#allocation32 + $0x140] sm:$0xff]
    %v3470 = vld [vmem:[#allocation32 + $0x148] sm:$0xff]
    %v3471 = vld [vmem:[#allocation32 + $0x150] sm:$0xff]
    %v3472 = vld [vmem:[#allocation32 + $0x158] sm:$0xff]
    %v3473 = vld [vmem:[#allocation32 + $0x160] sm:$0xff]
    %v3474 = vld [vmem:[#allocation32 + $0x168] sm:$0xff]
    %v3475 = vld [vmem:[#allocation32 + $0x170] sm:$0xff]
    %v3476 = vld [vmem:[#allocation32 + $0x178] sm:$0xff]
    %v3477 = vld [vmem:[%s61] sm:$0x7]
    %v3479 = vperm.slane %v3477, 0
    %v3480 = vperm.slane %v3477, 1
    %v3481 = vperm.slane %v3477, 2
    %3485 = vmatpush.msra.mxu0 %v3474
    %3486 = vmatpush.msra.mxu0 %v3471
    %3487 = vmatpush.msra.mxu0 %v3468
    %3488 = vmatpush.msra.mxu0 %v3465
    %3489 = vmatpush.msra.mxu0 %v3462
    %3490 = vmatpush.msra.mxu0 %v3459
    %3491 = vmatpush.msra.mxu0 %v3456
    %3492 = vmatpush.msra.mxu0 %v3453
    %3493 = vmatpush.msra.mxu0 %v3450
    %3494 = vmatpush.msra.mxu0 %v3447
    %3495 = vmatpush.msra.mxu0 %v3444
    %3496 = vmatpush.msra.mxu0 %v3441
    %3497 = vmatpush.msra.mxu0 %v3438
    %3498 = vmatpush.msra.mxu0 %v3435
    %3499 = vmatpush.msra.mxu0 %v3432
    %3500 = vmatpush.msra.mxu0 %v3429
    %3501 = vmatmul.f32.gmra.mxu0 %v2143
    %v3502 = vpop.f32.mrf.mxu0
    %v3503 = vadd.f32 %v3479, %v3502
    %3504 = vmatmul.f32.gmra.mxu0 %v2144
    %v3505 = vpop.f32.mrf.mxu0
    %v3506 = vadd.f32 %v3479, %v3505
    %3507 = vdwg.mxu0
    %3508 = vmatpush.msra.mxu0 %v3475
    %3509 = vmatpush.msra.mxu0 %v3472
    %3510 = vmatpush.msra.mxu0 %v3469
    %3511 = vmatpush.msra.mxu0 %v3466
    %3512 = vmatpush.msra.mxu0 %v3463
    %3513 = vmatpush.msra.mxu0 %v3460
    %3514 = vmatpush.msra.mxu0 %v3457
    %3515 = vmatpush.msra.mxu0 %v3454
    %3516 = vmatpush.msra.mxu0 %v3451
    %3517 = vmatpush.msra.mxu0 %v3448
    %3518 = vmatpush.msra.mxu0 %v3445
    %3519 = vmatpush.msra.mxu0 %v3442
    %3520 = vmatpush.msra.mxu0 %v3439
    %3521 = vmatpush.msra.mxu0 %v3436
    %3522 = vmatpush.msra.mxu0 %v3433
    %3523 = vmatpush.msra.mxu0 %v3430
    %3524 = vmatmul.f32.gmra.mxu0 %v2143
    %v3525 = vpop.f32.mrf.mxu0
    %v3526 = vadd.f32 %v3480, %v3525
    %3527 = vmatmul.f32.gmra.mxu0 %v2144
    %v3528 = vpop.f32.mrf.mxu0
    %v3529 = vadd.f32 %v3480, %v3528
    %3530 = vdwg.mxu0
    %3531 = vmatpush.msra.mxu0 %v3476
    %3532 = vmatpush.msra.mxu0 %v3473
    %3533 = vmatpush.msra.mxu0 %v3470
    %3534 = vmatpush.msra.mxu0 %v3467
    %3535 = vmatpush.msra.mxu0 %v3464
    %3536 = vmatpush.msra.mxu0 %v3461
    %3537 = vmatpush.msra.mxu0 %v3458
    %3538 = vmatpush.msra.mxu0 %v3455
    %3539 = vmatpush.msra.mxu0 %v3452
    %3540 = vmatpush.msra.mxu0 %v3449
    %3541 = vmatpush.msra.mxu0 %v3446
    %3542 = vmatpush.msra.mxu0 %v3443
    %3543 = vmatpush.msra.mxu0 %v3440
    %3544 = vmatpush.msra.mxu0 %v3437
    %3545 = vmatpush.msra.mxu0 %v3434
    %3546 = vmatpush.msra.mxu0 %v3431
    %3547 = vmatmul.f32.gmra.mxu0 %v2143
    %v3548 = vpop.f32.mrf.mxu0
    %v3549 = vadd.f32 %v3481, %v3548
    %3550 = vmatmul.f32.gmra.mxu0 %v2144
    %v3551 = vpop.f32.mrf.mxu0
    %v3552 = vadd.f32 %v3481, %v3551
    %3553 = vdwg.mxu0
    %v3554 = vadd.f32 %v3378, %v3503
    %v3555 = vadd.f32 %v3381, %v3506
    %v3556 = vxor.u32 %v3554, 2147483648
    %v3557 = vxor.u32 %v3555, 2147483648
    %v3558 = vmul.f32 %v3556, 1.442695
    %v3559 = vpow.pop %v3558
    %v3560 = vmul.f32 %v3557, 1.442695
    %v3561 = vpow.pop %v3560
    %v3562 = vadd.f32 %v3559, 1.0
    %v3563 = vadd.f32 %v3561, 1.0
    %v3564 = vrcp.pop %v3562
    %v3565 = vmul.f32 %v3562, %v3564
    %v3566 = vsub.f32 1.0, %v3565
    %v3567 = vmul.f32 %v3564, %v3566
    %v3568 = vadd.f32 %v3564, %v3567
    %vm3569 = vweird.f32 %v3562
    %vm3570 = vweird.f32 %v3564
    %vm3571 = vmor %vm3569, %vm3570
    %v3572 = vsel %vm3571, %v3564, %v3568
    %v3573 = vand.u32 2147483647, %v3562
    %vm3574 = vcmp.eq.f32.partialorder %v3573, 8.507059e+37
    %v3575 = vand.u32 %v3562, 2147483648
    %v3576 = vor.u32 1.1754944e-38, %v3575
    %v3577 = vsel %vm3574, %v3576, %v3572
    %v3578 = vmul.f32 1.0, %v3577
    %v3579 = vrcp.pop %v3563
    %v3580 = vmul.f32 %v3563, %v3579
    %v3581 = vsub.f32 1.0, %v3580
    %v3582 = vmul.f32 %v3579, %v3581
    %v3583 = vadd.f32 %v3579, %v3582
    %vm3584 = vweird.f32 %v3563
    %vm3585 = vweird.f32 %v3579
    %vm3586 = vmor %vm3584, %vm3585
    %v3587 = vsel %vm3586, %v3579, %v3583
    %v3588 = vand.u32 2147483647, %v3563
    %vm3589 = vcmp.eq.f32.partialorder %v3588, 8.507059e+37
    %v3590 = vand.u32 %v3563, 2147483648
    %v3591 = vor.u32 1.1754944e-38, %v3590
    %v3592 = vsel %vm3589, %v3591, %v3587
    %v3593 = vmul.f32 1.0, %v3592
    %v3594 = vadd.f32 %v3401, %v3526
    %v3595 = vadd.f32 %v3404, %v3529
    %v3596 = vxor.u32 %v3594, 2147483648
    %v3597 = vxor.u32 %v3595, 2147483648
    %v3598 = vmul.f32 %v3596, 1.442695
    %v3599 = vpow.pop %v3598
    %v3600 = vmul.f32 %v3597, 1.442695
    %v3601 = vpow.pop %v3600
    %v3602 = vadd.f32 %v3599, 1.0
    %v3603 = vadd.f32 %v3601, 1.0
    %v3604 = vrcp.pop %v3602
    %v3605 = vmul.f32 %v3602, %v3604
    %v3606 = vsub.f32 1.0, %v3605
    %v3607 = vmul.f32 %v3604, %v3606
    %v3608 = vadd.f32 %v3604, %v3607
    %vm3609 = vweird.f32 %v3602
    %vm3610 = vweird.f32 %v3604
    %vm3611 = vmor %vm3609, %vm3610
    %v3612 = vsel %vm3611, %v3604, %v3608
    %v3613 = vand.u32 2147483647, %v3602
    %vm3614 = vcmp.eq.f32.partialorder %v3613, 8.507059e+37
    %v3615 = vand.u32 %v3602, 2147483648
    %v3616 = vor.u32 1.1754944e-38, %v3615
    %v3617 = vsel %vm3614, %v3616, %v3612
    %v3618 = vmul.f32 1.0, %v3617
    %v3619 = vrcp.pop %v3603
    %v3620 = vmul.f32 %v3603, %v3619
    %v3621 = vsub.f32 1.0, %v3620
    %v3622 = vmul.f32 %v3619, %v3621
    %v3623 = vadd.f32 %v3619, %v3622
    %vm3624 = vweird.f32 %v3603
    %vm3625 = vweird.f32 %v3619
    %vm3626 = vmor %vm3624, %vm3625
    %v3627 = vsel %vm3626, %v3619, %v3623
    %v3628 = vand.u32 2147483647, %v3603
    %vm3629 = vcmp.eq.f32.partialorder %v3628, 8.507059e+37
    %v3630 = vand.u32 %v3603, 2147483648
    %v3631 = vor.u32 1.1754944e-38, %v3630
    %v3632 = vsel %vm3629, %v3631, %v3627
    %v3633 = vmul.f32 1.0, %v3632
    %v3634 = vmul.f32 %v3578, %v3549
    %v3635 = vmul.f32 %v3593, %v3552
    %v3636 = vadd.f32 %v3424, %v3634
    %v3637 = vadd.f32 %v3427, %v3635
    %v3638 = vtanh.pop %v3636
    %v3639 = vtanh.pop %v3637
    %v3640 = vsub.f32 1.0, %v3618
    %v3641 = vsub.f32 1.0, %v3633
    %v3642 = vmul.f32 %v3640, %v3638
    %v3643 = vmul.f32 %v3641, %v3639
    %v3644 = vmul.f32 %v3618, %v2143
    %v3645 = vmul.f32 %v3633, %v2144
    %v3646 = vadd.f32 %v3642, %v3644
    %v3647 = vadd.f32 %v3643, %v3645
    %3648 = vmatpush.msra.mxu0 0.0
    %3649 = vmatpush.msra.mxu0 0.0
    %3650 = vmatpush.msra.mxu0 0.0
    %3651 = vmatpush.msra.mxu0 0.0
    %3652 = vmatpush.msra.mxu0 0.0
    %3653 = vmatpush.msra.mxu0 0.0
    %3654 = vmatpush.msra.mxu0 0.0
    %3655 = vmatpush.msra.mxu0 0.0
    %3656 = vmatpush.msra.mxu0 0.0
    %3657 = vmatpush.msra.mxu0 0.0
    %3658 = vmatpush.msra.mxu0 0.0
    %3659 = vmatpush.msra.mxu0 0.0
    %3660 = vmatpush.msra.mxu0 0.0
    %3661 = vmatpush.msra.mxu0 0.0
    %3662 = vmatpush.msra.mxu0 %v3647
    %3663 = vmatpush.msra.mxu0 %v3646
    %3664 = vmatmul.f32.gmra.mxu0 %v1348
    %v3665 = vpop.f32.mrf.mxu0
    %v3666 = vadd.f32 0.0, %v3665
    %3667 = vmatmul.f32.gmra.mxu0 %v1351
    %v3668 = vpop.f32.mrf.mxu0
    %v3669 = vadd.f32 0.0, %v3668
    %3670 = vmatmul.f32.gmra.mxu0 %v1354
    %v3671 = vpop.f32.mrf.mxu0
    %v3672 = vadd.f32 0.0, %v3671
    %3673 = vdwg.mxu0
    %3674 = vmatpush.msra.mxu0 0.0
    %3675 = vmatpush.msra.mxu0 0.0
    %3676 = vmatpush.msra.mxu0 0.0
    %3677 = vmatpush.msra.mxu0 0.0
    %3678 = vmatpush.msra.mxu0 0.0
    %3679 = vmatpush.msra.mxu0 0.0
    %3680 = vmatpush.msra.mxu0 0.0
    %3681 = vmatpush.msra.mxu0 0.0
    %3682 = vmatpush.msra.mxu0 0.0
    %3683 = vmatpush.msra.mxu0 0.0
    %3684 = vmatpush.msra.mxu0 0.0
    %3685 = vmatpush.msra.mxu0 0.0
    %3686 = vmatpush.msra.mxu0 0.0
    %3687 = vmatpush.msra.mxu0 %v3672
    %3688 = vmatpush.msra.mxu0 %v3669
    %3689 = vmatpush.msra.mxu0 %v3666
    %3690 = vmatmul.f32.gmra.mxu0 %v1714
    %v3691 = vpop.f32.mrf.mxu0
    %v3692 = vadd.f32 0.0, %v3691
    %3693 = vmatmul.f32.gmra.mxu0 %v1717
    %v3694 = vpop.f32.mrf.mxu0
    %v3695 = vadd.f32 0.0, %v3694
    %3696 = vdwg.mxu0
    %v3697 = vld [vmem:[#allocation34] sm:$0xff]
    %v3698 = vld [vmem:[#allocation34 + $0x8] sm:$0xff]
    %v3699 = vld [vmem:[#allocation34 + $0x10] sm:$0xff]
    %v3700 = vld [vmem:[#allocation34 + $0x18] sm:$0xff]
    %v3701 = vld [vmem:[#allocation34 + $0x20] sm:$0xff]
    %v3702 = vld [vmem:[#allocation34 + $0x28] sm:$0xff]
    %v3703 = vld [vmem:[#allocation34 + $0x30] sm:$0xff]
    %v3704 = vld [vmem:[#allocation34 + $0x38] sm:$0xff]
    %v3705 = vld [vmem:[#allocation34 + $0x40] sm:$0xff]
    %v3706 = vld [vmem:[#allocation34 + $0x48] sm:$0xff]
    %v3707 = vld [vmem:[#allocation34 + $0x50] sm:$0xff]
    %v3708 = vld [vmem:[#allocation34 + $0x58] sm:$0xff]
    %v3709 = vld [vmem:[#allocation34 + $0x60] sm:$0xff]
    %v3710 = vld [vmem:[#allocation34 + $0x68] sm:$0xff]
    %v3711 = vld [vmem:[#allocation34 + $0x70] sm:$0xff]
    %v3712 = vld [vmem:[#allocation34 + $0x78] sm:$0xff]
    %v3713 = vld [vmem:[%s65] sm:$0x1]
    %v3715 = vperm.slane %v3713, 0
    %3717 = vmatpush.msra.mxu0 %v3712
    %3718 = vmatpush.msra.mxu0 %v3711
    %3719 = vmatpush.msra.mxu0 %v3710
    %3720 = vmatpush.msra.mxu0 %v3709
    %3721 = vmatpush.msra.mxu0 %v3708
    %3722 = vmatpush.msra.mxu0 %v3707
    %3723 = vmatpush.msra.mxu0 %v3706
    %3724 = vmatpush.msra.mxu0 %v3705
    %3725 = vmatpush.msra.mxu0 %v3704
    %3726 = vmatpush.msra.mxu0 %v3703
    %3727 = vmatpush.msra.mxu0 %v3702
    %3728 = vmatpush.msra.mxu0 %v3701
    %3729 = vmatpush.msra.mxu0 %v3700
    %3730 = vmatpush.msra.mxu0 %v3699
    %3731 = vmatpush.msra.mxu0 %v3698
    %3732 = vmatpush.msra.mxu0 %v3697
    %3733 = vmatmul.f32.gmra.mxu0 %v3692
    %v3734 = vpop.f32.mrf.mxu0
    %v3735 = vadd.f32 %v3715, %v3734
    %3736 = vmatmul.f32.gmra.mxu0 %v3695
    %v3737 = vpop.f32.mrf.mxu0
    %v3738 = vadd.f32 %v3715, %v3737
    %3739 = vdwg.mxu0
    %v3740 = vld [vmem:[#allocation35] sm:$0xff]
    %v3741 = vld [vmem:[#allocation35 + $0x8] sm:$0xff]
    %v3742 = vld [vmem:[#allocation35 + $0x10] sm:$0xff]
    %v3743 = vld [vmem:[#allocation35 + $0x18] sm:$0xff]
    %v3744 = vld [vmem:[#allocation35 + $0x20] sm:$0xff]
    %v3745 = vld [vmem:[#allocation35 + $0x28] sm:$0xff]
    %v3746 = vld [vmem:[#allocation35 + $0x30] sm:$0xff]
    %v3747 = vld [vmem:[#allocation35 + $0x38] sm:$0xff]
    %v3748 = vld [vmem:[#allocation35 + $0x40] sm:$0xff]
    %v3749 = vld [vmem:[#allocation35 + $0x48] sm:$0xff]
    %v3750 = vld [vmem:[#allocation35 + $0x50] sm:$0xff]
    %v3751 = vld [vmem:[#allocation35 + $0x58] sm:$0xff]
    %v3752 = vld [vmem:[#allocation35 + $0x60] sm:$0xff]
    %v3753 = vld [vmem:[#allocation35 + $0x68] sm:$0xff]
    %v3754 = vld [vmem:[#allocation35 + $0x70] sm:$0xff]
    %v3755 = vld [vmem:[#allocation35 + $0x78] sm:$0xff]
    %3756 = vmatpush.msra.mxu0 %v3755
    %3757 = vmatpush.msra.mxu0 %v3754
    %3758 = vmatpush.msra.mxu0 %v3753
    %3759 = vmatpush.msra.mxu0 %v3752
    %3760 = vmatpush.msra.mxu0 %v3751
    %3761 = vmatpush.msra.mxu0 %v3750
    %3762 = vmatpush.msra.mxu0 %v3749
    %3763 = vmatpush.msra.mxu0 %v3748
    %3764 = vmatpush.msra.mxu0 %v3747
    %3765 = vmatpush.msra.mxu0 %v3746
    %3766 = vmatpush.msra.mxu0 %v3745
    %3767 = vmatpush.msra.mxu0 %v3744
    %3768 = vmatpush.msra.mxu0 %v3743
    %3769 = vmatpush.msra.mxu0 %v3742
    %3770 = vmatpush.msra.mxu0 %v3741
    %3771 = vmatpush.msra.mxu0 %v3740
    %3772 = vmatmul.f32.gmra.mxu0 %v3646
    %v3773 = vpop.f32.mrf.mxu0
    %v3774 = vadd.f32 0.0, %v3773
    %3775 = vmatmul.f32.gmra.mxu0 %v3647
    %v3776 = vpop.f32.mrf.mxu0
    %v3777 = vadd.f32 0.0, %v3776
    %3778 = vdwg.mxu0
    %v3779 = vadd.f32 %v3735, %v3774
    %v3780 = vadd.f32 %v3738, %v3777
    %v3781 = vmax.f32 %v3779, 0.0
    %v3782 = vmax.f32 %v3780, 0.0
    %v3783 = vld [vmem:[%s69] sm:$0x1]
    %v3785 = vperm.slane %v3783, 0
    %v3787 = vmul.f32 %v3781, %v3785
    %v3788 = vmul.f32 %v3782, %v3785
    %v3789 = vld [vmem:[%s71] sm:$0x1]
    %v3791 = vperm.slane %v3789, 0
    %v3793 = vadd.f32 %v3787, %v3791
    %v3794 = vadd.f32 %v3788, %v3791
    %v3796 = vsel %vm1346, %v574, 0
    %3798 = vmatpush.msra.mxu0 0.0
    %3799 = vmatpush.msra.mxu0 0.0
    %3800 = vmatpush.msra.mxu0 0.0
    %3801 = vmatpush.msra.mxu0 0.0
    %3802 = vmatpush.msra.mxu0 0.0
    %3803 = vmatpush.msra.mxu0 0.0
    %3804 = vmatpush.msra.mxu0 0.0
    %3805 = vmatpush.msra.mxu0 0.0
    %3806 = vmatpush.msra.mxu0 0.0
    %3807 = vmatpush.msra.mxu0 0.0
    %3808 = vmatpush.msra.mxu0 0.0
    %3809 = vmatpush.msra.mxu0 0.0
    %3810 = vmatpush.msra.mxu0 0.0
    %3811 = vmatpush.msra.mxu0 0.0
    %3812 = vmatpush.msra.mxu0 %v3794
    %3813 = vmatpush.msra.mxu0 %v3793
    %3814 = vmatmul.f32.gmra.mxu0 %v3796
    %v3815 = vpop.f32.mrf.mxu0
    %v3816 = vadd.f32 0.0, %v3815
    %3817 = vdwg.mxu0
    %v3818 = vld [vmem:[#allocation37] sm:$0xff]
    %v3819 = vld [vmem:[#allocation37 + $0x8] sm:$0xff]
    %v3820 = vld [vmem:[#allocation37 + $0x10] sm:$0xff]
    %v3821 = vld [vmem:[#allocation37 + $0x18] sm:$0xff]
    %v3822 = vld [vmem:[#allocation37 + $0x20] sm:$0xff]
    %v3823 = vld [vmem:[#allocation37 + $0x28] sm:$0xff]
    %v3824 = vld [vmem:[#allocation37 + $0x30] sm:$0xff]
    %v3825 = vld [vmem:[#allocation37 + $0x38] sm:$0xff]
    %v3826 = vld [vmem:[#allocation37 + $0x40] sm:$0xff]
    %v3827 = vld [vmem:[#allocation37 + $0x48] sm:$0xff]
    %v3828 = vld [vmem:[#allocation37 + $0x50] sm:$0xff]
    %v3829 = vld [vmem:[#allocation37 + $0x58] sm:$0xff]
    %v3830 = vld [vmem:[#allocation37 + $0x60] sm:$0xff]
    %v3831 = vld [vmem:[#allocation37 + $0x68] sm:$0xff]
    %v3832 = vld [vmem:[#allocation37 + $0x70] sm:$0xff]
    %v3833 = vld [vmem:[#allocation37 + $0x78] sm:$0xff]
    %v3834 = vld [vmem:[%s75] sm:$0x1]
    %v3836 = vperm.slane %v3834, 0
    %3838 = vmatpush.msra.mxu0 %v3833
    %3839 = vmatpush.msra.mxu0 %v3832
    %3840 = vmatpush.msra.mxu0 %v3831
    %3841 = vmatpush.msra.mxu0 %v3830
    %3842 = vmatpush.msra.mxu0 %v3829
    %3843 = vmatpush.msra.mxu0 %v3828
    %3844 = vmatpush.msra.mxu0 %v3827
    %3845 = vmatpush.msra.mxu0 %v3826
    %3846 = vmatpush.msra.mxu0 %v3825
    %3847 = vmatpush.msra.mxu0 %v3824
    %3848 = vmatpush.msra.mxu0 %v3823
    %3849 = vmatpush.msra.mxu0 %v3822
    %3850 = vmatpush.msra.mxu0 %v3821
    %3851 = vmatpush.msra.mxu0 %v3820
    %3852 = vmatpush.msra.mxu0 %v3819
    %3853 = vmatpush.msra.mxu0 %v3818
    %3854 = vmatmul.f32.gmra.mxu0 %v3816
    %v3855 = vpop.f32.mrf.mxu0
    %v3856 = vadd.f32 %v3836, %v3855
    %3857 = vdwg.mxu0
    %v3858 = vmax.f32 %v3856, 0.0
    %v3859 = vld [vmem:[%s77] sm:$0x1]
    %v3861 = vperm.slane %v3859, 0
    %v3863 = vmul.f32 %v3858, %v3861
    %v3864 = vld [vmem:[%s79] sm:$0x1]
    %v3866 = vperm.slane %v3864, 0
    %v3868 = vadd.f32 %v3863, %v3866
    %v3869 = vld [vmem:[#allocation38] sm:$0xff]
    %v3870 = vld [vmem:[#allocation38 + $0x8] sm:$0xff]
    %v3871 = vld [vmem:[#allocation38 + $0x10] sm:$0xff]
    %v3872 = vld [vmem:[#allocation38 + $0x18] sm:$0xff]
    %v3873 = vld [vmem:[#allocation38 + $0x20] sm:$0xff]
    %v3874 = vld [vmem:[#allocation38 + $0x28] sm:$0xff]
    %v3875 = vld [vmem:[#allocation38 + $0x30] sm:$0xff]
    %v3876 = vld [vmem:[#allocation38 + $0x38] sm:$0xff]
    %v3877 = vld [vmem:[#allocation38 + $0x40] sm:$0xff]
    %v3878 = vld [vmem:[#allocation38 + $0x48] sm:$0xff]
    %v3879 = vld [vmem:[#allocation38 + $0x50] sm:$0xff]
    %v3880 = vld [vmem:[#allocation38 + $0x58] sm:$0xff]
    %v3881 = vld [vmem:[#allocation38 + $0x60] sm:$0xff]
    %v3882 = vld [vmem:[#allocation38 + $0x68] sm:$0xff]
    %v3883 = vld [vmem:[#allocation38 + $0x70] sm:$0xff]
    %v3884 = vld [vmem:[#allocation38 + $0x78] sm:$0xff]
    %v3885 = vld [vmem:[%s83] sm:$0x1]
    %v3887 = vperm.slane %v3885, 0
    %3889 = vmatpush.msra.mxu0 %v3884
    %3890 = vmatpush.msra.mxu0 %v3883
    %3891 = vmatpush.msra.mxu0 %v3882
    %3892 = vmatpush.msra.mxu0 %v3881
    %3893 = vmatpush.msra.mxu0 %v3880
    %3894 = vmatpush.msra.mxu0 %v3879
    %3895 = vmatpush.msra.mxu0 %v3878
    %3896 = vmatpush.msra.mxu0 %v3877
    %3897 = vmatpush.msra.mxu0 %v3876
    %3898 = vmatpush.msra.mxu0 %v3875
    %3899 = vmatpush.msra.mxu0 %v3874
    %3900 = vmatpush.msra.mxu0 %v3873
    %3901 = vmatpush.msra.mxu0 %v3872
    %3902 = vmatpush.msra.mxu0 %v3871
    %3903 = vmatpush.msra.mxu0 %v3870
    %3904 = vmatpush.msra.mxu0 %v3869
    %3905 = vmatmul.f32.gmra.mxu0 %v3868
    %v3906 = vpop.f32.mrf.mxu0
    %v3907 = vadd.f32 %v3887, %v3906
    %3908 = vdwg.mxu0
    %3909 = vst [vmem:[#allocation40] sm:$0xff] %v3907
    // Predicated region
    $region266: #{tpu_custom_call.1} parent=1 // pred_check
      _
    $region267: #{tpu_custom_call.1} parent=1 // pred_check_branch
      %3911 = sbr.rel (0) target = $region269
    $region268: #{tpu_custom_call.1} parent=1 // pred_region
      %3913 = vsyncadd [#allocation4], 0
      %s3915 = sshll.u32 [#allocation40], 4
      %s3916 = int_to_ptr.vmem [resolvable:$true] %s3915
      %s3917 = sshll.u32 %s85, 4
      %s3918 = int_to_ptr.hbm [resolvable:$true] %s3917
      %3920 = dma.vmem_to_hbm [thread:$0]  %s3916, 128, %s3918, [#allocation4]
    $region269: #{tpu_custom_call.1} parent=1 // pred_fallthru
      _
    // Predicated region
    $region270: #{tpu_custom_call.1} parent=1 // pred_check
      _
    $region271: #{tpu_custom_call.1} parent=1 // pred_check_branch
      %3922 = sbr.rel (0) target = $region273
    $region272: #{tpu_custom_call.1} parent=1 // pred_region
      %3924 = dma.done [#allocation4], 128
    $region273: #{tpu_custom_call.1} parent=1 // pred_fallthru
      _
    %3925 = vsyncpa [#allocation3], 1
    %3926 = vsyncpa [#allocation6], 1
    %3927 = vsyncpa [#allocation9], 1
    %3928 = vsyncpa [#allocation12], 1
    %3929 = vsyncpa [#allocation15], 1
    %3930 = vsyncpa [#allocation18], 1
    %3931 = vsyncpa [#allocation21], 1
    %3932 = vsyncpa [#allocation24], 1
    %3933 = vsyncpa [#allocation27], 1
    %3934 = vsyncpa [#allocation30], 1
    %3935 = vsyncpa [#allocation33], 1
    %3936 = vsyncpa [#allocation36], 1
    %3937 = vsyncpa [#allocation39], 1
    %3938 = vsyncpa [#allocation4], 1

</llo_original>
